<compile_context>
chip_gen: v5e
topology: v5e:2x2
jax: 0.10.0
libtpu: 0.0.40
codegen_flags: <defaults>
</compile_context>

<pallas_src>
import jax
import jax.numpy as jnp
from jax import lax
from jax.experimental import pallas as pl
from jax.experimental.pallas import tpu as pltpu


_EXTS = [(a, b, c) for a in (-1, 0, 1) for b in (-1, 0, 1) for c in (-1, 0, 1)]


def _round_up(v, q):
    return -(-v // q) * q


def _vmem_limit_bytes():
    # ~7/8 of physical, capped at 112 MiB: v5e/v6e (128 MiB) -> 112 MiB,
    # v7x (64 MiB) -> 56 MiB, always leaving double-buffer headroom.
    try:
        cap = int(pltpu.get_tpu_info().vmem_capacity_bytes)
    except Exception:
        cap = 64 * 1024 * 1024
    return int(min(cap * 7 // 8, 112 * 1024 * 1024))


# ------------------------------ fused kernel -------------------------------

def _make_block_kernel(*, ext, m_pad, in_ch, out_cp, deltas, res):
    slope = 0.2

    def lrelu(v):
        return jnp.where(v >= 0, v, slope * v)

    def kernel(*refs):
        if res:
            (mask_ref, x_ref, w1_ref, b1_ref, w2_ref, b2_ref,
             wp_ref, bp_ref, out_ref, hext_ref, slab_ref) = refs
        else:
            (mask_ref, x_ref, w1_ref, b1_ref, w2_ref, b2_ref,
             out_ref, hext_ref, slab_ref) = refs

        ph = pl.program_id(1)

        # --- per-sample work: conv1 + BN1 + LeakyReLU, slab staging ---------
        @pl.when(ph == 0)
        def _():
            # stage the 27 shifted x windows -> one K=27*Cin matmul (conv1)
            for t, d in enumerate(deltas):
                slab_ref[t * in_ch:(t + 1) * in_ch, :] = \
                    x_ref[0, :, ext + d: ext + d + m_pad]
            acc = jnp.dot(w1_ref[...], slab_ref[...],
                          preferred_element_type=jnp.float32)       # (Cin, M)
            h = lrelu(acc + b1_ref[...]) * mask_ref[...]             # zero halo
            # zero only the halo margins (retained outputs never read them);
            # interior is fully overwritten every sample.
            hext_ref[:, :ext] = jnp.zeros((in_ch, ext), hext_ref.dtype)
            hext_ref[:, ext + m_pad:] = jnp.zeros((in_ch, ext), hext_ref.dtype)
            hext_ref[:, ext: ext + m_pad] = h.astype(hext_ref.dtype)
            # re-stage the 27 shifted h windows -> shared by every phase
            for t, d in enumerate(deltas):
                slab_ref[t * in_ch:(t + 1) * in_ch, :] = \
                    hext_ref[:, ext + d: ext + d + m_pad]

        # --- per-phase work: one big-K matmul (conv2 + BN2) (+ residual) ----
        o = jnp.dot(w2_ref[0], slab_ref[...],
                    preferred_element_type=jnp.float32) + b2_ref[...]
        if res:                                   # stride==1 -> single phase
            xc = x_ref[0, :, ext: ext + m_pad]    # (Cin, M) bf16
            o = o + jnp.dot(wp_ref[...], xc,
                            preferred_element_type=jnp.float32) + bp_ref[...]
        out_ref[0] = lrelu(o).astype(out_ref.dtype)   # dense bf16 store

    return kernel


# ------------------------ static weight construction ------------------------

def _fold_bn(w, b, bn, eps=1e-5):
    """Fold eval-mode BatchNorm3d into the preceding conv (PyTorch OIDHW w)."""
    gamma, beta, mean, var = bn
    scale = gamma / jnp.sqrt(var + eps)
    return w * scale[:, None, None, None, None], (b - mean) * scale + beta


def _conv2_phase_weights(w2_bf, stride, in_ch, out_ch, out_cp):
    """Fold Upsample(nearest, s) + Conv3d(k=3,p=1) into per-phase extent
    weights over the uniform extent set {-1,0,1}^3 (shared activation slab)."""
    s = stride
    mats = []
    for p in range(s):
        for q in range(s):
            for r in range(s):
                blocks = []
                for e in _EXTS:
                    acc = jnp.zeros((out_ch, in_ch), jnp.float32)
                    for kd in range(3):
                        for kh in range(3):
                            for kw in range(3):
                                if ((p + kd - 1) // s, (q + kh - 1) // s,
                                        (r + kw - 1) // s) == e:
                                    acc = acc + w2_bf[:, :, kd, kh, kw]
                    blocks.append(acc)
                mat = jnp.concatenate(blocks, axis=1)        # (out_ch, 27*Cin)
                mat = jnp.pad(mat, ((0, out_cp - out_ch), (0, 0)))
                mats.append(mat)
    return jnp.stack(mats, axis=0).astype(jnp.bfloat16)


# ------------------------------ block wrapper -------------------------------

def upsample_building_block(x, params):
    """Fused forward of UpsampleBuildingkBlock.  x: (N, in_ch, D, H, W)."""
    stride = int(params["stride"])
    res = stride == 1
    w1, b1, w2, b2 = params["w1"], params["b1"], params["w2"], params["b2"]
    in_ch, out_ch = int(w1.shape[0]), int(w2.shape[0])
    N, C, D, H, W = x.shape
    assert C == in_ch
    Dp, Hp, Wp = D + 2, H + 2, W + 2
    m = Dp * Hp * Wp                       # padded-flat spatial size
    m_pad = _round_up(m, 128)              # lane-dense stores / matmul N dim
    n_phase = stride ** 3
    out_cp = _round_up(out_ch, 8)          # sublane-dense output stores

    max_d = Hp * Wp + Wp + 1               # largest |flat tap offset|
    # halo margin taken as whole (Hp,Wp) planes so ONE jnp.pad produces the
    # padded-flat channel-major layout (no second HBM pad pass).
    ep = -(-(max_d + (m_pad - m)) // (Hp * Wp))
    ext = ep * Hp * Wp

    xf = jnp.pad(x.astype(jnp.bfloat16),
                 ((0, 0), (0, 0), (1 + ep, 1 + ep), (1, 1), (1, 1)))
    xf = xf.reshape(N, in_ch, m + 2 * ext)

    interior = jnp.pad(jnp.ones((D, H, W), jnp.float32), 1).reshape(1, m)
    interior = jnp.pad(interior, ((0, 0), (0, m_pad - m)))

    deltas = [a * Hp * Wp + b * Wp + c for (a, b, c) in _EXTS]

    # conv1: folded-BN taps, K-concatenated (Cin, 27*Cin), bf16
    w1_t = jnp.transpose(w1, (2, 3, 4, 0, 1)).reshape(27, in_ch, in_ch)
    w1_cat = jnp.transpose(w1_t, (1, 0, 2)).reshape(in_ch, 27 * in_ch)
    w1_cat = w1_cat.astype(jnp.bfloat16)

    # conv2: quantize taps to bf16 first (matches reference), phase-sum in f32,
    # store the folded per-phase weights in bf16 (MXU fast path).
    w2_bf = w2.astype(jnp.bfloat16).astype(jnp.float32)
    w2_cat = _conv2_phase_weights(w2_bf, stride, in_ch, out_ch, out_cp)

    b1v = b1.reshape(in_ch, 1).astype(jnp.float32)
    b2v = jnp.pad(b2.reshape(out_ch, 1).astype(jnp.float32),
                  ((0, out_cp - out_ch), (0, 0)))

    args = [interior, xf, w1_cat, b1v, w2_cat, b2v]

    def full(a):
        shp = tuple(a.shape)
        return pl.BlockSpec(shp, lambda n, ph: (0,) * len(shp))

    in_specs = [
        full(interior),
        pl.BlockSpec((1, in_ch, m + 2 * ext), lambda n, ph: (n, 0, 0)),
        full(w1_cat),
        full(b1v),
        pl.BlockSpec((1, out_cp, 27 * in_ch), lambda n, ph: (ph, 0, 0)),
        full(b2v),
    ]

    if res:
        if "wp" in params:                       # 1x1x1 projection shortcut
            wp = params["wp"].astype(jnp.float32)
            bp = params["bp"].reshape(out_ch, 1).astype(jnp.float32)
        else:                                    # identity shortcut as matmul
            wp = jnp.eye(out_ch, in_ch, dtype=jnp.float32)
            bp = jnp.zeros((out_ch, 1), jnp.float32)
        wp = jnp.pad(wp, ((0, out_cp - out_ch), (0, 0))).astype(jnp.bfloat16)
        bp = jnp.pad(bp, ((0, out_cp - out_ch), (0, 0)))
        args += [wp, bp]
        in_specs += [full(wp), full(bp)]

    kernel = _make_block_kernel(ext=ext, m_pad=m_pad, in_ch=in_ch,
                                out_cp=out_cp, deltas=deltas, res=res)

    flops = 2 * N * m_pad * in_ch * 27 * (in_ch + n_phase * out_cp)
    if res:
        flops += 2 * N * m_pad * in_ch * out_cp
    bytes_accessed = int(xf.size) * 2 + int(w2_cat.size) * 2 * N \
        + N * n_phase * out_cp * m_pad * 2

    out = pl.pallas_call(
        kernel,
        out_shape=jax.ShapeDtypeStruct((N, n_phase * out_cp, m_pad),
                                       jnp.bfloat16),
        grid=(N, n_phase),
        in_specs=in_specs,
        out_specs=pl.BlockSpec((1, out_cp, m_pad), lambda n, ph: (n, ph, 0)),
        scratch_shapes=[pltpu.VMEM((in_ch, m_pad + 2 * ext), jnp.bfloat16),
                        pltpu.VMEM((27 * in_ch, m_pad), jnp.bfloat16)],
        compiler_params=pltpu.CompilerParams(
            dimension_semantics=("parallel", "arbitrary"),
            vmem_limit_bytes=_vmem_limit_bytes()),
        cost_estimate=pl.CostEstimate(flops=int(flops), transcendentals=0,
                                      bytes_accessed=int(bytes_accessed)),
    )(*args)

    # TODO(synk): fold this crop + phase interleave into the out BlockSpec
    # (per-D-slab grid axis) to drop the remaining XLA slice/transpose pass.
    s = stride
    out = out[:, :, :m].reshape(N, s, s, s, out_cp, Dp, Hp, Wp)
    out = out[:, :, :, :, :out_ch, 1:-1, 1:-1, 1:-1]
    out = jnp.transpose(out, (0, 4, 5, 1, 6, 2, 7, 3))
    return out.reshape(N, out_ch, s * D, s * H, s * W)


# --------------------------- parameter construction -------------------------

def init_block_params(key, in_ch, out_ch, stride):
    """Random conv weights + synthetic eval-mode BN statistics, BN pre-folded."""
    ks = jax.random.split(key, 12)

    def normal(k, shape, scale=0.1):
        return scale * jax.random.normal(k, shape, jnp.float32)

    def bn(k1, k2, k3, k4, c):
        gamma = 0.5 + jax.random.uniform(k1, (c,), jnp.float32)
        beta = 0.1 * jax.random.normal(k2, (c,), jnp.float32)
        mean = 0.1 * jax.random.normal(k3, (c,), jnp.float32)
        var = 0.5 + jax.random.uniform(k4, (c,), jnp.float32)
        return gamma, beta, mean, var

    w1 = normal(ks[0], (in_ch, in_ch, 3, 3, 3))
    w2 = normal(ks[1], (out_ch, in_ch, 3, 3, 3))
    w1f, b1f = _fold_bn(w1, jnp.zeros((in_ch,), jnp.float32),
                        bn(ks[2], ks[3], ks[4], ks[5], in_ch))
    w2f, b2f = _fold_bn(w2, jnp.zeros((out_ch,), jnp.float32),
                        bn(ks[6], ks[7], ks[8], ks[9], out_ch))
    p = dict(stride=stride, w1=w1f, b1=b1f, w2=w2f, b2=b2f)
    if stride == 1 and in_ch != out_ch:
        p["wp"] = normal(ks[10], (out_ch, in_ch))
        p["bp"] = normal(ks[11], (out_ch,))
    return p


# -------------------------- pure-JAX reference (check) ----------------------

def _conv3d_nc(x, w, b):
    y = lax.conv_general_dilated(
        x, w, window_strides=(1, 1, 1), padding=((1, 1), (1, 1), (1, 1)),
        dimension_numbers=("NCDHW", "OIDHW", "NCDHW"),
        precision=lax.Precision.HIGHEST)
    return y + b.reshape(1, -1, 1, 1, 1)


def upsample_building_block_ref(x, params):
    lrelu = lambda t: jnp.where(t >= 0, t, 0.2 * t)
    rd = lambda a: a.astype(jnp.bfloat16).astype(jnp.float32)  # kernel is bf16
    s = int(params["stride"])

    h = lrelu(_conv3d_nc(rd(x), rd(params["w1"]), params["b1"]))
    h = rd(h)                                  # kernel keeps h in bf16 VMEM
    h = jnp.repeat(jnp.repeat(jnp.repeat(h, s, 2), s, 3), s, 4)
    y = _conv3d_nc(h, rd(params["w2"]), params["b2"])
    if s == 1:
        if "wp" in params:
            sc = jnp.einsum("oc,ncdhw->nodhw", rd(params["wp"]), rd(x),
                            precision=lax.Precision.HIGHEST)
            sc = sc + params["bp"].reshape(1, -1, 1, 1, 1)
        else:
            sc = rd(x)
        y = y + sc
    return lrelu(y)                            # f32 (un-rounded) reference


# ------------------------------------ main -----------------------------------

if __name__ == "__main__":
    key = jax.random.PRNGKey(0)
    kx, kb1, kb2, kb3 = jax.random.split(key, 4)

    N, in_ch, out_ch, D = 2, 8, 4, 8
    x = jax.random.normal(kx, (N, in_ch, D, D, D), jnp.float32)

    def check(params, want_shape, atol, rtol):
        y = jax.block_until_ready(upsample_building_block(x, params))
        assert y.shape == want_shape, y.shape
        r = upsample_building_block_ref(x, params)
        yf = y.astype(jnp.float32)
        err = float(jnp.max(jnp.abs(yf - r)))
        assert jnp.allclose(yf, r, atol=atol, rtol=rtol), err

    # Tolerances: kernel output is bf16 and (for stride>1) the per-phase
    # folded-upsample weights are bf16-rounded phase sums, so the comparison
    # against the f32 reference carries ~2^-9 relative weight/output rounding.

    # stride == 1, in_ch != out_ch  -> residual path with 1x1x1 projection
    check(init_block_params(kb1, in_ch, out_ch, stride=1),
          (N, out_ch, D, D, D), atol=6e-3, rtol=1e-2)

    # stride == 1, in_ch == out_ch  -> residual path with identity shortcut
    check(init_block_params(kb2, in_ch, in_ch, stride=1),
          (N, in_ch, D, D, D), atol=6e-3, rtol=1e-2)

    # stride == 2                   -> Upsample(scale_factor=2) path, no residual
    check(init_block_params(kb3, in_ch, out_ch, stride=2),
          (N, out_ch, 2 * D, 2 * D, 2 * D), atol=3e-2, rtol=2e-2)

    print("KERNEL_OK")
</pallas_src>

<mosaic_0001>
module attributes {stable_mosaic.version = 11 : i64} {
  func.func @kernel(%arg0: i32, %arg1: i32, %arg2: memref<1x1024xf32, #tpu.memory_space<vmem>>, %arg3: memref<1x8x1400xbf16, #tpu.memory_space<vmem>>, %arg4: memref<8x216xbf16, #tpu.memory_space<vmem>>, %arg5: memref<8x1xf32, #tpu.memory_space<vmem>>, %arg6: memref<1x8x216xbf16, #tpu.memory_space<vmem>>, %arg7: memref<8x1xf32, #tpu.memory_space<vmem>>, %arg8: memref<8x8xbf16, #tpu.memory_space<vmem>>, %arg9: memref<8x1xf32, #tpu.memory_space<vmem>>, %arg10: memref<1x8x1024xbf16, #tpu.memory_space<vmem>>, %arg11: memref<8x1424xbf16, #tpu.memory_space<vmem>>, %arg12: memref<216x1024xbf16, #tpu.memory_space<vmem>>) attributes {dimension_semantics = [#tpu.dimension_semantics<parallel>, #tpu.dimension_semantics<arbitrary>], iteration_bounds = array<i64: 2, 1>, scalar_prefetch = 0 : i64, scratch_operands = 2 : i64, tpu.core_type = #tpu.core_type<tc>, window_params = [{pipeline_mode = #tpu.pipeline_mode<synchronous>, transform_indices = @transform_0, window_bounds = array<i64: 1, 1024>}, {transform_indices = @transform_1, window_bounds = array<i64: 1, 8, 1400>}, {pipeline_mode = #tpu.pipeline_mode<synchronous>, transform_indices = @transform_2, window_bounds = array<i64: 8, 216>}, {pipeline_mode = #tpu.pipeline_mode<synchronous>, transform_indices = @transform_3, window_bounds = array<i64: 8, 1>}, {transform_indices = @transform_4, window_bounds = array<i64: 1, 8, 216>}, {pipeline_mode = #tpu.pipeline_mode<synchronous>, transform_indices = @transform_5, window_bounds = array<i64: 8, 1>}, {pipeline_mode = #tpu.pipeline_mode<synchronous>, transform_indices = @transform_6, window_bounds = array<i64: 8, 8>}, {pipeline_mode = #tpu.pipeline_mode<synchronous>, transform_indices = @transform_7, window_bounds = array<i64: 8, 1>}, {transform_indices = @transform_8, window_bounds = array<i64: 1, 8, 1024>}]} {
    %c0_i32 = arith.constant 0 : i32
    %0 = arith.cmpi eq, %arg1, %c0_i32 : i32
    %1 = arith.extui %0 : i1 to i32
    %c0_i32_0 = arith.constant 0 : i32
    %2 = arith.cmpi ne, %1, %c0_i32_0 : i32
    scf.if %2 {
      %c0_19 = arith.constant 0 : index
      %c0_20 = arith.constant 0 : index
      %c89 = arith.constant 89 : index
      %27 = vector.load %arg3[%c0_19, %c0_20, %c89] : memref<1x8x1400xbf16, #tpu.memory_space<vmem>>, vector<1x8x1024xbf16>
      %28 = vector.shape_cast %27 : vector<1x8x1024xbf16> to vector<8x1024xbf16>
      %c0_21 = arith.constant 0 : index
      %c0_22 = arith.constant 0 : index
      %29 = vector.load %arg12[%c0_21, %c0_22] : memref<216x1024xbf16, #tpu.memory_space<vmem>>, vector<8x1024xbf16>
      tpu.vector_store %arg12[%c0_21, %c0_22], %28 {strides = array<i32>} : memref<216x1024xbf16, #tpu.memory_space<vmem>>, vector<8x1024xbf16>,
      %c0_23 = arith.constant 0 : index
      %c0_24 = arith.constant 0 : index
      %c90 = arith.constant 90 : index
      %30 = vector.load %arg3[%c0_23, %c0_24, %c90] : memref<1x8x1400xbf16, #tpu.memory_space<vmem>>, vector<1x8x1024xbf16>
      %31 = vector.shape_cast %30 : vector<1x8x1024xbf16> to vector<8x1024xbf16>
      %c8 = arith.constant 8 : index
      %c0_25 = arith.constant 0 : index
      %32 = vector.load %arg12[%c8, %c0_25] : memref<216x1024xbf16, #tpu.memory_space<vmem>>, vector<8x1024xbf16>
      tpu.vector_store %arg12[%c8, %c0_25], %31 {strides = array<i32>} : memref<216x1024xbf16, #tpu.memory_space<vmem>>, vector<8x1024xbf16>,
      %c0_26 = arith.constant 0 : index
      %c0_27 = arith.constant 0 : index
      %c91 = arith.constant 91 : index
      %33 = vector.load %arg3[%c0_26, %c0_27, %c91] : memref<1x8x1400xbf16, #tpu.memory_space<vmem>>, vector<1x8x1024xbf16>
      %34 = vector.shape_cast %33 : vector<1x8x1024xbf16> to vector<8x1024xbf16>
      %c16 = arith.constant 16 : index
      %c0_28 = arith.constant 0 : index
      %35 = vector.load %arg12[%c16, %c0_28] : memref<216x1024xbf16, #tpu.memory_space<vmem>>, vector<8x1024xbf16>
      tpu.vector_store %arg12[%c16, %c0_28], %34 {strides = array<i32>} : memref<216x1024xbf16, #tpu.memory_space<vmem>>, vector<8x1024xbf16>,
      %c0_29 = arith.constant 0 : index
      %c0_30 = arith.constant 0 : index
      %c99 = arith.constant 99 : index
      %36 = vector.load %arg3[%c0_29, %c0_30, %c99] : memref<1x8x1400xbf16, #tpu.memory_space<vmem>>, vector<1x8x1024xbf16>
      %37 = vector.shape_cast %36 : vector<1x8x1024xbf16> to vector<8x1024xbf16>
      %c24 = arith.constant 24 : index
      %c0_31 = arith.constant 0 : index
      %38 = vector.load %arg12[%c24, %c0_31] : memref<216x1024xbf16, #tpu.memory_space<vmem>>, vector<8x1024xbf16>
      tpu.vector_store %arg12[%c24, %c0_31], %37 {strides = array<i32>} : memref<216x1024xbf16, #tpu.memory_space<vmem>>, vector<8x1024xbf16>,
      %c0_32 = arith.constant 0 : index
      %c0_33 = arith.constant 0 : index
      %c100 = arith.constant 100 : index
      %39 = vector.load %arg3[%c0_32, %c0_33, %c100] : memref<1x8x1400xbf16, #tpu.memory_space<vmem>>, vector<1x8x1024xbf16>
      %40 = vector.shape_cast %39 : vector<1x8x1024xbf16> to vector<8x1024xbf16>
      %c32 = arith.constant 32 : index
      %c0_34 = arith.constant 0 : index
      %41 = vector.load %arg12[%c32, %c0_34] : memref<216x1024xbf16, #tpu.memory_space<vmem>>, vector<8x1024xbf16>
      tpu.vector_store %arg12[%c32, %c0_34], %40 {strides = array<i32>} : memref<216x1024xbf16, #tpu.memory_space<vmem>>, vector<8x1024xbf16>,
      %c0_35 = arith.constant 0 : index
      %c0_36 = arith.constant 0 : index
      %c101 = arith.constant 101 : index
      %42 = vector.load %arg3[%c0_35, %c0_36, %c101] : memref<1x8x1400xbf16, #tpu.memory_space<vmem>>, vector<1x8x1024xbf16>
      %43 = vector.shape_cast %42 : vector<1x8x1024xbf16> to vector<8x1024xbf16>
      %c40 = arith.constant 40 : index
      %c0_37 = arith.constant 0 : index
      %44 = vector.load %arg12[%c40, %c0_37] : memref<216x1024xbf16, #tpu.memory_space<vmem>>, vector<8x1024xbf16>
      tpu.vector_store %arg12[%c40, %c0_37], %43 {strides = array<i32>} : memref<216x1024xbf16, #tpu.memory_space<vmem>>, vector<8x1024xbf16>,
      %c0_38 = arith.constant 0 : index
      %c0_39 = arith.constant 0 : index
      %c109 = arith.constant 109 : index
      %45 = vector.load %arg3[%c0_38, %c0_39, %c109] : memref<1x8x1400xbf16, #tpu.memory_space<vmem>>, vector<1x8x1024xbf16>
      %46 = vector.shape_cast %45 : vector<1x8x1024xbf16> to vector<8x1024xbf16>
      %c48 = arith.constant 48 : index
      %c0_40 = arith.constant 0 : index
      %47 = vector.load %arg12[%c48, %c0_40] : memref<216x1024xbf16, #tpu.memory_space<vmem>>, vector<8x1024xbf16>
      tpu.vector_store %arg12[%c48, %c0_40], %46 {strides = array<i32>} : memref<216x1024xbf16, #tpu.memory_space<vmem>>, vector<8x1024xbf16>,
      %c0_41 = arith.constant 0 : index
      %c0_42 = arith.constant 0 : index
      %c110 = arith.constant 110 : index
      %48 = vector.load %arg3[%c0_41, %c0_42, %c110] : memref<1x8x1400xbf16, #tpu.memory_space<vmem>>, vector<1x8x1024xbf16>
      %49 = vector.shape_cast %48 : vector<1x8x1024xbf16> to vector<8x1024xbf16>
      %c56 = arith.constant 56 : index
      %c0_43 = arith.constant 0 : index
      %50 = vector.load %arg12[%c56, %c0_43] : memref<216x1024xbf16, #tpu.memory_space<vmem>>, vector<8x1024xbf16>
      tpu.vector_store %arg12[%c56, %c0_43], %49 {strides = array<i32>} : memref<216x1024xbf16, #tpu.memory_space<vmem>>, vector<8x1024xbf16>,
      %c0_44 = arith.constant 0 : index
      %c0_45 = arith.constant 0 : index
      %c111 = arith.constant 111 : index
      %51 = vector.load %arg3[%c0_44, %c0_45, %c111] : memref<1x8x1400xbf16, #tpu.memory_space<vmem>>, vector<1x8x1024xbf16>
      %52 = vector.shape_cast %51 : vector<1x8x1024xbf16> to vector<8x1024xbf16>
      %c64 = arith.constant 64 : index
      %c0_46 = arith.constant 0 : index
      %53 = vector.load %arg12[%c64, %c0_46] : memref<216x1024xbf16, #tpu.memory_space<vmem>>, vector<8x1024xbf16>
      tpu.vector_store %arg12[%c64, %c0_46], %52 {strides = array<i32>} : memref<216x1024xbf16, #tpu.memory_space<vmem>>, vector<8x1024xbf16>,
      %c0_47 = arith.constant 0 : index
      %c0_48 = arith.constant 0 : index
      %c189 = arith.constant 189 : index
      %54 = vector.load %arg3[%c0_47, %c0_48, %c189] : memref<1x8x1400xbf16, #tpu.memory_space<vmem>>, vector<1x8x1024xbf16>
      %55 = vector.shape_cast %54 : vector<1x8x1024xbf16> to vector<8x1024xbf16>
      %c72 = arith.constant 72 : index
      %c0_49 = arith.constant 0 : index
      %56 = vector.load %arg12[%c72, %c0_49] : memref<216x1024xbf16, #tpu.memory_space<vmem>>, vector<8x1024xbf16>
      tpu.vector_store %arg12[%c72, %c0_49], %55 {strides = array<i32>} : memref<216x1024xbf16, #tpu.memory_space<vmem>>, vector<8x1024xbf16>,
      %c0_50 = arith.constant 0 : index
      %c0_51 = arith.constant 0 : index
      %c190 = arith.constant 190 : index
      %57 = vector.load %arg3[%c0_50, %c0_51, %c190] : memref<1x8x1400xbf16, #tpu.memory_space<vmem>>, vector<1x8x1024xbf16>
      %58 = vector.shape_cast %57 : vector<1x8x1024xbf16> to vector<8x1024xbf16>
      %c80 = arith.constant 80 : index
      %c0_52 = arith.constant 0 : index
      %59 = vector.load %arg12[%c80, %c0_52] : memref<216x1024xbf16, #tpu.memory_space<vmem>>, vector<8x1024xbf16>
      tpu.vector_store %arg12[%c80, %c0_52], %58 {strides = array<i32>} : memref<216x1024xbf16, #tpu.memory_space<vmem>>, vector<8x1024xbf16>,
      %c0_53 = arith.constant 0 : index
      %c0_54 = arith.constant 0 : index
      %c191 = arith.constant 191 : index
      %60 = vector.load %arg3[%c0_53, %c0_54, %c191] : memref<1x8x1400xbf16, #tpu.memory_space<vmem>>, vector<1x8x1024xbf16>
      %61 = vector.shape_cast %60 : vector<1x8x1024xbf16> to vector<8x1024xbf16>
      %c88 = arith.constant 88 : index
      %c0_55 = arith.constant 0 : index
      %62 = vector.load %arg12[%c88, %c0_55] : memref<216x1024xbf16, #tpu.memory_space<vmem>>, vector<8x1024xbf16>
      tpu.vector_store %arg12[%c88, %c0_55], %61 {strides = array<i32>} : memref<216x1024xbf16, #tpu.memory_space<vmem>>, vector<8x1024xbf16>,
      %c0_56 = arith.constant 0 : index
      %c0_57 = arith.constant 0 : index
      %c199 = arith.constant 199 : index
      %63 = vector.load %arg3[%c0_56, %c0_57, %c199] : memref<1x8x1400xbf16, #tpu.memory_space<vmem>>, vector<1x8x1024xbf16>
      %64 = vector.shape_cast %63 : vector<1x8x1024xbf16> to vector<8x1024xbf16>
      %c96 = arith.constant 96 : index
      %c0_58 = arith.constant 0 : index
      %65 = vector.load %arg12[%c96, %c0_58] : memref<216x1024xbf16, #tpu.memory_space<vmem>>, vector<8x1024xbf16>
      tpu.vector_store %arg12[%c96, %c0_58], %64 {strides = array<i32>} : memref<216x1024xbf16, #tpu.memory_space<vmem>>, vector<8x1024xbf16>,
      %c0_59 = arith.constant 0 : index
      %c0_60 = arith.constant 0 : index
      %c200_61 = arith.constant 200 : index
      %66 = vector.load %arg3[%c0_59, %c0_60, %c200_61] : memref<1x8x1400xbf16, #tpu.memory_space<vmem>>, vector<1x8x1024xbf16>
      %67 = vector.shape_cast %66 : vector<1x8x1024xbf16> to vector<8x1024xbf16>
      %c104 = arith.constant 104 : index
      %c0_62 = arith.constant 0 : index
      %68 = vector.load %arg12[%c104, %c0_62] : memref<216x1024xbf16, #tpu.memory_space<vmem>>, vector<8x1024xbf16>
      tpu.vector_store %arg12[%c104, %c0_62], %67 {strides = array<i32>} : memref<216x1024xbf16, #tpu.memory_space<vmem>>, vector<8x1024xbf16>,
      %c0_63 = arith.constant 0 : index
      %c0_64 = arith.constant 0 : index
      %c201 = arith.constant 201 : index
      %69 = vector.load %arg3[%c0_63, %c0_64, %c201] : memref<1x8x1400xbf16, #tpu.memory_space<vmem>>, vector<1x8x1024xbf16>
      %70 = vector.shape_cast %69 : vector<1x8x1024xbf16> to vector<8x1024xbf16>
      %c112 = arith.constant 112 : index
      %c0_65 = arith.constant 0 : index
      %71 = vector.load %arg12[%c112, %c0_65] : memref<216x1024xbf16, #tpu.memory_space<vmem>>, vector<8x1024xbf16>
      tpu.vector_store %arg12[%c112, %c0_65], %70 {strides = array<i32>} : memref<216x1024xbf16, #tpu.memory_space<vmem>>, vector<8x1024xbf16>,
      %c0_66 = arith.constant 0 : index
      %c0_67 = arith.constant 0 : index
      %c209 = arith.constant 209 : index
      %72 = vector.load %arg3[%c0_66, %c0_67, %c209] : memref<1x8x1400xbf16, #tpu.memory_space<vmem>>, vector<1x8x1024xbf16>
      %73 = vector.shape_cast %72 : vector<1x8x1024xbf16> to vector<8x1024xbf16>
      %c120 = arith.constant 120 : index
      %c0_68 = arith.constant 0 : index
      %74 = vector.load %arg12[%c120, %c0_68] : memref<216x1024xbf16, #tpu.memory_space<vmem>>, vector<8x1024xbf16>
      tpu.vector_store %arg12[%c120, %c0_68], %73 {strides = array<i32>} : memref<216x1024xbf16, #tpu.memory_space<vmem>>, vector<8x1024xbf16>,
      %c0_69 = arith.constant 0 : index
      %c0_70 = arith.constant 0 : index
      %c210 = arith.constant 210 : index
      %75 = vector.load %arg3[%c0_69, %c0_70, %c210] : memref<1x8x1400xbf16, #tpu.memory_space<vmem>>, vector<1x8x1024xbf16>
      %76 = vector.shape_cast %75 : vector<1x8x1024xbf16> to vector<8x1024xbf16>
      %c128 = arith.constant 128 : index
      %c0_71 = arith.constant 0 : index
      %77 = vector.load %arg12[%c128, %c0_71] : memref<216x1024xbf16, #tpu.memory_space<vmem>>, vector<8x1024xbf16>
      tpu.vector_store %arg12[%c128, %c0_71], %76 {strides = array<i32>} : memref<216x1024xbf16, #tpu.memory_space<vmem>>, vector<8x1024xbf16>,
      %c0_72 = arith.constant 0 : index
      %c0_73 = arith.constant 0 : index
      %c211 = arith.constant 211 : index
      %78 = vector.load %arg3[%c0_72, %c0_73, %c211] : memref<1x8x1400xbf16, #tpu.memory_space<vmem>>, vector<1x8x1024xbf16>
      %79 = vector.shape_cast %78 : vector<1x8x1024xbf16> to vector<8x1024xbf16>
      %c136 = arith.constant 136 : index
      %c0_74 = arith.constant 0 : index
      %80 = vector.load %arg12[%c136, %c0_74] : memref<216x1024xbf16, #tpu.memory_space<vmem>>, vector<8x1024xbf16>
      tpu.vector_store %arg12[%c136, %c0_74], %79 {strides = array<i32>} : memref<216x1024xbf16, #tpu.memory_space<vmem>>, vector<8x1024xbf16>,
      %c0_75 = arith.constant 0 : index
      %c0_76 = arith.constant 0 : index
      %c289 = arith.constant 289 : index
      %81 = vector.load %arg3[%c0_75, %c0_76, %c289] : memref<1x8x1400xbf16, #tpu.memory_space<vmem>>, vector<1x8x1024xbf16>
      %82 = vector.shape_cast %81 : vector<1x8x1024xbf16> to vector<8x1024xbf16>
      %c144 = arith.constant 144 : index
      %c0_77 = arith.constant 0 : index
      %83 = vector.load %arg12[%c144, %c0_77] : memref<216x1024xbf16, #tpu.memory_space<vmem>>, vector<8x1024xbf16>
      tpu.vector_store %arg12[%c144, %c0_77], %82 {strides = array<i32>} : memref<216x1024xbf16, #tpu.memory_space<vmem>>, vector<8x1024xbf16>,
      %c0_78 = arith.constant 0 : index
      %c0_79 = arith.constant 0 : index
      %c290 = arith.constant 290 : index
      %84 = vector.load %arg3[%c0_78, %c0_79, %c290] : memref<1x8x1400xbf16, #tpu.memory_space<vmem>>, vector<1x8x1024xbf16>
      %85 = vector.shape_cast %84 : vector<1x8x1024xbf16> to vector<8x1024xbf16>
      %c152 = arith.constant 152 : index
      %c0_80 = arith.constant 0 : index
      %86 = vector.load %arg12[%c152, %c0_80] : memref<216x1024xbf16, #tpu.memory_space<vmem>>, vector<8x1024xbf16>
      tpu.vector_store %arg12[%c152, %c0_80], %85 {strides = array<i32>} : memref<216x1024xbf16, #tpu.memory_space<vmem>>, vector<8x1024xbf16>,
      %c0_81 = arith.constant 0 : index
      %c0_82 = arith.constant 0 : index
      %c291 = arith.constant 291 : index
      %87 = vector.load %arg3[%c0_81, %c0_82, %c291] : memref<1x8x1400xbf16, #tpu.memory_space<vmem>>, vector<1x8x1024xbf16>
      %88 = vector.shape_cast %87 : vector<1x8x1024xbf16> to vector<8x1024xbf16>
      %c160 = arith.constant 160 : index
      %c0_83 = arith.constant 0 : index
      %89 = vector.load %arg12[%c160, %c0_83] : memref<216x1024xbf16, #tpu.memory_space<vmem>>, vector<8x1024xbf16>
      tpu.vector_store %arg12[%c160, %c0_83], %88 {strides = array<i32>} : memref<216x1024xbf16, #tpu.memory_space<vmem>>, vector<8x1024xbf16>,
      %c0_84 = arith.constant 0 : index
      %c0_85 = arith.constant 0 : index
      %c299 = arith.constant 299 : index
      %90 = vector.load %arg3[%c0_84, %c0_85, %c299] : memref<1x8x1400xbf16, #tpu.memory_space<vmem>>, vector<1x8x1024xbf16>
      %91 = vector.shape_cast %90 : vector<1x8x1024xbf16> to vector<8x1024xbf16>
      %c168 = arith.constant 168 : index
      %c0_86 = arith.constant 0 : index
      %92 = vector.load %arg12[%c168, %c0_86] : memref<216x1024xbf16, #tpu.memory_space<vmem>>, vector<8x1024xbf16>
      tpu.vector_store %arg12[%c168, %c0_86], %91 {strides = array<i32>} : memref<216x1024xbf16, #tpu.memory_space<vmem>>, vector<8x1024xbf16>,
      %c0_87 = arith.constant 0 : index
      %c0_88 = arith.constant 0 : index
      %c300 = arith.constant 300 : index
      %93 = vector.load %arg3[%c0_87, %c0_88, %c300] : memref<1x8x1400xbf16, #tpu.memory_space<vmem>>, vector<1x8x1024xbf16>
      %94 = vector.shape_cast %93 : vector<1x8x1024xbf16> to vector<8x1024xbf16>
      %c176 = arith.constant 176 : index
      %c0_89 = arith.constant 0 : index
      %95 = vector.load %arg12[%c176, %c0_89] : memref<216x1024xbf16, #tpu.memory_space<vmem>>, vector<8x1024xbf16>
      tpu.vector_store %arg12[%c176, %c0_89], %94 {strides = array<i32>} : memref<216x1024xbf16, #tpu.memory_space<vmem>>, vector<8x1024xbf16>,
      %c0_90 = arith.constant 0 : index
      %c0_91 = arith.constant 0 : index
      %c301 = arith.constant 301 : index
      %96 = vector.load %arg3[%c0_90, %c0_91, %c301] : memref<1x8x1400xbf16, #tpu.memory_space<vmem>>, vector<1x8x1024xbf16>
      %97 = vector.shape_cast %96 : vector<1x8x1024xbf16> to vector<8x1024xbf16>
      %c184 = arith.constant 184 : index
      %c0_92 = arith.constant 0 : index
      %98 = vector.load %arg12[%c184, %c0_92] : memref<216x1024xbf16, #tpu.memory_space<vmem>>, vector<8x1024xbf16>
      tpu.vector_store %arg12[%c184, %c0_92], %97 {strides = array<i32>} : memref<216x1024xbf16, #tpu.memory_space<vmem>>, vector<8x1024xbf16>,
      %c0_93 = arith.constant 0 : index
      %c0_94 = arith.constant 0 : index
      %c309 = arith.constant 309 : index
      %99 = vector.load %arg3[%c0_93, %c0_94, %c309] : memref<1x8x1400xbf16, #tpu.memory_space<vmem>>, vector<1x8x1024xbf16>
      %100 = vector.shape_cast %99 : vector<1x8x1024xbf16> to vector<8x1024xbf16>
      %c192 = arith.constant 192 : index
      %c0_95 = arith.constant 0 : index
      %101 = vector.load %arg12[%c192, %c0_95] : memref<216x1024xbf16, #tpu.memory_space<vmem>>, vector<8x1024xbf16>
      tpu.vector_store %arg12[%c192, %c0_95], %100 {strides = array<i32>} : memref<216x1024xbf16, #tpu.memory_space<vmem>>, vector<8x1024xbf16>,
      %c0_96 = arith.constant 0 : index
      %c0_97 = arith.constant 0 : index
      %c310 = arith.constant 310 : index
      %102 = vector.load %arg3[%c0_96, %c0_97, %c310] : memref<1x8x1400xbf16, #tpu.memory_space<vmem>>, vector<1x8x1024xbf16>
      %103 = vector.shape_cast %102 : vector<1x8x1024xbf16> to vector<8x1024xbf16>
      %c200_98 = arith.constant 200 : index
      %c0_99 = arith.constant 0 : index
      %104 = vector.load %arg12[%c200_98, %c0_99] : memref<216x1024xbf16, #tpu.memory_space<vmem>>, vector<8x1024xbf16>
      tpu.vector_store %arg12[%c200_98, %c0_99], %103 {strides = array<i32>} : memref<216x1024xbf16, #tpu.memory_space<vmem>>, vector<8x1024xbf16>,
      %c0_100 = arith.constant 0 : index
      %c0_101 = arith.constant 0 : index
      %c311 = arith.constant 311 : index
      %105 = vector.load %arg3[%c0_100, %c0_101, %c311] : memref<1x8x1400xbf16, #tpu.memory_space<vmem>>, vector<1x8x1024xbf16>
      %106 = vector.shape_cast %105 : vector<1x8x1024xbf16> to vector<8x1024xbf16>
      %c208 = arith.constant 208 : index
      %c0_102 = arith.constant 0 : index
      %107 = vector.load %arg12[%c208, %c0_102] : memref<216x1024xbf16, #tpu.memory_space<vmem>>, vector<8x1024xbf16>
      tpu.vector_store %arg12[%c208, %c0_102], %106 {strides = array<i32>} : memref<216x1024xbf16, #tpu.memory_space<vmem>>, vector<8x1024xbf16>,
      %c0_103 = arith.constant 0 : index
      %c0_104 = arith.constant 0 : index
      %108 = vector.load %arg4[%c0_103, %c0_104] : memref<8x216xbf16, #tpu.memory_space<vmem>>, vector<8x216xbf16>
      %c0_105 = arith.constant 0 : index
      %c0_106 = arith.constant 0 : index
      %109 = vector.load %arg12[%c0_105, %c0_106] : memref<216x1024xbf16, #tpu.memory_space<vmem>>, vector<216x1024xbf16>
      %cst_107 = arith.constant dense<0.000000e+00> : vector<8x1024xf32>
      %110 = tpu.matmul %108, %109, %cst_107 {dimension_numbers = #tpu.dot_dimension_numbers<[1], [0], [0], [1], [0, 0, 1, 1], [], []>} : vector<8x216xbf16>, vector<216x1024xbf16>, vector<8x1024xf32> -> vector<8x1024xf32>
      %c0_108 = arith.constant 0 : index
      %c0_109 = arith.constant 0 : index
      %111 = vector.load %arg5[%c0_108, %c0_109] : memref<8x1xf32, #tpu.memory_space<vmem>>, vector<8x1xf32>
      %112 = vector.broadcast %111 : vector<8x1xf32> to vector<8x1024xf32>
      %113 = arith.addf %110, %112 : vector<8x1024xf32>
      %cst_110 = arith.constant 0.000000e+00 : f32
      %114 = vector.broadcast %cst_110 : f32 to vector<8x1024xf32>
      %115 = arith.cmpf oge, %113, %114 : vector<8x1024xf32>
      %cst_111 = arith.constant 2.000000e-01 : f32
      %116 = vector.broadcast %cst_111 : f32 to vector<8x1024xf32>
      %117 = arith.mulf %116, %113 : vector<8x1024xf32>
      %118 = arith.select %115, %113, %117 : vector<8x1024xi1>, vector<8x1024xf32>
      %c0_112 = arith.constant 0 : index
      %c0_113 = arith.constant 0 : index
      %119 = vector.load %arg2[%c0_112, %c0_113] : memref<1x1024xf32, #tpu.memory_space<vmem>>, vector<1x1024xf32>
      %120 = vector.broadcast %119 : vector<1x1024xf32> to vector<8x1024xf32>
      %121 = arith.mulf %118, %120 : vector<8x1024xf32>
      %cst_114 = arith.constant 0.000000e+00 : bf16
      %122 = vector.broadcast %cst_114 : bf16 to vector<8x200xbf16>
      %c0_115 = arith.constant 0 : index
      %c0_116 = arith.constant 0 : index
      %123 = vector.load %arg11[%c0_115, %c0_116] : memref<8x1424xbf16, #tpu.memory_space<vmem>>, vector<8x200xbf16>
      tpu.vector_store %arg11[%c0_115, %c0_116], %122 {strides = array<i32>} : memref<8x1424xbf16, #tpu.memory_space<vmem>>, vector<8x200xbf16>,
      %cst_117 = arith.constant 0.000000e+00 : bf16
      %124 = vector.broadcast %cst_117 : bf16 to vector<8x200xbf16>
      %c0_118 = arith.constant 0 : index
      %c1224 = arith.constant 1224 : index
      %125 = vector.load %arg11[%c0_118, %c1224] : memref<8x1424xbf16, #tpu.memory_space<vmem>>, vector<8x200xbf16>
      tpu.vector_store %arg11[%c0_118, %c1224], %124 {strides = array<i32>} : memref<8x1424xbf16, #tpu.memory_space<vmem>>, vector<8x200xbf16>,
      %126 = arith.truncf %121 : vector<8x1024xf32> to vector<8x1024xbf16>
      %c0_119 = arith.constant 0 : index
      %c200_120 = arith.constant 200 : index
      %127 = vector.load %arg11[%c0_119, %c200_120] : memref<8x1424xbf16, #tpu.memory_space<vmem>>, vector<8x1024xbf16>
      tpu.vector_store %arg11[%c0_119, %c200_120], %126 {strides = array<i32>} : memref<8x1424xbf16, #tpu.memory_space<vmem>>, vector<8x1024xbf16>,
      %c0_121 = arith.constant 0 : index
      %c89_122 = arith.constant 89 : index
      %128 = vector.load %arg11[%c0_121, %c89_122] : memref<8x1424xbf16, #tpu.memory_space<vmem>>, vector<8x1024xbf16>
      %c0_123 = arith.constant 0 : index
      %c0_124 = arith.constant 0 : index
      %129 = vector.load %arg12[%c0_123, %c0_124] : memref<216x1024xbf16, #tpu.memory_space<vmem>>, vector<8x1024xbf16>
      tpu.vector_store %arg12[%c0_123, %c0_124], %128 {strides = array<i32>} : memref<216x1024xbf16, #tpu.memory_space<vmem>>, vector<8x1024xbf16>,
      %c0_125 = arith.constant 0 : index
      %c90_126 = arith.constant 90 : index
      %130 = vector.load %arg11[%c0_125, %c90_126] : memref<8x1424xbf16, #tpu.memory_space<vmem>>, vector<8x1024xbf16>
      %c8_127 = arith.constant 8 : index
      %c0_128 = arith.constant 0 : index
      %131 = vector.load %arg12[%c8_127, %c0_128] : memref<216x1024xbf16, #tpu.memory_space<vmem>>, vector<8x1024xbf16>
      tpu.vector_store %arg12[%c8_127, %c0_128], %130 {strides = array<i32>} : memref<216x1024xbf16, #tpu.memory_space<vmem>>, vector<8x1024xbf16>,
      %c0_129 = arith.constant 0 : index
      %c91_130 = arith.constant 91 : index
      %132 = vector.load %arg11[%c0_129, %c91_130] : memref<8x1424xbf16, #tpu.memory_space<vmem>>, vector<8x1024xbf16>
      %c16_131 = arith.constant 16 : index
      %c0_132 = arith.constant 0 : index
      %133 = vector.load %arg12[%c16_131, %c0_132] : memref<216x1024xbf16, #tpu.memory_space<vmem>>, vector<8x1024xbf16>
      tpu.vector_store %arg12[%c16_131, %c0_132], %132 {strides = array<i32>} : memref<216x1024xbf16, #tpu.memory_space<vmem>>, vector<8x1024xbf16>,
      %c0_133 = arith.constant 0 : index
      %c99_134 = arith.constant 99 : index
      %134 = vector.load %arg11[%c0_133, %c99_134] : memref<8x1424xbf16, #tpu.memory_space<vmem>>, vector<8x1024xbf16>
      %c24_135 = arith.constant 24 : index
      %c0_136 = arith.constant 0 : index
      %135 = vector.load %arg12[%c24_135, %c0_136] : memref<216x1024xbf16, #tpu.memory_space<vmem>>, vector<8x1024xbf16>
      tpu.vector_store %arg12[%c24_135, %c0_136], %134 {strides = array<i32>} : memref<216x1024xbf16, #tpu.memory_space<vmem>>, vector<8x1024xbf16>,
      %c0_137 = arith.constant 0 : index
      %c100_138 = arith.constant 100 : index
      %136 = vector.load %arg11[%c0_137, %c100_138] : memref<8x1424xbf16, #tpu.memory_space<vmem>>, vector<8x1024xbf16>
      %c32_139 = arith.constant 32 : index
      %c0_140 = arith.constant 0 : index
      %137 = vector.load %arg12[%c32_139, %c0_140] : memref<216x1024xbf16, #tpu.memory_space<vmem>>, vector<8x1024xbf16>
      tpu.vector_store %arg12[%c32_139, %c0_140], %136 {strides = array<i32>} : memref<216x1024xbf16, #tpu.memory_space<vmem>>, vector<8x1024xbf16>,
      %c0_141 = arith.constant 0 : index
      %c101_142 = arith.constant 101 : index
      %138 = vector.load %arg11[%c0_141, %c101_142] : memref<8x1424xbf16, #tpu.memory_space<vmem>>, vector<8x1024xbf16>
      %c40_143 = arith.constant 40 : index
      %c0_144 = arith.constant 0 : index
      %139 = vector.load %arg12[%c40_143, %c0_144] : memref<216x1024xbf16, #tpu.memory_space<vmem>>, vector<8x1024xbf16>
      tpu.vector_store %arg12[%c40_143, %c0_144], %138 {strides = array<i32>} : memref<216x1024xbf16, #tpu.memory_space<vmem>>, vector<8x1024xbf16>,
      %c0_145 = arith.constant 0 : index
      %c109_146 = arith.constant 109 : index
      %140 = vector.load %arg11[%c0_145, %c109_146] : memref<8x1424xbf16, #tpu.memory_space<vmem>>, vector<8x1024xbf16>
      %c48_147 = arith.constant 48 : index
      %c0_148 = arith.constant 0 : index
      %141 = vector.load %arg12[%c48_147, %c0_148] : memref<216x1024xbf16, #tpu.memory_space<vmem>>, vector<8x1024xbf16>
      tpu.vector_store %arg12[%c48_147, %c0_148], %140 {strides = array<i32>} : memref<216x1024xbf16, #tpu.memory_space<vmem>>, vector<8x1024xbf16>,
      %c0_149 = arith.constant 0 : index
      %c110_150 = arith.constant 110 : index
      %142 = vector.load %arg11[%c0_149, %c110_150] : memref<8x1424xbf16, #tpu.memory_space<vmem>>, vector<8x1024xbf16>
      %c56_151 = arith.constant 56 : index
      %c0_152 = arith.constant 0 : index
      %143 = vector.load %arg12[%c56_151, %c0_152] : memref<216x1024xbf16, #tpu.memory_space<vmem>>, vector<8x1024xbf16>
      tpu.vector_store %arg12[%c56_151, %c0_152], %142 {strides = array<i32>} : memref<216x1024xbf16, #tpu.memory_space<vmem>>, vector<8x1024xbf16>,
      %c0_153 = arith.constant 0 : index
      %c111_154 = arith.constant 111 : index
      %144 = vector.load %arg11[%c0_153, %c111_154] : memref<8x1424xbf16, #tpu.memory_space<vmem>>, vector<8x1024xbf16>
      %c64_155 = arith.constant 64 : index
      %c0_156 = arith.constant 0 : index
      %145 = vector.load %arg12[%c64_155, %c0_156] : memref<216x1024xbf16, #tpu.memory_space<vmem>>, vector<8x1024xbf16>
      tpu.vector_store %arg12[%c64_155, %c0_156], %144 {strides = array<i32>} : memref<216x1024xbf16, #tpu.memory_space<vmem>>, vector<8x1024xbf16>,
      %c0_157 = arith.constant 0 : index
      %c189_158 = arith.constant 189 : index
      %146 = vector.load %arg11[%c0_157, %c189_158] : memref<8x1424xbf16, #tpu.memory_space<vmem>>, vector<8x1024xbf16>
      %c72_159 = arith.constant 72 : index
      %c0_160 = arith.constant 0 : index
      %147 = vector.load %arg12[%c72_159, %c0_160] : memref<216x1024xbf16, #tpu.memory_space<vmem>>, vector<8x1024xbf16>
      tpu.vector_store %arg12[%c72_159, %c0_160], %146 {strides = array<i32>} : memref<216x1024xbf16, #tpu.memory_space<vmem>>, vector<8x1024xbf16>,
      %c0_161 = arith.constant 0 : index
      %c190_162 = arith.constant 190 : index
      %148 = vector.load %arg11[%c0_161, %c190_162] : memref<8x1424xbf16, #tpu.memory_space<vmem>>, vector<8x1024xbf16>
      %c80_163 = arith.constant 80 : index
      %c0_164 = arith.constant 0 : index
      %149 = vector.load %arg12[%c80_163, %c0_164] : memref<216x1024xbf16, #tpu.memory_space<vmem>>, vector<8x1024xbf16>
      tpu.vector_store %arg12[%c80_163, %c0_164], %148 {strides = array<i32>} : memref<216x1024xbf16, #tpu.memory_space<vmem>>, vector<8x1024xbf16>,
      %c0_165 = arith.constant 0 : index
      %c191_166 = arith.constant 191 : index
      %150 = vector.load %arg11[%c0_165, %c191_166] : memref<8x1424xbf16, #tpu.memory_space<vmem>>, vector<8x1024xbf16>
      %c88_167 = arith.constant 88 : index
      %c0_168 = arith.constant 0 : index
      %151 = vector.load %arg12[%c88_167, %c0_168] : memref<216x1024xbf16, #tpu.memory_space<vmem>>, vector<8x1024xbf16>
      tpu.vector_store %arg12[%c88_167, %c0_168], %150 {strides = array<i32>} : memref<216x1024xbf16, #tpu.memory_space<vmem>>, vector<8x1024xbf16>,
      %c0_169 = arith.constant 0 : index
      %c199_170 = arith.constant 199 : index
      %152 = vector.load %arg11[%c0_169, %c199_170] : memref<8x1424xbf16, #tpu.memory_space<vmem>>, vector<8x1024xbf16>
      %c96_171 = arith.constant 96 : index
      %c0_172 = arith.constant 0 : index
      %153 = vector.load %arg12[%c96_171, %c0_172] : memref<216x1024xbf16, #tpu.memory_space<vmem>>, vector<8x1024xbf16>
      tpu.vector_store %arg12[%c96_171, %c0_172], %152 {strides = array<i32>} : memref<216x1024xbf16, #tpu.memory_space<vmem>>, vector<8x1024xbf16>,
      %c0_173 = arith.constant 0 : index
      %c200_174 = arith.constant 200 : index
      %154 = vector.load %arg11[%c0_173, %c200_174] : memref<8x1424xbf16, #tpu.memory_space<vmem>>, vector<8x1024xbf16>
      %c104_175 = arith.constant 104 : index
      %c0_176 = arith.constant 0 : index
      %155 = vector.load %arg12[%c104_175, %c0_176] : memref<216x1024xbf16, #tpu.memory_space<vmem>>, vector<8x1024xbf16>
      tpu.vector_store %arg12[%c104_175, %c0_176], %154 {strides = array<i32>} : memref<216x1024xbf16, #tpu.memory_space<vmem>>, vector<8x1024xbf16>,
      %c0_177 = arith.constant 0 : index
      %c201_178 = arith.constant 201 : index
      %156 = vector.load %arg11[%c0_177, %c201_178] : memref<8x1424xbf16, #tpu.memory_space<vmem>>, vector<8x1024xbf16>
      %c112_179 = arith.constant 112 : index
      %c0_180 = arith.constant 0 : index
      %157 = vector.load %arg12[%c112_179, %c0_180] : memref<216x1024xbf16, #tpu.memory_space<vmem>>, vector<8x1024xbf16>
      tpu.vector_store %arg12[%c112_179, %c0_180], %156 {strides = array<i32>} : memref<216x1024xbf16, #tpu.memory_space<vmem>>, vector<8x1024xbf16>,
      %c0_181 = arith.constant 0 : index
      %c209_182 = arith.constant 209 : index
      %158 = vector.load %arg11[%c0_181, %c209_182] : memref<8x1424xbf16, #tpu.memory_space<vmem>>, vector<8x1024xbf16>
      %c120_183 = arith.constant 120 : index
      %c0_184 = arith.constant 0 : index
      %159 = vector.load %arg12[%c120_183, %c0_184] : memref<216x1024xbf16, #tpu.memory_space<vmem>>, vector<8x1024xbf16>
      tpu.vector_store %arg12[%c120_183, %c0_184], %158 {strides = array<i32>} : memref<216x1024xbf16, #tpu.memory_space<vmem>>, vector<8x1024xbf16>,
      %c0_185 = arith.constant 0 : index
      %c210_186 = arith.constant 210 : index
      %160 = vector.load %arg11[%c0_185, %c210_186] : memref<8x1424xbf16, #tpu.memory_space<vmem>>, vector<8x1024xbf16>
      %c128_187 = arith.constant 128 : index
      %c0_188 = arith.constant 0 : index
      %161 = vector.load %arg12[%c128_187, %c0_188] : memref<216x1024xbf16, #tpu.memory_space<vmem>>, vector<8x1024xbf16>
      tpu.vector_store %arg12[%c128_187, %c0_188], %160 {strides = array<i32>} : memref<216x1024xbf16, #tpu.memory_space<vmem>>, vector<8x1024xbf16>,
      %c0_189 = arith.constant 0 : index
      %c211_190 = arith.constant 211 : index
      %162 = vector.load %arg11[%c0_189, %c211_190] : memref<8x1424xbf16, #tpu.memory_space<vmem>>, vector<8x1024xbf16>
      %c136_191 = arith.constant 136 : index
      %c0_192 = arith.constant 0 : index
      %163 = vector.load %arg12[%c136_191, %c0_192] : memref<216x1024xbf16, #tpu.memory_space<vmem>>, vector<8x1024xbf16>
      tpu.vector_store %arg12[%c136_191, %c0_192], %162 {strides = array<i32>} : memref<216x1024xbf16, #tpu.memory_space<vmem>>, vector<8x1024xbf16>,
      %c0_193 = arith.constant 0 : index
      %c289_194 = arith.constant 289 : index
      %164 = vector.load %arg11[%c0_193, %c289_194] : memref<8x1424xbf16, #tpu.memory_space<vmem>>, vector<8x1024xbf16>
      %c144_195 = arith.constant 144 : index
      %c0_196 = arith.constant 0 : index
      %165 = vector.load %arg12[%c144_195, %c0_196] : memref<216x1024xbf16, #tpu.memory_space<vmem>>, vector<8x1024xbf16>
      tpu.vector_store %arg12[%c144_195, %c0_196], %164 {strides = array<i32>} : memref<216x1024xbf16, #tpu.memory_space<vmem>>, vector<8x1024xbf16>,
      %c0_197 = arith.constant 0 : index
      %c290_198 = arith.constant 290 : index
      %166 = vector.load %arg11[%c0_197, %c290_198] : memref<8x1424xbf16, #tpu.memory_space<vmem>>, vector<8x1024xbf16>
      %c152_199 = arith.constant 152 : index
      %c0_200 = arith.constant 0 : index
      %167 = vector.load %arg12[%c152_199, %c0_200] : memref<216x1024xbf16, #tpu.memory_space<vmem>>, vector<8x1024xbf16>
      tpu.vector_store %arg12[%c152_199, %c0_200], %166 {strides = array<i32>} : memref<216x1024xbf16, #tpu.memory_space<vmem>>, vector<8x1024xbf16>,
      %c0_201 = arith.constant 0 : index
      %c291_202 = arith.constant 291 : index
      %168 = vector.load %arg11[%c0_201, %c291_202] : memref<8x1424xbf16, #tpu.memory_space<vmem>>, vector<8x1024xbf16>
      %c160_203 = arith.constant 160 : index
      %c0_204 = arith.constant 0 : index
      %169 = vector.load %arg12[%c160_203, %c0_204] : memref<216x1024xbf16, #tpu.memory_space<vmem>>, vector<8x1024xbf16>
      tpu.vector_store %arg12[%c160_203, %c0_204], %168 {strides = array<i32>} : memref<216x1024xbf16, #tpu.memory_space<vmem>>, vector<8x1024xbf16>,
      %c0_205 = arith.constant 0 : index
      %c299_206 = arith.constant 299 : index
      %170 = vector.load %arg11[%c0_205, %c299_206] : memref<8x1424xbf16, #tpu.memory_space<vmem>>, vector<8x1024xbf16>
      %c168_207 = arith.constant 168 : index
      %c0_208 = arith.constant 0 : index
      %171 = vector.load %arg12[%c168_207, %c0_208] : memref<216x1024xbf16, #tpu.memory_space<vmem>>, vector<8x1024xbf16>
      tpu.vector_store %arg12[%c168_207, %c0_208], %170 {strides = array<i32>} : memref<216x1024xbf16, #tpu.memory_space<vmem>>, vector<8x1024xbf16>,
      %c0_209 = arith.constant 0 : index
      %c300_210 = arith.constant 300 : index
      %172 = vector.load %arg11[%c0_209, %c300_210] : memref<8x1424xbf16, #tpu.memory_space<vmem>>, vector<8x1024xbf16>
      %c176_211 = arith.constant 176 : index
      %c0_212 = arith.constant 0 : index
      %173 = vector.load %arg12[%c176_211, %c0_212] : memref<216x1024xbf16, #tpu.memory_space<vmem>>, vector<8x1024xbf16>
      tpu.vector_store %arg12[%c176_211, %c0_212], %172 {strides = array<i32>} : memref<216x1024xbf16, #tpu.memory_space<vmem>>, vector<8x1024xbf16>,
      %c0_213 = arith.constant 0 : index
      %c301_214 = arith.constant 301 : index
      %174 = vector.load %arg11[%c0_213, %c301_214] : memref<8x1424xbf16, #tpu.memory_space<vmem>>, vector<8x1024xbf16>
      %c184_215 = arith.constant 184 : index
      %c0_216 = arith.constant 0 : index
      %175 = vector.load %arg12[%c184_215, %c0_216] : memref<216x1024xbf16, #tpu.memory_space<vmem>>, vector<8x1024xbf16>
      tpu.vector_store %arg12[%c184_215, %c0_216], %174 {strides = array<i32>} : memref<216x1024xbf16, #tpu.memory_space<vmem>>, vector<8x1024xbf16>,
      %c0_217 = arith.constant 0 : index
      %c309_218 = arith.constant 309 : index
      %176 = vector.load %arg11[%c0_217, %c309_218] : memref<8x1424xbf16, #tpu.memory_space<vmem>>, vector<8x1024xbf16>
      %c192_219 = arith.constant 192 : index
      %c0_220 = arith.constant 0 : index
      %177 = vector.load %arg12[%c192_219, %c0_220] : memref<216x1024xbf16, #tpu.memory_space<vmem>>, vector<8x1024xbf16>
      tpu.vector_store %arg12[%c192_219, %c0_220], %176 {strides = array<i32>} : memref<216x1024xbf16, #tpu.memory_space<vmem>>, vector<8x1024xbf16>,
      %c0_221 = arith.constant 0 : index
      %c310_222 = arith.constant 310 : index
      %178 = vector.load %arg11[%c0_221, %c310_222] : memref<8x1424xbf16, #tpu.memory_space<vmem>>, vector<8x1024xbf16>
      %c200_223 = arith.constant 200 : index
      %c0_224 = arith.constant 0 : index
      %179 = vector.load %arg12[%c200_223, %c0_224] : memref<216x1024xbf16, #tpu.memory_space<vmem>>, vector<8x1024xbf16>
      tpu.vector_store %arg12[%c200_223, %c0_224], %178 {strides = array<i32>} : memref<216x1024xbf16, #tpu.memory_space<vmem>>, vector<8x1024xbf16>,
      %c0_225 = arith.constant 0 : index
      %c311_226 = arith.constant 311 : index
      %180 = vector.load %arg11[%c0_225, %c311_226] : memref<8x1424xbf16, #tpu.memory_space<vmem>>, vector<8x1024xbf16>
      %c208_227 = arith.constant 208 : index
      %c0_228 = arith.constant 0 : index
      %181 = vector.load %arg12[%c208_227, %c0_228] : memref<216x1024xbf16, #tpu.memory_space<vmem>>, vector<8x1024xbf16>
      tpu.vector_store %arg12[%c208_227, %c0_228], %180 {strides = array<i32>} : memref<216x1024xbf16, #tpu.memory_space<vmem>>, vector<8x1024xbf16>,
    } else {
    }
    %c0 = arith.constant 0 : index
    %c0_1 = arith.constant 0 : index
    %c0_2 = arith.constant 0 : index
    %3 = vector.load %arg6[%c0, %c0_1, %c0_2] : memref<1x8x216xbf16, #tpu.memory_space<vmem>>, vector<1x8x216xbf16>
    %4 = vector.shape_cast %3 : vector<1x8x216xbf16> to vector<8x216xbf16>
    %c0_3 = arith.constant 0 : index
    %c0_4 = arith.constant 0 : index
    %5 = vector.load %arg12[%c0_3, %c0_4] : memref<216x1024xbf16, #tpu.memory_space<vmem>>, vector<216x1024xbf16>
    %cst = arith.constant dense<0.000000e+00> : vector<8x1024xf32>
    %6 = tpu.matmul %4, %5, %cst {dimension_numbers = #tpu.dot_dimension_numbers<[1], [0], [0], [1], [0, 0, 1, 1], [], []>} : vector<8x216xbf16>, vector<216x1024xbf16>, vector<8x1024xf32> -> vector<8x1024xf32>
    %c0_5 = arith.constant 0 : index
    %c0_6 = arith.constant 0 : index
    %7 = vector.load %arg7[%c0_5, %c0_6] : memref<8x1xf32, #tpu.memory_space<vmem>>, vector<8x1xf32>
    %8 = vector.broadcast %7 : vector<8x1xf32> to vector<8x1024xf32>
    %9 = arith.addf %6, %8 : vector<8x1024xf32>
    %c0_7 = arith.constant 0 : index
    %c0_8 = arith.constant 0 : index
    %c200 = arith.constant 200 : index
    %10 = vector.load %arg3[%c0_7, %c0_8, %c200] : memref<1x8x1400xbf16, #tpu.memory_space<vmem>>, vector<1x8x1024xbf16>
    %11 = vector.shape_cast %10 : vector<1x8x1024xbf16> to vector<8x1024xbf16>
    %c0_9 = arith.constant 0 : index
    %c0_10 = arith.constant 0 : index
    %12 = vector.load %arg8[%c0_9, %c0_10] : memref<8x8xbf16, #tpu.memory_space<vmem>>, vector<8x8xbf16>
    %cst_11 = arith.constant dense<0.000000e+00> : vector<8x1024xf32>
    %13 = tpu.matmul %12, %11, %cst_11 {dimension_numbers = #tpu.dot_dimension_numbers<[1], [0], [0], [1], [0, 0, 1, 1], [], []>} : vector<8x8xbf16>, vector<8x1024xbf16>, vector<8x1024xf32> -> vector<8x1024xf32>
    %14 = arith.addf %9, %13 : vector<8x1024xf32>
    %c0_12 = arith.constant 0 : index
    %c0_13 = arith.constant 0 : index
    %15 = vector.load %arg9[%c0_12, %c0_13] : memref<8x1xf32, #tpu.memory_space<vmem>>, vector<8x1xf32>
    %16 = vector.broadcast %15 : vector<8x1xf32> to vector<8x1024xf32>
    %17 = arith.addf %14, %16 : vector<8x1024xf32>
    %cst_14 = arith.constant 0.000000e+00 : f32
    %18 = vector.broadcast %cst_14 : f32 to vector<8x1024xf32>
    %19 = arith.cmpf oge, %17, %18 : vector<8x1024xf32>
    %cst_15 = arith.constant 2.000000e-01 : f32
    %20 = vector.broadcast %cst_15 : f32 to vector<8x1024xf32>
    %21 = arith.mulf %20, %17 : vector<8x1024xf32>
    %22 = arith.select %19, %17, %21 : vector<8x1024xi1>, vector<8x1024xf32>
    %23 = arith.truncf %22 : vector<8x1024xf32> to vector<8x1024xbf16>
    %c0_16 = arith.constant 0 : index
    %c0_17 = arith.constant 0 : index
    %c0_18 = arith.constant 0 : index
    %24 = vector.load %arg10[%c0_16, %c0_17, %c0_18] : memref<1x8x1024xbf16, #tpu.memory_space<vmem>>, vector<1x8x1024xbf16>
    %25 = vector.shape_cast %24 : vector<1x8x1024xbf16> to vector<8x1024xbf16>
    %26 = vector.shape_cast %23 : vector<8x1024xbf16> to vector<1x8x1024xbf16>
    tpu.vector_store %arg10[%c0_16, %c0_17, %c0_18], %26 {strides = array<i32>} : memref<1x8x1024xbf16, #tpu.memory_space<vmem>>, vector<1x8x1024xbf16>,
    return
  }
  func.func @transform_0(%arg0: i32, %arg1: i32) -> (i32, i32) {
    %c0_i32 = arith.constant 0 : i32
    %c0_i32_0 = arith.constant 0 : i32
    %c0_i32_1 = arith.constant 0 : i32
    return %c0_i32, %c0_i32_0 : i32, i32
  }
  func.func @transform_1(%arg0: i32, %arg1: i32) -> (i32, i32, i32) {
    %c0_i32 = arith.constant 0 : i32
    %c0_i32_0 = arith.constant 0 : i32
    %c0_i32_1 = arith.constant 0 : i32
    return %arg0, %c0_i32, %c0_i32_0 : i32, i32, i32
  }
  func.func @transform_2(%arg0: i32, %arg1: i32) -> (i32, i32) {
    %c0_i32 = arith.constant 0 : i32
    %c0_i32_0 = arith.constant 0 : i32
    %c0_i32_1 = arith.constant 0 : i32
    return %c0_i32, %c0_i32_0 : i32, i32
  }
  func.func @transform_3(%arg0: i32, %arg1: i32) -> (i32, i32) {
    %c0_i32 = arith.constant 0 : i32
    %c0_i32_0 = arith.constant 0 : i32
    %c0_i32_1 = arith.constant 0 : i32
    return %c0_i32, %c0_i32_0 : i32, i32
  }
  func.func @transform_4(%arg0: i32, %arg1: i32) -> (i32, i32, i32) {
    %c0_i32 = arith.constant 0 : i32
    %c0_i32_0 = arith.constant 0 : i32
    %c0_i32_1 = arith.constant 0 : i32
    return %arg1, %c0_i32, %c0_i32_0 : i32, i32, i32
  }
  func.func @transform_5(%arg0: i32, %arg1: i32) -> (i32, i32) {
    %c0_i32 = arith.constant 0 : i32
    %c0_i32_0 = arith.constant 0 : i32
    %c0_i32_1 = arith.constant 0 : i32
    return %c0_i32, %c0_i32_0 : i32, i32
  }
  func.func @transform_6(%arg0: i32, %arg1: i32) -> (i32, i32) {
    %c0_i32 = arith.constant 0 : i32
    %c0_i32_0 = arith.constant 0 : i32
    %c0_i32_1 = arith.constant 0 : i32
    return %c0_i32, %c0_i32_0 : i32, i32
  }
  func.func @transform_7(%arg0: i32, %arg1: i32) -> (i32, i32) {
    %c0_i32 = arith.constant 0 : i32
    %c0_i32_0 = arith.constant 0 : i32
    %c0_i32_1 = arith.constant 0 : i32
    return %c0_i32, %c0_i32_0 : i32, i32
  }
  func.func @transform_8(%arg0: i32, %arg1: i32) -> (i32, i32, i32) {
    %c0_i32 = arith.constant 0 : i32
    %c0_i32_0 = arith.constant 0 : i32
    return %arg0, %arg1, %c0_i32 : i32, i32, i32
  }
}

</mosaic_0001>

<llo_original>
// kernel: tpu_custom_call.1
$region0: #{tpu_custom_call.1}
  #allocation0 [shape = 'u32[]', space=smem, size = 0x4, offset = 0x4, fixed_abs, tag = 'smem constant byte address 0x4 - core index']
  #allocation1 [shape = 'u32[72,128]{1,0:T(1,128)}', space=vmem, size = 0x9000, scoped, tag = 'internal scratch']
  #allocation2 [shape = 'bf16[8,1424]{1,0:T(8,128)(2,1)}', space=vmem, size = 0x6000, scoped, tag = 'scratch operand']
  #allocation3 [shape = 'bf16[216,1024]{1,0:T(8,128)(2,1)}', space=vmem, size = 0x6c000, scoped, tag = 'scratch operand']
  %s0 = inlined_call_operand.vmem [shape: f32[1,1024], index: 0, kind: input, shape index: {}]
  %s1 = inlined_call_operand.hbm [shape: bf16[2,8,1400], index: 1, kind: input, shape index: {}]
  %s2 = inlined_call_operand.vmem [shape: bf16[8,216], index: 2, kind: input, shape index: {}]
  %s3 = inlined_call_operand.vmem [shape: f32[8,1], index: 3, kind: input, shape index: {}]
  %s4 = inlined_call_operand.vmem [shape: bf16[1,8,216], index: 4, kind: input, shape index: {}]
  %s5 = inlined_call_operand.vmem [shape: f32[8,1], index: 5, kind: input, shape index: {}]
  %s6 = inlined_call_operand.vmem [shape: bf16[8,8], index: 6, kind: input, shape index: {}]
  %s7 = inlined_call_operand.vmem [shape: f32[8,1], index: 7, kind: input, shape index: {}]
  %s8 = inlined_call_operand.hbm [shape: bf16[2,8,1024], index: 8, kind: output, shape index: {}]
  %s9 = sld [smem:[#allocation0]]
  $region73: #{tpu_custom_call.1} parent=0
    _
  %s11 = ssub.s32 1, %s9
  %s12 = scalar_select 0, %s11, %s9
  $region1: #{tpu_custom_call.1} parent=0
    #allocation4 [shape = 'u8[45056]{0}', space=vmem, size = 0xb000, scoped, tag = 'input window, operand 1']
    #allocation5 [shape = 's32[2]{0}', space=sflag, size = 0x8, scoped, tag = 'scoped memory for tpu_custom_call.1']
    #allocation6 [shape = 's32[2]{0}', space=sflag, size = 0x8, scoped, tag = 'scoped memory for tpu_custom_call.1']
    #allocation7 [shape = 'u8[32768]{0}', space=vmem, size = 0x8000, scoped, tag = 'output window, operand 0']
    %13 = vsyncpa [#allocation5], 0
    %s14 = scalar_lea.sflag [#allocation5], 1
    %15 = vsyncpa %s14, 0
    %16 = vsyncpa [#allocation6], 0
    %s17 = scalar_lea.sflag [#allocation6], 1
    %18 = vsyncpa %s17, 0
    loop: start=0, step=1, limit=4
    $region2: #{tpu_custom_call.1} parent=1 // loop_pre_header
      _
    $region3: #{tpu_custom_call.1} parent=1 // loop_header
      %s20 = sphi 0, %s24
      %p21 = scmp.ge.s32.totalorder %s20, 4
      %s27 = sphi 0, %s39
      %s28 = sphi 0, %s35
      %s29 = sphi 0, %s27
      %s30 = sphi 0, %s28
      %s31 = sphi 0, %s29
      %s32 = sphi 0, %s30
      %s40 = sphi 0, %s40
      %s42 = sphi 0, %s40
      %s43 = sphi 0, %s42
      %s57 = sphi 0, %s43
      %s63 = sphi 0, %s65
      %s66 = sphi 0, %s63
      %s67 = sphi 0, %s66
      %s83 = sphi 0, %s67
      %s87 = sphi 0, %s87
      %s89 = sphi 0, %s87
      %s90 = sphi 0, %s89
      %s104 = sphi 0, %s90
      %s108 = sphi 0, %s108
      %s110 = sphi 0, %s108
      %s111 = sphi 0, %s110
      %s125 = sphi 0, %s111
      %s131 = sphi 0, %s133
      %s134 = sphi 0, %s131
      %s135 = sphi 0, %s134
      %s151 = sphi 0, %s135
      %s155 = sphi 0, %s155
      %s157 = sphi 0, %s155
      %s158 = sphi 0, %s157
      %s172 = sphi 0, %s158
      %s176 = sphi 0, %s176
      %s178 = sphi 0, %s176
      %s179 = sphi 0, %s178
      %s193 = sphi 0, %s179
      %s197 = sphi 0, %s197
      %s199 = sphi 0, %s197
      %s200 = sphi 0, %s199
      %s214 = sphi 0, %s200
      %s222 = sphi 0, %s224
      %s225 = sphi 0, %s222
      %s226 = sphi 0, %s225
      %s242 = sphi 0, %s226
    $region4: #{tpu_custom_call.1} parent=1 // loop_header_branch
      %23 = sbr.rel (%p21) target = $region8
    $region5: #{tpu_custom_call.1} parent=1 // loop_body
      %s25 = ssub.s32 %s20, 1
      %s26 = ssub.s32 %s20, 2
      %s33 = sadd.s32 1, %s28
      %p34 = scmp.ge.s32.totalorder %s33, 1
      %s35 = scalar_select %p34, 0, %s33
      %s36 = sadd.s32 1, %s27
      %s37 = scalar_select %p34, %s36, %s27
      %p38 = scmp.ge.s32.totalorder %s37, 2
      %s39 = scalar_select %p38, 0, %s37
      %s41 = sadd.s32 %s40, 1
      %p44 = scmp.eq.s32.totalorder %s20, 1
      %p45 = scmp.ne.s32.totalorder %s40, %s42
      %p46 = scmp.eq.s32.totalorder %s20, 0
      %p47 = por %p45, %p46
      %p48 = scmp.ne.s32.totalorder %s40, %s42
      %p49 = scmp.eq.s32.totalorder %s25, 1
      %p50 = por %p48, %p49
      %p51 = scmp.ne.s32.totalorder %s42, %s43
      %p52 = scmp.eq.s32.totalorder %s25, 0
      %p53 = por %p51, %p52
      %p54 = scmp.ne.s32.totalorder %s42, %s43
      %p55 = scmp.eq.s32.totalorder %s26, 1
      %p56 = por %p54, %p55
      %p58 = scmp.ne.s32.totalorder %s43, %s57
      %p59 = scmp.eq.s32.totalorder %s26, 0
      %p60 = por %p58, %p59
      %s61 = ssub.s32 %s27, %s39
      %p62 = scmp.eq.s32.totalorder %s61, 0
      %s64 = sadd.s32 %s63, 1
      %s65 = scalar_select %p62, %s63, %s64
      %p68 = pneg %p62
      %p69 = scmp.eq.s32.totalorder %s20, 1
      %p70 = por %p68, %p69
      %p71 = scmp.ne.s32.totalorder %s63, %s66
      %p72 = scmp.eq.s32.totalorder %s20, 0
      %p73 = por %p71, %p72
      %p74 = scmp.ne.s32.totalorder %s63, %s66
      %p75 = scmp.eq.s32.totalorder %s25, 1
      %p76 = por %p74, %p75
      %p77 = scmp.ne.s32.totalorder %s66, %s67
      %p78 = scmp.eq.s32.totalorder %s25, 0
      %p79 = por %p77, %p78
      %p80 = scmp.ne.s32.totalorder %s66, %s67
      %p81 = scmp.eq.s32.totalorder %s26, 1
      %p82 = por %p80, %p81
      %p84 = scmp.ne.s32.totalorder %s67, %s83
      %p85 = scmp.eq.s32.totalorder %s26, 0
      %p86 = por %p84, %p85
      %s88 = sadd.s32 %s87, 1
      %p91 = scmp.eq.s32.totalorder %s20, 1
      %p92 = scmp.ne.s32.totalorder %s87, %s89
      %p93 = scmp.eq.s32.totalorder %s20, 0
      %p94 = por %p92, %p93
      %p95 = scmp.ne.s32.totalorder %s87, %s89
      %p96 = scmp.eq.s32.totalorder %s25, 1
      %p97 = por %p95, %p96
      %p98 = scmp.ne.s32.totalorder %s89, %s90
      %p99 = scmp.eq.s32.totalorder %s25, 0
      %p100 = por %p98, %p99
      %p101 = scmp.ne.s32.totalorder %s89, %s90
      %p102 = scmp.eq.s32.totalorder %s26, 1
      %p103 = por %p101, %p102
      %p105 = scmp.ne.s32.totalorder %s90, %s104
      %p106 = scmp.eq.s32.totalorder %s26, 0
      %p107 = por %p105, %p106
      %s109 = sadd.s32 %s108, 1
      %p112 = scmp.eq.s32.totalorder %s20, 1
      %p113 = scmp.ne.s32.totalorder %s108, %s110
      %p114 = scmp.eq.s32.totalorder %s20, 0
      %p115 = por %p113, %p114
      %p116 = scmp.ne.s32.totalorder %s108, %s110
      %p117 = scmp.eq.s32.totalorder %s25, 1
      %p118 = por %p116, %p117
      %p119 = scmp.ne.s32.totalorder %s110, %s111
      %p120 = scmp.eq.s32.totalorder %s25, 0
      %p121 = por %p119, %p120
      %p122 = scmp.ne.s32.totalorder %s110, %s111
      %p123 = scmp.eq.s32.totalorder %s26, 1
      %p124 = por %p122, %p123
      %p126 = scmp.ne.s32.totalorder %s111, %s125
      %p127 = scmp.eq.s32.totalorder %s26, 0
      %p128 = por %p126, %p127
      %s129 = ssub.s32 %s28, %s35
      %p130 = scmp.eq.s32.totalorder %s129, 0
      %s132 = sadd.s32 %s131, 1
      %s133 = scalar_select %p130, %s131, %s132
      %p136 = pneg %p130
      %p137 = scmp.eq.s32.totalorder %s20, 1
      %p138 = por %p136, %p137
      %p139 = scmp.ne.s32.totalorder %s131, %s134
      %p140 = scmp.eq.s32.totalorder %s20, 0
      %p141 = por %p139, %p140
      %p142 = scmp.ne.s32.totalorder %s131, %s134
      %p143 = scmp.eq.s32.totalorder %s25, 1
      %p144 = por %p142, %p143
      %p145 = scmp.ne.s32.totalorder %s134, %s135
      %p146 = scmp.eq.s32.totalorder %s25, 0
      %p147 = por %p145, %p146
      %p148 = scmp.ne.s32.totalorder %s134, %s135
      %p149 = scmp.eq.s32.totalorder %s26, 1
      %p150 = por %p148, %p149
      %p152 = scmp.ne.s32.totalorder %s135, %s151
      %p153 = scmp.eq.s32.totalorder %s26, 0
      %p154 = por %p152, %p153
      %s156 = sadd.s32 %s155, 1
      %p159 = scmp.eq.s32.totalorder %s20, 1
      %p160 = scmp.ne.s32.totalorder %s155, %s157
      %p161 = scmp.eq.s32.totalorder %s20, 0
      %p162 = por %p160, %p161
      %p163 = scmp.ne.s32.totalorder %s155, %s157
      %p164 = scmp.eq.s32.totalorder %s25, 1
      %p165 = por %p163, %p164
      %p166 = scmp.ne.s32.totalorder %s157, %s158
      %p167 = scmp.eq.s32.totalorder %s25, 0
      %p168 = por %p166, %p167
      %p169 = scmp.ne.s32.totalorder %s157, %s158
      %p170 = scmp.eq.s32.totalorder %s26, 1
      %p171 = por %p169, %p170
      %p173 = scmp.ne.s32.totalorder %s158, %s172
      %p174 = scmp.eq.s32.totalorder %s26, 0
      %p175 = por %p173, %p174
      %s177 = sadd.s32 %s176, 1
      %p180 = scmp.eq.s32.totalorder %s20, 1
      %p181 = scmp.ne.s32.totalorder %s176, %s178
      %p182 = scmp.eq.s32.totalorder %s20, 0
      %p183 = por %p181, %p182
      %p184 = scmp.ne.s32.totalorder %s176, %s178
      %p185 = scmp.eq.s32.totalorder %s25, 1
      %p186 = por %p184, %p185
      %p187 = scmp.ne.s32.totalorder %s178, %s179
      %p188 = scmp.eq.s32.totalorder %s25, 0
      %p189 = por %p187, %p188
      %p190 = scmp.ne.s32.totalorder %s178, %s179
      %p191 = scmp.eq.s32.totalorder %s26, 1
      %p192 = por %p190, %p191
      %p194 = scmp.ne.s32.totalorder %s179, %s193
      %p195 = scmp.eq.s32.totalorder %s26, 0
      %p196 = por %p194, %p195
      %s198 = sadd.s32 %s197, 1
      %p201 = scmp.eq.s32.totalorder %s20, 1
      %p202 = scmp.ne.s32.totalorder %s197, %s199
      %p203 = scmp.eq.s32.totalorder %s20, 0
      %p204 = por %p202, %p203
      %p205 = scmp.ne.s32.totalorder %s197, %s199
      %p206 = scmp.eq.s32.totalorder %s25, 1
      %p207 = por %p205, %p206
      %p208 = scmp.ne.s32.totalorder %s199, %s200
      %p209 = scmp.eq.s32.totalorder %s25, 0
      %p210 = por %p208, %p209
      %p211 = scmp.ne.s32.totalorder %s199, %s200
      %p212 = scmp.eq.s32.totalorder %s26, 1
      %p213 = por %p211, %p212
      %p215 = scmp.ne.s32.totalorder %s200, %s214
      %p216 = scmp.eq.s32.totalorder %s26, 0
      %p217 = por %p215, %p216
      %s218 = ssub.s32 %s27, %s39
      %s219 = ssub.s32 %s28, %s35
      %s220 = sor.u32 %s218, %s219
      %p221 = scmp.eq.s32.totalorder %s220, 0
      %s223 = sadd.s32 %s222, 1
      %s224 = scalar_select %p221, %s222, %s223
      %p227 = pneg %p221
      %p228 = scmp.eq.s32.totalorder %s20, 1
      %p229 = por %p227, %p228
      %p230 = scmp.ne.s32.totalorder %s222, %s225
      %p231 = scmp.eq.s32.totalorder %s20, 0
      %p232 = por %p230, %p231
      %p233 = scmp.ne.s32.totalorder %s222, %s225
      %p234 = scmp.eq.s32.totalorder %s25, 1
      %p235 = por %p233, %p234
      %p236 = scmp.ne.s32.totalorder %s225, %s226
      %p237 = scmp.eq.s32.totalorder %s25, 0
      %p238 = por %p236, %p237
      %p239 = scmp.ne.s32.totalorder %s225, %s226
      %p240 = scmp.eq.s32.totalorder %s26, 1
      %p241 = por %p239, %p240
      %p243 = scmp.ne.s32.totalorder %s226, %s242
      %p244 = scmp.eq.s32.totalorder %s26, 0
      %p245 = por %p243, %p244
      %p246 = scmp.le.s32.totalorder 1, %s20
      %p247 = scmp.lt.s32.totalorder %s20, 3
      %p248 = pnand %p246, %p247
      %p249 = pneg %p248
      // Predicated region
      $region9: #{tpu_custom_call.1} parent=5 // pred_check
        _
      $region10: #{tpu_custom_call.1} parent=5 // pred_check_branch
        %251 = sbr.rel (%p248) target = $region12
      $region11: #{tpu_custom_call.1} parent=5 // pred_region
        %s252 = ssub.s32 %s20, 1
        // Predicated region
        $region13: #{tpu_custom_call.1} parent=11 // pred_check
          %p253 = pneg %p53
        $region14: #{tpu_custom_call.1} parent=11 // pred_check_branch
          %255 = sbr.rel (%p253) target = $region16
        $region15: #{tpu_custom_call.1} parent=11 // pred_region
          _
        $region16: #{tpu_custom_call.1} parent=11 // pred_fallthru
          _
        // Predicated region
        $region17: #{tpu_custom_call.1} parent=11 // pred_check
          %p256 = pneg %p100
        $region18: #{tpu_custom_call.1} parent=11 // pred_check_branch
          %258 = sbr.rel (%p256) target = $region20
        $region19: #{tpu_custom_call.1} parent=11 // pred_region
          _
        $region20: #{tpu_custom_call.1} parent=11 // pred_fallthru
          _
        // Predicated region
        $region21: #{tpu_custom_call.1} parent=11 // pred_check
          %p259 = pneg %p121
        $region22: #{tpu_custom_call.1} parent=11 // pred_check_branch
          %261 = sbr.rel (%p259) target = $region24
        $region23: #{tpu_custom_call.1} parent=11 // pred_region
          _
        $region24: #{tpu_custom_call.1} parent=11 // pred_fallthru
          _
        // Predicated region
        $region25: #{tpu_custom_call.1} parent=11 // pred_check
          %p262 = pneg %p147
        $region26: #{tpu_custom_call.1} parent=11 // pred_check_branch
          %264 = sbr.rel (%p262) target = $region28
        $region27: #{tpu_custom_call.1} parent=11 // pred_region
          %p265 = scmp.lt.s32.totalorder %s30, 0
          %s266 = scalar_select %p265, %s30, 0
          %s267 = smul.addr %s266, 2
          %s268 = smul.addr %s267, 4
          %s269 = scalar_lea.vmem %s4, %s268
        $region28: #{tpu_custom_call.1} parent=11 // pred_fallthru
          _
        // Predicated region
        $region29: #{tpu_custom_call.1} parent=11 // pred_check
          %p270 = pneg %p168
        $region30: #{tpu_custom_call.1} parent=11 // pred_check_branch
          %272 = sbr.rel (%p270) target = $region32
        $region31: #{tpu_custom_call.1} parent=11 // pred_region
          _
        $region32: #{tpu_custom_call.1} parent=11 // pred_fallthru
          _
        // Predicated region
        $region33: #{tpu_custom_call.1} parent=11 // pred_check
          %p273 = pneg %p189
        $region34: #{tpu_custom_call.1} parent=11 // pred_check_branch
          %275 = sbr.rel (%p273) target = $region36
        $region35: #{tpu_custom_call.1} parent=11 // pred_region
          _
        $region36: #{tpu_custom_call.1} parent=11 // pred_fallthru
          _
        // Predicated region
        $region37: #{tpu_custom_call.1} parent=11 // pred_check
          %p276 = pneg %p210
        $region38: #{tpu_custom_call.1} parent=11 // pred_check_branch
          %278 = sbr.rel (%p276) target = $region40
        $region39: #{tpu_custom_call.1} parent=11 // pred_region
          _
        $region40: #{tpu_custom_call.1} parent=11 // pred_fallthru
          _
      $region12: #{tpu_custom_call.1} parent=5 // pred_fallthru
        _
      %p279 = scmp.lt.s32.totalorder %s20, 2
      // Predicated region
      $region41: #{tpu_custom_call.1} parent=5 // pred_check
        %p280 = pneg %p279
      $region42: #{tpu_custom_call.1} parent=5 // pred_check_branch
        %282 = sbr.rel (%p280) target = $region44
      $region43: #{tpu_custom_call.1} parent=5 // pred_region
        // Predicated region
        $region45: #{tpu_custom_call.1} parent=43 // pred_check
          %p283 = pneg %p73
        $region46: #{tpu_custom_call.1} parent=43 // pred_check_branch
          %285 = sbr.rel (%p283) target = $region48
        $region47: #{tpu_custom_call.1} parent=43 // pred_region
          %s286 = sand.u32 %s63, 1
          %s287 = scalar_lea.sflag [#allocation5], %s286
          %s288 = sand.u32 %s63, 1
          %s289 = smul.addr %s288, 44
          %s290 = scalar_lea.vmem [#allocation4], %s289
          %292 = vsyncadd %s287, 0
          %s293 = smul.addr %s27, 11
          %s294 = smul.addr %s293, 4
          %s295 = scalar_lea.hbm %s1, %s294
          %s297 = sshll.u32 %s295, 4
          %s298 = int_to_ptr.hbm [resolvable:$true] %s297
          %s299 = sshll.u32 %s290, 4
          %s300 = int_to_ptr.vmem [resolvable:$true] %s299
          %302 = dma.hbm_to_vmem [thread:$0]  %s298, 704, %s300, %s287
        $region48: #{tpu_custom_call.1} parent=43 // pred_fallthru
          _
      $region44: #{tpu_custom_call.1} parent=5 // pred_fallthru
        _
      %p303 = scmp.le.s32.totalorder 1, %s20
      %p304 = scmp.lt.s32.totalorder %s20, 3
      %p305 = pnand %p303, %p304
      %p306 = pneg %p305
      // Predicated region
      $region49: #{tpu_custom_call.1} parent=5 // pred_check
        _
      $region50: #{tpu_custom_call.1} parent=5 // pred_check_branch
        %308 = sbr.rel (%p305) target = $region52
      $region51: #{tpu_custom_call.1} parent=5 // pred_region
        %s309 = ssub.s32 %s20, 1
        %s310 = sand.u32 %s66, 1
        %s311 = scalar_lea.sflag [#allocation5], %s310
        %s312 = sand.u32 %s66, 1
        %s313 = smul.addr %s312, 44
        %s314 = scalar_lea.vmem [#allocation4], %s313
        // Predicated region
        $region53: #{tpu_custom_call.1} parent=51 // pred_check
          %p315 = pneg %p79
        $region54: #{tpu_custom_call.1} parent=51 // pred_check_branch
          %317 = sbr.rel (%p315) target = $region56
        $region55: #{tpu_custom_call.1} parent=51 // pred_region
          %319 = dma.done %s311, 704
        $region56: #{tpu_custom_call.1} parent=51 // pred_fallthru
          _
        %p320 = pneg %p53
        %p321 = pneg %p50
        %s322 = sand.u32 %s66, 1
        %s323 = scalar_lea.sflag [#allocation5], %s322
        %s324 = sand.u32 %s66, 1
        %s325 = smul.addr %s324, 44
        %s326 = scalar_lea.vmem [#allocation4], %s325
        %p327 = pneg %p79
        %p328 = pneg %p76
        %p329 = pneg %p100
        %p330 = pneg %p97
        %p331 = pneg %p121
        %p332 = pneg %p118
        %p333 = scmp.lt.s32.totalorder %s30, 0
        %s334 = scalar_select %p333, %s30, 0
        %s335 = smul.addr %s334, 2
        %s336 = smul.addr %s335, 4
        %s337 = scalar_lea.vmem %s4, %s336
        %p338 = pneg %p147
        %p339 = pneg %p144
        %p340 = pneg %p168
        %p341 = pneg %p165
        %p342 = pneg %p189
        %p343 = pneg %p186
        %p344 = pneg %p210
        %p345 = pneg %p207
        %p346 = pneg %p238
        %p347 = pneg %p235
        %s348 = sand.u32 %s225, 1
        %s349 = scalar_lea.sflag [#allocation6], %s348
        %s350 = sand.u32 %s225, 1
        %s351 = smul.addr %s350, 32
        %s352 = scalar_lea.vmem [#allocation7], %s351
        %p353 = scmp.lt.s32.totalorder %s30, 0
        %s354 = scalar_select %p353, %s30, 0
        %s355 = smul.addr %s354, 2
        %s356 = smul.addr %s355, 4
        %s357 = scalar_lea.vmem %s4, %s356
        %p359 = scmp.eq.s32.totalorder %s30, 0
        // Predicated region
        $region57: #{tpu_custom_call.1} parent=51 // pred_check
          %p360 = pneg %p359
        $region58: #{tpu_custom_call.1} parent=51 // pred_check_branch
          %362 = sbr.rel (%p360) target = $region60
        $region59: #{tpu_custom_call.1} parent=51 // pred_region
          %v363 = vld [vmem:[%s314] sm:$0xff]
          %v364 = vld [vmem:[%s314 + $0x8] sm:$0xff]
          %v365 = vld [vmem:[%s314 + $0x10] sm:$0xff]
          %v366 = vld [vmem:[%s314 + $0x18] sm:$0xff]
          %v367 = vld [vmem:[%s314 + $0x20] sm:$0xf]
          %373 = vrot.lane.b32.xlu0 %v363, 39
          %v374 = vpop.permute.xlu0 %373
          %375 = vrot.lane.b32.xlu0 %v364, 39
          %v376 = vpop.permute.xlu0 %375
          %377 = vrot.lane.b32.xlu0 %v365, 39
          %v378 = vpop.permute.xlu0 %377
          %379 = vrot.lane.b32.xlu0 %v366, 39
          %v380 = vpop.permute.xlu0 %379
          %381 = vrot.lane.b32.xlu0 %v367, 39
          %v382 = vpop.permute.xlu0 %381
          %v383 = vrot.slane %v374, 4
          %v384 = vrot.slane %v376, 4
          %v385 = vrot.slane %v378, 4
          %v386 = vrot.slane %v380, 4
          %v387 = vrot.slane %v382, 4
          %vm388 = vcmask 1043456
          %v389 = vsel %vm388, %v383, %v384
          %vm390 = vcmask 318464
          %v391 = vsel %vm390, %v374, %v389
          %v392 = vsel %vm388, %v384, %v385
          %v393 = vsel %vm390, %v376, %v392
          %v394 = vsel %vm388, %v385, %v386
          %v395 = vsel %vm390, %v378, %v394
          %v396 = vsel %vm388, %v386, %v387
          %v397 = vsel %vm390, %v380, %v396
          %402 = vst [vmem:[#allocation3] sm:$0xff] %v391
          %403 = vst [vmem:[#allocation3 + $0x8] sm:$0xff] %v393
          %404 = vst [vmem:[#allocation3 + $0x10] sm:$0xff] %v395
          %405 = vst [vmem:[#allocation3 + $0x18] sm:$0xff] %v397
          %v406 = vld [vmem:[%s314] sm:$0xff]
          %v407 = vld [vmem:[%s314 + $0x8] sm:$0xff]
          %v408 = vld [vmem:[%s314 + $0x10] sm:$0xff]
          %v409 = vld [vmem:[%s314 + $0x18] sm:$0xff]
          %v410 = vld [vmem:[%s314 + $0x20] sm:$0xf]
          %416 = vrot.lane.b32.xlu0 %v406, 38
          %v417 = vpop.permute.xlu0 %416
          %418 = vrot.lane.b32.xlu0 %v407, 38
          %v419 = vpop.permute.xlu0 %418
          %420 = vrot.lane.b32.xlu0 %v408, 38
          %v421 = vpop.permute.xlu0 %420
          %422 = vrot.lane.b32.xlu0 %v409, 38
          %v423 = vpop.permute.xlu0 %422
          %424 = vrot.lane.b32.xlu0 %v410, 38
          %v425 = vpop.permute.xlu0 %424
          %v426 = vrot.slane %v417, 4
          %v427 = vrot.slane %v419, 4
          %v428 = vrot.slane %v421, 4
          %v429 = vrot.slane %v423, 4
          %v430 = vrot.slane %v425, 4
          %v431 = vsel %vm388, %v426, %v427
          %vm432 = vcmask 310272
          %v433 = vsel %vm432, %v417, %v431
          %v434 = vsel %vm388, %v427, %v428
          %v435 = vsel %vm432, %v419, %v434
          %v436 = vsel %vm388, %v428, %v429
          %v437 = vsel %vm432, %v421, %v436
          %v438 = vsel %vm388, %v429, %v430
          %v439 = vsel %vm432, %v423, %v438
          %444 = vst [vmem:[#allocation3 + $0x20] sm:$0xff] %v433
          %445 = vst [vmem:[#allocation3 + $0x28] sm:$0xff] %v435
          %446 = vst [vmem:[#allocation3 + $0x30] sm:$0xff] %v437
          %447 = vst [vmem:[#allocation3 + $0x38] sm:$0xff] %v439
          %v448 = vld [vmem:[%s314] sm:$0xff]
          %v449 = vld [vmem:[%s314 + $0x8] sm:$0xff]
          %v450 = vld [vmem:[%s314 + $0x10] sm:$0xff]
          %v451 = vld [vmem:[%s314 + $0x18] sm:$0xff]
          %v452 = vld [vmem:[%s314 + $0x20] sm:$0xf]
          %458 = vrot.lane.b32.xlu0 %v448, 37
          %v459 = vpop.permute.xlu0 %458
          %460 = vrot.lane.b32.xlu0 %v449, 37
          %v461 = vpop.permute.xlu0 %460
          %462 = vrot.lane.b32.xlu0 %v450, 37
          %v463 = vpop.permute.xlu0 %462
          %464 = vrot.lane.b32.xlu0 %v451, 37
          %v465 = vpop.permute.xlu0 %464
          %466 = vrot.lane.b32.xlu0 %v452, 37
          %v467 = vpop.permute.xlu0 %466
          %v468 = vrot.slane %v459, 4
          %v469 = vrot.slane %v461, 4
          %v470 = vrot.slane %v463, 4
          %v471 = vrot.slane %v465, 4
          %v472 = vrot.slane %v467, 4
          %v473 = vsel %vm388, %v468, %v469
          %vm474 = vcmask 302080
          %v475 = vsel %vm474, %v459, %v473
          %v476 = vsel %vm388, %v469, %v470
          %v477 = vsel %vm474, %v461, %v476
          %v478 = vsel %vm388, %v470, %v471
          %v479 = vsel %vm474, %v463, %v478
          %v480 = vsel %vm388, %v471, %v472
          %v481 = vsel %vm474, %v465, %v480
          %486 = vst [vmem:[#allocation3 + $0x40] sm:$0xff] %v475
          %487 = vst [vmem:[#allocation3 + $0x48] sm:$0xff] %v477
          %488 = vst [vmem:[#allocation3 + $0x50] sm:$0xff] %v479
          %489 = vst [vmem:[#allocation3 + $0x58] sm:$0xff] %v481
          %v490 = vld [vmem:[%s314] sm:$0xff]
          %v491 = vld [vmem:[%s314 + $0x8] sm:$0xff]
          %v492 = vld [vmem:[%s314 + $0x10] sm:$0xff]
          %v493 = vld [vmem:[%s314 + $0x18] sm:$0xff]
          %v494 = vld [vmem:[%s314 + $0x20] sm:$0xf]
          %500 = vrot.lane.b32.xlu0 %v490, 29
          %v501 = vpop.permute.xlu0 %500
          %502 = vrot.lane.b32.xlu0 %v491, 29
          %v503 = vpop.permute.xlu0 %502
          %504 = vrot.lane.b32.xlu0 %v492, 29
          %v505 = vpop.permute.xlu0 %504
          %506 = vrot.lane.b32.xlu0 %v493, 29
          %v507 = vpop.permute.xlu0 %506
          %508 = vrot.lane.b32.xlu0 %v494, 29
          %v509 = vpop.permute.xlu0 %508
          %v510 = vrot.slane %v501, 4
          %v511 = vrot.slane %v503, 4
          %v512 = vrot.slane %v505, 4
          %v513 = vrot.slane %v507, 4
          %v514 = vrot.slane %v509, 4
          %v515 = vsel %vm388, %v510, %v511
          %vm516 = vcmask 236544
          %v517 = vsel %vm516, %v501, %v515
          %v518 = vsel %vm388, %v511, %v512
          %v519 = vsel %vm516, %v503, %v518
          %v520 = vsel %vm388, %v512, %v513
          %v521 = vsel %vm516, %v505, %v520
          %v522 = vsel %vm388, %v513, %v514
          %v523 = vsel %vm516, %v507, %v522
          %528 = vst [vmem:[#allocation3 + $0x60] sm:$0xff] %v517
          %529 = vst [vmem:[#allocation3 + $0x68] sm:$0xff] %v519
          %530 = vst [vmem:[#allocation3 + $0x70] sm:$0xff] %v521
          %531 = vst [vmem:[#allocation3 + $0x78] sm:$0xff] %v523
          %v532 = vld [vmem:[%s314] sm:$0xff]
          %v533 = vld [vmem:[%s314 + $0x8] sm:$0xff]
          %v534 = vld [vmem:[%s314 + $0x10] sm:$0xff]
          %v535 = vld [vmem:[%s314 + $0x18] sm:$0xff]
          %v536 = vld [vmem:[%s314 + $0x20] sm:$0xf]
          %542 = vrot.lane.b32.xlu0 %v532, 28
          %v543 = vpop.permute.xlu0 %542
          %544 = vrot.lane.b32.xlu0 %v533, 28
          %v545 = vpop.permute.xlu0 %544
          %546 = vrot.lane.b32.xlu0 %v534, 28
          %v547 = vpop.permute.xlu0 %546
          %548 = vrot.lane.b32.xlu0 %v535, 28
          %v549 = vpop.permute.xlu0 %548
          %550 = vrot.lane.b32.xlu0 %v536, 28
          %v551 = vpop.permute.xlu0 %550
          %v552 = vrot.slane %v543, 4
          %v553 = vrot.slane %v545, 4
          %v554 = vrot.slane %v547, 4
          %v555 = vrot.slane %v549, 4
          %v556 = vrot.slane %v551, 4
          %v557 = vsel %vm388, %v552, %v553
          %vm558 = vcmask 228352
          %v559 = vsel %vm558, %v543, %v557
          %v560 = vsel %vm388, %v553, %v554
          %v561 = vsel %vm558, %v545, %v560
          %v562 = vsel %vm388, %v554, %v555
          %v563 = vsel %vm558, %v547, %v562
          %v564 = vsel %vm388, %v555, %v556
          %v565 = vsel %vm558, %v549, %v564
          %570 = vst [vmem:[#allocation3 + $0x80] sm:$0xff] %v559
          %571 = vst [vmem:[#allocation3 + $0x88] sm:$0xff] %v561
          %572 = vst [vmem:[#allocation3 + $0x90] sm:$0xff] %v563
          %573 = vst [vmem:[#allocation3 + $0x98] sm:$0xff] %v565
          %v574 = vld [vmem:[%s314] sm:$0xff]
          %v575 = vld [vmem:[%s314 + $0x8] sm:$0xff]
          %v576 = vld [vmem:[%s314 + $0x10] sm:$0xff]
          %v577 = vld [vmem:[%s314 + $0x18] sm:$0xff]
          %v578 = vld [vmem:[%s314 + $0x20] sm:$0xf]
          %584 = vrot.lane.b32.xlu0 %v574, 27
          %v585 = vpop.permute.xlu0 %584
          %586 = vrot.lane.b32.xlu0 %v575, 27
          %v587 = vpop.permute.xlu0 %586
          %588 = vrot.lane.b32.xlu0 %v576, 27
          %v589 = vpop.permute.xlu0 %588
          %590 = vrot.lane.b32.xlu0 %v577, 27
          %v591 = vpop.permute.xlu0 %590
          %592 = vrot.lane.b32.xlu0 %v578, 27
          %v593 = vpop.permute.xlu0 %592
          %v594 = vrot.slane %v585, 4
          %v595 = vrot.slane %v587, 4
          %v596 = vrot.slane %v589, 4
          %v597 = vrot.slane %v591, 4
          %v598 = vrot.slane %v593, 4
          %v599 = vsel %vm388, %v594, %v595
          %vm600 = vcmask 220160
          %v601 = vsel %vm600, %v585, %v599
          %v602 = vsel %vm388, %v595, %v596
          %v603 = vsel %vm600, %v587, %v602
          %v604 = vsel %vm388, %v596, %v597
          %v605 = vsel %vm600, %v589, %v604
          %v606 = vsel %vm388, %v597, %v598
          %v607 = vsel %vm600, %v591, %v606
          %612 = vst [vmem:[#allocation3 + $0xa0] sm:$0xff] %v601
          %613 = vst [vmem:[#allocation3 + $0xa8] sm:$0xff] %v603
          %614 = vst [vmem:[#allocation3 + $0xb0] sm:$0xff] %v605
          %615 = vst [vmem:[#allocation3 + $0xb8] sm:$0xff] %v607
          %v616 = vld [vmem:[%s314] sm:$0xff]
          %v617 = vld [vmem:[%s314 + $0x8] sm:$0xff]
          %v618 = vld [vmem:[%s314 + $0x10] sm:$0xff]
          %v619 = vld [vmem:[%s314 + $0x18] sm:$0xff]
          %v620 = vld [vmem:[%s314 + $0x20] sm:$0xf]
          %626 = vrot.lane.b32.xlu0 %v616, 19
          %v627 = vpop.permute.xlu0 %626
          %628 = vrot.lane.b32.xlu0 %v617, 19
          %v629 = vpop.permute.xlu0 %628
          %630 = vrot.lane.b32.xlu0 %v618, 19
          %v631 = vpop.permute.xlu0 %630
          %632 = vrot.lane.b32.xlu0 %v619, 19
          %v633 = vpop.permute.xlu0 %632
          %634 = vrot.lane.b32.xlu0 %v620, 19
          %v635 = vpop.permute.xlu0 %634
          %v636 = vrot.slane %v627, 4
          %v637 = vrot.slane %v629, 4
          %v638 = vrot.slane %v631, 4
          %v639 = vrot.slane %v633, 4
          %v640 = vrot.slane %v635, 4
          %v641 = vsel %vm388, %v636, %v637
          %vm642 = vcmask 154624
          %v643 = vsel %vm642, %v627, %v641
          %v644 = vsel %vm388, %v637, %v638
          %v645 = vsel %vm642, %v629, %v644
          %v646 = vsel %vm388, %v638, %v639
          %v647 = vsel %vm642, %v631, %v646
          %v648 = vsel %vm388, %v639, %v640
          %v649 = vsel %vm642, %v633, %v648
          %654 = vst [vmem:[#allocation3 + $0xc0] sm:$0xff] %v643
          %655 = vst [vmem:[#allocation3 + $0xc8] sm:$0xff] %v645
          %656 = vst [vmem:[#allocation3 + $0xd0] sm:$0xff] %v647
          %657 = vst [vmem:[#allocation3 + $0xd8] sm:$0xff] %v649
          %v658 = vld [vmem:[%s314] sm:$0xff]
          %v659 = vld [vmem:[%s314 + $0x8] sm:$0xff]
          %v660 = vld [vmem:[%s314 + $0x10] sm:$0xff]
          %v661 = vld [vmem:[%s314 + $0x18] sm:$0xff]
          %v662 = vld [vmem:[%s314 + $0x20] sm:$0xf]
          %668 = vrot.lane.b32.xlu0 %v658, 18
          %v669 = vpop.permute.xlu0 %668
          %670 = vrot.lane.b32.xlu0 %v659, 18
          %v671 = vpop.permute.xlu0 %670
          %672 = vrot.lane.b32.xlu0 %v660, 18
          %v673 = vpop.permute.xlu0 %672
          %674 = vrot.lane.b32.xlu0 %v661, 18
          %v675 = vpop.permute.xlu0 %674
          %676 = vrot.lane.b32.xlu0 %v662, 18
          %v677 = vpop.permute.xlu0 %676
          %v678 = vrot.slane %v669, 4
          %v679 = vrot.slane %v671, 4
          %v680 = vrot.slane %v673, 4
          %v681 = vrot.slane %v675, 4
          %v682 = vrot.slane %v677, 4
          %v683 = vsel %vm388, %v678, %v679
          %vm684 = vcmask 146432
          %v685 = vsel %vm684, %v669, %v683
          %v686 = vsel %vm388, %v679, %v680
          %v687 = vsel %vm684, %v671, %v686
          %v688 = vsel %vm388, %v680, %v681
          %v689 = vsel %vm684, %v673, %v688
          %v690 = vsel %vm388, %v681, %v682
          %v691 = vsel %vm684, %v675, %v690
          %696 = vst [vmem:[#allocation3 + $0xe0] sm:$0xff] %v685
          %697 = vst [vmem:[#allocation3 + $0xe8] sm:$0xff] %v687
          %698 = vst [vmem:[#allocation3 + $0xf0] sm:$0xff] %v689
          %699 = vst [vmem:[#allocation3 + $0xf8] sm:$0xff] %v691
          %v700 = vld [vmem:[%s314] sm:$0xff]
          %v701 = vld [vmem:[%s314 + $0x8] sm:$0xff]
          %v702 = vld [vmem:[%s314 + $0x10] sm:$0xff]
          %v703 = vld [vmem:[%s314 + $0x18] sm:$0xff]
          %v704 = vld [vmem:[%s314 + $0x20] sm:$0xf]
          %710 = vrot.lane.b32.xlu0 %v700, 17
          %v711 = vpop.permute.xlu0 %710
          %712 = vrot.lane.b32.xlu0 %v701, 17
          %v713 = vpop.permute.xlu0 %712
          %714 = vrot.lane.b32.xlu0 %v702, 17
          %v715 = vpop.permute.xlu0 %714
          %716 = vrot.lane.b32.xlu0 %v703, 17
          %v717 = vpop.permute.xlu0 %716
          %718 = vrot.lane.b32.xlu0 %v704, 17
          %v719 = vpop.permute.xlu0 %718
          %v720 = vrot.slane %v711, 4
          %v721 = vrot.slane %v713, 4
          %v722 = vrot.slane %v715, 4
          %v723 = vrot.slane %v717, 4
          %v724 = vrot.slane %v719, 4
          %v725 = vsel %vm388, %v720, %v721
          %vm726 = vcmask 138240
          %v727 = vsel %vm726, %v711, %v725
          %v728 = vsel %vm388, %v721, %v722
          %v729 = vsel %vm726, %v713, %v728
          %v730 = vsel %vm388, %v722, %v723
          %v731 = vsel %vm726, %v715, %v730
          %v732 = vsel %vm388, %v723, %v724
          %v733 = vsel %vm726, %v717, %v732
          %738 = vst [vmem:[#allocation3 + $0x100] sm:$0xff] %v727
          %739 = vst [vmem:[#allocation3 + $0x108] sm:$0xff] %v729
          %740 = vst [vmem:[#allocation3 + $0x110] sm:$0xff] %v731
          %741 = vst [vmem:[#allocation3 + $0x118] sm:$0xff] %v733
          %v742 = vld [vmem:[%s314 + $0x4] sm:$0xff]
          %v743 = vld [vmem:[%s314 + $0xc] sm:$0xff]
          %v744 = vld [vmem:[%s314 + $0x14] sm:$0xff]
          %v745 = vld [vmem:[%s314 + $0x1c] sm:$0xff]
          %v746 = vld [vmem:[%s314 + $0x24] sm:$0xf]
          %752 = vrot.lane.b32.xlu0 %v742, 67
          %v753 = vpop.permute.xlu0 %752
          %754 = vrot.lane.b32.xlu0 %v743, 67
          %v755 = vpop.permute.xlu0 %754
          %756 = vrot.lane.b32.xlu0 %v744, 67
          %v757 = vpop.permute.xlu0 %756
          %758 = vrot.lane.b32.xlu0 %v745, 67
          %v759 = vpop.permute.xlu0 %758
          %760 = vrot.lane.b32.xlu0 %v746, 67
          %v761 = vpop.permute.xlu0 %760
          %v762 = vrot.slane %v753, 4
          %v763 = vrot.slane %v755, 4
          %v764 = vrot.slane %v757, 4
          %v765 = vrot.slane %v759, 4
          %v766 = vrot.slane %v761, 4
          %v767 = vsel %vm388, %v762, %v763
          %vm768 = vcmask 547840
          %v769 = vsel %vm768, %v753, %v767
          %v770 = vsel %vm388, %v763, %v764
          %v771 = vsel %vm768, %v755, %v770
          %v772 = vsel %vm388, %v764, %v765
          %v773 = vsel %vm768, %v757, %v772
          %v774 = vsel %vm388, %v765, %v766
          %v775 = vsel %vm768, %v759, %v774
          %780 = vst [vmem:[#allocation3 + $0x120] sm:$0xff] %v769
          %781 = vst [vmem:[#allocation3 + $0x128] sm:$0xff] %v771
          %782 = vst [vmem:[#allocation3 + $0x130] sm:$0xff] %v773
          %783 = vst [vmem:[#allocation3 + $0x138] sm:$0xff] %v775
          %v784 = vld [vmem:[%s314 + $0x4] sm:$0xff]
          %v785 = vld [vmem:[%s314 + $0xc] sm:$0xff]
          %v786 = vld [vmem:[%s314 + $0x14] sm:$0xff]
          %v787 = vld [vmem:[%s314 + $0x1c] sm:$0xff]
          %v788 = vld [vmem:[%s314 + $0x24] sm:$0xf]
          %794 = vrot.lane.b32.xlu0 %v784, 66
          %v795 = vpop.permute.xlu0 %794
          %796 = vrot.lane.b32.xlu0 %v785, 66
          %v797 = vpop.permute.xlu0 %796
          %798 = vrot.lane.b32.xlu0 %v786, 66
          %v799 = vpop.permute.xlu0 %798
          %800 = vrot.lane.b32.xlu0 %v787, 66
          %v801 = vpop.permute.xlu0 %800
          %802 = vrot.lane.b32.xlu0 %v788, 66
          %v803 = vpop.permute.xlu0 %802
          %v804 = vrot.slane %v795, 4
          %v805 = vrot.slane %v797, 4
          %v806 = vrot.slane %v799, 4
          %v807 = vrot.slane %v801, 4
          %v808 = vrot.slane %v803, 4
          %v809 = vsel %vm388, %v804, %v805
          %vm810 = vcmask 539648
          %v811 = vsel %vm810, %v795, %v809
          %v812 = vsel %vm388, %v805, %v806
          %v813 = vsel %vm810, %v797, %v812
          %v814 = vsel %vm388, %v806, %v807
          %v815 = vsel %vm810, %v799, %v814
          %v816 = vsel %vm388, %v807, %v808
          %v817 = vsel %vm810, %v801, %v816
          %822 = vst [vmem:[#allocation3 + $0x140] sm:$0xff] %v811
          %823 = vst [vmem:[#allocation3 + $0x148] sm:$0xff] %v813
          %824 = vst [vmem:[#allocation3 + $0x150] sm:$0xff] %v815
          %825 = vst [vmem:[#allocation3 + $0x158] sm:$0xff] %v817
          %v826 = vld [vmem:[%s314 + $0x4] sm:$0xff]
          %v827 = vld [vmem:[%s314 + $0xc] sm:$0xff]
          %v828 = vld [vmem:[%s314 + $0x14] sm:$0xff]
          %v829 = vld [vmem:[%s314 + $0x1c] sm:$0xff]
          %v830 = vld [vmem:[%s314 + $0x24] sm:$0xf]
          %836 = vrot.lane.b32.xlu0 %v826, 65
          %v837 = vpop.permute.xlu0 %836
          %838 = vrot.lane.b32.xlu0 %v827, 65
          %v839 = vpop.permute.xlu0 %838
          %840 = vrot.lane.b32.xlu0 %v828, 65
          %v841 = vpop.permute.xlu0 %840
          %842 = vrot.lane.b32.xlu0 %v829, 65
          %v843 = vpop.permute.xlu0 %842
          %844 = vrot.lane.b32.xlu0 %v830, 65
          %v845 = vpop.permute.xlu0 %844
          %v846 = vrot.slane %v837, 4
          %v847 = vrot.slane %v839, 4
          %v848 = vrot.slane %v841, 4
          %v849 = vrot.slane %v843, 4
          %v850 = vrot.slane %v845, 4
          %v851 = vsel %vm388, %v846, %v847
          %vm852 = vcmask 531456
          %v853 = vsel %vm852, %v837, %v851
          %v854 = vsel %vm388, %v847, %v848
          %v855 = vsel %vm852, %v839, %v854
          %v856 = vsel %vm388, %v848, %v849
          %v857 = vsel %vm852, %v841, %v856
          %v858 = vsel %vm388, %v849, %v850
          %v859 = vsel %vm852, %v843, %v858
          %864 = vst [vmem:[#allocation3 + $0x160] sm:$0xff] %v853
          %865 = vst [vmem:[#allocation3 + $0x168] sm:$0xff] %v855
          %866 = vst [vmem:[#allocation3 + $0x170] sm:$0xff] %v857
          %867 = vst [vmem:[#allocation3 + $0x178] sm:$0xff] %v859
          %v868 = vld [vmem:[%s314 + $0x4] sm:$0xff]
          %v869 = vld [vmem:[%s314 + $0xc] sm:$0xff]
          %v870 = vld [vmem:[%s314 + $0x14] sm:$0xff]
          %v871 = vld [vmem:[%s314 + $0x1c] sm:$0xff]
          %v872 = vld [vmem:[%s314 + $0x24] sm:$0xf]
          %878 = vrot.lane.b32.xlu0 %v868, 57
          %v879 = vpop.permute.xlu0 %878
          %880 = vrot.lane.b32.xlu0 %v869, 57
          %v881 = vpop.permute.xlu0 %880
          %882 = vrot.lane.b32.xlu0 %v870, 57
          %v883 = vpop.permute.xlu0 %882
          %884 = vrot.lane.b32.xlu0 %v871, 57
          %v885 = vpop.permute.xlu0 %884
          %886 = vrot.lane.b32.xlu0 %v872, 57
          %v887 = vpop.permute.xlu0 %886
          %v888 = vrot.slane %v879, 4
          %v889 = vrot.slane %v881, 4
          %v890 = vrot.slane %v883, 4
          %v891 = vrot.slane %v885, 4
          %v892 = vrot.slane %v887, 4
          %v893 = vsel %vm388, %v888, %v889
          %vm894 = vcmask 465920
          %v895 = vsel %vm894, %v879, %v893
          %v896 = vsel %vm388, %v889, %v890
          %v897 = vsel %vm894, %v881, %v896
          %v898 = vsel %vm388, %v890, %v891
          %v899 = vsel %vm894, %v883, %v898
          %v900 = vsel %vm388, %v891, %v892
          %v901 = vsel %vm894, %v885, %v900
          %906 = vst [vmem:[#allocation3 + $0x180] sm:$0xff] %v895
          %907 = vst [vmem:[#allocation3 + $0x188] sm:$0xff] %v897
          %908 = vst [vmem:[#allocation3 + $0x190] sm:$0xff] %v899
          %909 = vst [vmem:[#allocation3 + $0x198] sm:$0xff] %v901
          %v910 = vld [vmem:[%s314 + $0x4] sm:$0xff]
          %v911 = vld [vmem:[%s314 + $0xc] sm:$0xff]
          %v912 = vld [vmem:[%s314 + $0x14] sm:$0xff]
          %v913 = vld [vmem:[%s314 + $0x1c] sm:$0xff]
          %v914 = vld [vmem:[%s314 + $0x24] sm:$0xf]
          %920 = vrot.lane.b32.xlu0 %v910, 56
          %v921 = vpop.permute.xlu0 %920
          %922 = vrot.lane.b32.xlu0 %v911, 56
          %v923 = vpop.permute.xlu0 %922
          %924 = vrot.lane.b32.xlu0 %v912, 56
          %v925 = vpop.permute.xlu0 %924
          %926 = vrot.lane.b32.xlu0 %v913, 56
          %v927 = vpop.permute.xlu0 %926
          %928 = vrot.lane.b32.xlu0 %v914, 56
          %v929 = vpop.permute.xlu0 %928
          %v930 = vrot.slane %v921, 4
          %v931 = vrot.slane %v923, 4
          %v932 = vrot.slane %v925, 4
          %v933 = vrot.slane %v927, 4
          %v934 = vrot.slane %v929, 4
          %v935 = vsel %vm388, %v930, %v931
          %vm936 = vcmask 457728
          %v937 = vsel %vm936, %v921, %v935
          %v938 = vsel %vm388, %v931, %v932
          %v939 = vsel %vm936, %v923, %v938
          %v940 = vsel %vm388, %v932, %v933
          %v941 = vsel %vm936, %v925, %v940
          %v942 = vsel %vm388, %v933, %v934
          %v943 = vsel %vm936, %v927, %v942
          %948 = vst [vmem:[#allocation3 + $0x1a0] sm:$0xff] %v937
          %949 = vst [vmem:[#allocation3 + $0x1a8] sm:$0xff] %v939
          %950 = vst [vmem:[#allocation3 + $0x1b0] sm:$0xff] %v941
          %951 = vst [vmem:[#allocation3 + $0x1b8] sm:$0xff] %v943
          %v952 = vld [vmem:[%s314 + $0x4] sm:$0xff]
          %v953 = vld [vmem:[%s314 + $0xc] sm:$0xff]
          %v954 = vld [vmem:[%s314 + $0x14] sm:$0xff]
          %v955 = vld [vmem:[%s314 + $0x1c] sm:$0xff]
          %v956 = vld [vmem:[%s314 + $0x24] sm:$0xf]
          %962 = vrot.lane.b32.xlu0 %v952, 55
          %v963 = vpop.permute.xlu0 %962
          %964 = vrot.lane.b32.xlu0 %v953, 55
          %v965 = vpop.permute.xlu0 %964
          %966 = vrot.lane.b32.xlu0 %v954, 55
          %v967 = vpop.permute.xlu0 %966
          %968 = vrot.lane.b32.xlu0 %v955, 55
          %v969 = vpop.permute.xlu0 %968
          %970 = vrot.lane.b32.xlu0 %v956, 55
          %v971 = vpop.permute.xlu0 %970
          %v972 = vrot.slane %v963, 4
          %v973 = vrot.slane %v965, 4
          %v974 = vrot.slane %v967, 4
          %v975 = vrot.slane %v969, 4
          %v976 = vrot.slane %v971, 4
          %v977 = vsel %vm388, %v972, %v973
          %vm978 = vcmask 449536
          %v979 = vsel %vm978, %v963, %v977
          %v980 = vsel %vm388, %v973, %v974
          %v981 = vsel %vm978, %v965, %v980
          %v982 = vsel %vm388, %v974, %v975
          %v983 = vsel %vm978, %v967, %v982
          %v984 = vsel %vm388, %v975, %v976
          %v985 = vsel %vm978, %v969, %v984
          %990 = vst [vmem:[#allocation3 + $0x1c0] sm:$0xff] %v979
          %991 = vst [vmem:[#allocation3 + $0x1c8] sm:$0xff] %v981
          %992 = vst [vmem:[#allocation3 + $0x1d0] sm:$0xff] %v983
          %993 = vst [vmem:[#allocation3 + $0x1d8] sm:$0xff] %v985
          %v994 = vld [vmem:[%s314 + $0x4] sm:$0xff]
          %v995 = vld [vmem:[%s314 + $0xc] sm:$0xff]
          %v996 = vld [vmem:[%s314 + $0x14] sm:$0xff]
          %v997 = vld [vmem:[%s314 + $0x1c] sm:$0xff]
          %v998 = vld [vmem:[%s314 + $0x24] sm:$0xf]
          %1004 = vrot.lane.b32.xlu0 %v994, 47
          %v1005 = vpop.permute.xlu0 %1004
          %1006 = vrot.lane.b32.xlu0 %v995, 47
          %v1007 = vpop.permute.xlu0 %1006
          %1008 = vrot.lane.b32.xlu0 %v996, 47
          %v1009 = vpop.permute.xlu0 %1008
          %1010 = vrot.lane.b32.xlu0 %v997, 47
          %v1011 = vpop.permute.xlu0 %1010
          %1012 = vrot.lane.b32.xlu0 %v998, 47
          %v1013 = vpop.permute.xlu0 %1012
          %v1014 = vrot.slane %v1005, 4
          %v1015 = vrot.slane %v1007, 4
          %v1016 = vrot.slane %v1009, 4
          %v1017 = vrot.slane %v1011, 4
          %v1018 = vrot.slane %v1013, 4
          %v1019 = vsel %vm388, %v1014, %v1015
          %vm1020 = vcmask 384000
          %v1021 = vsel %vm1020, %v1005, %v1019
          %v1022 = vsel %vm388, %v1015, %v1016
          %v1023 = vsel %vm1020, %v1007, %v1022
          %v1024 = vsel %vm388, %v1016, %v1017
          %v1025 = vsel %vm1020, %v1009, %v1024
          %v1026 = vsel %vm388, %v1017, %v1018
          %v1027 = vsel %vm1020, %v1011, %v1026
          %1032 = vst [vmem:[#allocation3 + $0x1e0] sm:$0xff] %v1021
          %1033 = vst [vmem:[#allocation3 + $0x1e8] sm:$0xff] %v1023
          %1034 = vst [vmem:[#allocation3 + $0x1f0] sm:$0xff] %v1025
          %1035 = vst [vmem:[#allocation3 + $0x1f8] sm:$0xff] %v1027
          %v1036 = vld [vmem:[%s314 + $0x4] sm:$0xff]
          %v1037 = vld [vmem:[%s314 + $0xc] sm:$0xff]
          %v1038 = vld [vmem:[%s314 + $0x14] sm:$0xff]
          %v1039 = vld [vmem:[%s314 + $0x1c] sm:$0xff]
          %v1040 = vld [vmem:[%s314 + $0x24] sm:$0xf]
          %1046 = vrot.lane.b32.xlu0 %v1036, 46
          %v1047 = vpop.permute.xlu0 %1046
          %1048 = vrot.lane.b32.xlu0 %v1037, 46
          %v1049 = vpop.permute.xlu0 %1048
          %1050 = vrot.lane.b32.xlu0 %v1038, 46
          %v1051 = vpop.permute.xlu0 %1050
          %1052 = vrot.lane.b32.xlu0 %v1039, 46
          %v1053 = vpop.permute.xlu0 %1052
          %1054 = vrot.lane.b32.xlu0 %v1040, 46
          %v1055 = vpop.permute.xlu0 %1054
          %v1056 = vrot.slane %v1047, 4
          %v1057 = vrot.slane %v1049, 4
          %v1058 = vrot.slane %v1051, 4
          %v1059 = vrot.slane %v1053, 4
          %v1060 = vrot.slane %v1055, 4
          %v1061 = vsel %vm388, %v1056, %v1057
          %vm1062 = vcmask 375808
          %v1063 = vsel %vm1062, %v1047, %v1061
          %v1064 = vsel %vm388, %v1057, %v1058
          %v1065 = vsel %vm1062, %v1049, %v1064
          %v1066 = vsel %vm388, %v1058, %v1059
          %v1067 = vsel %vm1062, %v1051, %v1066
          %v1068 = vsel %vm388, %v1059, %v1060
          %v1069 = vsel %vm1062, %v1053, %v1068
          %1074 = vst [vmem:[#allocation3 + $0x200] sm:$0xff] %v1063
          %1075 = vst [vmem:[#allocation3 + $0x208] sm:$0xff] %v1065
          %1076 = vst [vmem:[#allocation3 + $0x210] sm:$0xff] %v1067
          %1077 = vst [vmem:[#allocation3 + $0x218] sm:$0xff] %v1069
          %v1078 = vld [vmem:[%s314 + $0x4] sm:$0xff]
          %v1079 = vld [vmem:[%s314 + $0xc] sm:$0xff]
          %v1080 = vld [vmem:[%s314 + $0x14] sm:$0xff]
          %v1081 = vld [vmem:[%s314 + $0x1c] sm:$0xff]
          %v1082 = vld [vmem:[%s314 + $0x24] sm:$0xf]
          %1088 = vrot.lane.b32.xlu0 %v1078, 45
          %v1089 = vpop.permute.xlu0 %1088
          %1090 = vrot.lane.b32.xlu0 %v1079, 45
          %v1091 = vpop.permute.xlu0 %1090
          %1092 = vrot.lane.b32.xlu0 %v1080, 45
          %v1093 = vpop.permute.xlu0 %1092
          %1094 = vrot.lane.b32.xlu0 %v1081, 45
          %v1095 = vpop.permute.xlu0 %1094
          %1096 = vrot.lane.b32.xlu0 %v1082, 45
          %v1097 = vpop.permute.xlu0 %1096
          %v1098 = vrot.slane %v1089, 4
          %v1099 = vrot.slane %v1091, 4
          %v1100 = vrot.slane %v1093, 4
          %v1101 = vrot.slane %v1095, 4
          %v1102 = vrot.slane %v1097, 4
          %v1103 = vsel %vm388, %v1098, %v1099
          %vm1104 = vcmask 367616
          %v1105 = vsel %vm1104, %v1089, %v1103
          %v1106 = vsel %vm388, %v1099, %v1100
          %v1107 = vsel %vm1104, %v1091, %v1106
          %v1108 = vsel %vm388, %v1100, %v1101
          %v1109 = vsel %vm1104, %v1093, %v1108
          %v1110 = vsel %vm388, %v1101, %v1102
          %v1111 = vsel %vm1104, %v1095, %v1110
          %1116 = vst [vmem:[#allocation3 + $0x220] sm:$0xff] %v1105
          %1117 = vst [vmem:[#allocation3 + $0x228] sm:$0xff] %v1107
          %1118 = vst [vmem:[#allocation3 + $0x230] sm:$0xff] %v1109
          %1119 = vst [vmem:[#allocation3 + $0x238] sm:$0xff] %v1111
          %v1120 = vld [vmem:[%s314 + $0x8] sm:$0xff]
          %v1121 = vld [vmem:[%s314 + $0x10] sm:$0xff]
          %v1122 = vld [vmem:[%s314 + $0x18] sm:$0xff]
          %v1123 = vld [vmem:[%s314 + $0x20] sm:$0xff]
          %v1124 = vld [vmem:[%s314 + $0x28] sm:$0xf]
          %1130 = vrot.lane.b32.xlu0 %v1120, 95
          %v1131 = vpop.permute.xlu0 %1130
          %1132 = vrot.lane.b32.xlu0 %v1121, 95
          %v1133 = vpop.permute.xlu0 %1132
          %1134 = vrot.lane.b32.xlu0 %v1122, 95
          %v1135 = vpop.permute.xlu0 %1134
          %1136 = vrot.lane.b32.xlu0 %v1123, 95
          %v1137 = vpop.permute.xlu0 %1136
          %1138 = vrot.lane.b32.xlu0 %v1124, 95
          %v1139 = vpop.permute.xlu0 %1138
          %v1140 = vrot.slane %v1131, 4
          %v1141 = vrot.slane %v1133, 4
          %v1142 = vrot.slane %v1135, 4
          %v1143 = vrot.slane %v1137, 4
          %v1144 = vrot.slane %v1139, 4
          %v1145 = vsel %vm388, %v1140, %v1141
          %vm1146 = vcmask 777216
          %v1147 = vsel %vm1146, %v1131, %v1145
          %v1148 = vsel %vm388, %v1141, %v1142
          %v1149 = vsel %vm1146, %v1133, %v1148
          %v1150 = vsel %vm388, %v1142, %v1143
          %v1151 = vsel %vm1146, %v1135, %v1150
          %v1152 = vsel %vm388, %v1143, %v1144
          %v1153 = vsel %vm1146, %v1137, %v1152
          %1158 = vst [vmem:[#allocation3 + $0x240] sm:$0xff] %v1147
          %1159 = vst [vmem:[#allocation3 + $0x248] sm:$0xff] %v1149
          %1160 = vst [vmem:[#allocation3 + $0x250] sm:$0xff] %v1151
          %1161 = vst [vmem:[#allocation3 + $0x258] sm:$0xff] %v1153
          %v1162 = vld [vmem:[%s314 + $0x8] sm:$0xff]
          %v1163 = vld [vmem:[%s314 + $0x10] sm:$0xff]
          %v1164 = vld [vmem:[%s314 + $0x18] sm:$0xff]
          %v1165 = vld [vmem:[%s314 + $0x20] sm:$0xff]
          %v1166 = vld [vmem:[%s314 + $0x28] sm:$0xf]
          %1172 = vrot.lane.b32.xlu0 %v1162, 94
          %v1173 = vpop.permute.xlu0 %1172
          %1174 = vrot.lane.b32.xlu0 %v1163, 94
          %v1175 = vpop.permute.xlu0 %1174
          %1176 = vrot.lane.b32.xlu0 %v1164, 94
          %v1177 = vpop.permute.xlu0 %1176
          %1178 = vrot.lane.b32.xlu0 %v1165, 94
          %v1179 = vpop.permute.xlu0 %1178
          %1180 = vrot.lane.b32.xlu0 %v1166, 94
          %v1181 = vpop.permute.xlu0 %1180
          %v1182 = vrot.slane %v1173, 4
          %v1183 = vrot.slane %v1175, 4
          %v1184 = vrot.slane %v1177, 4
          %v1185 = vrot.slane %v1179, 4
          %v1186 = vrot.slane %v1181, 4
          %v1187 = vsel %vm388, %v1182, %v1183
          %vm1188 = vcmask 769024
          %v1189 = vsel %vm1188, %v1173, %v1187
          %v1190 = vsel %vm388, %v1183, %v1184
          %v1191 = vsel %vm1188, %v1175, %v1190
          %v1192 = vsel %vm388, %v1184, %v1185
          %v1193 = vsel %vm1188, %v1177, %v1192
          %v1194 = vsel %vm388, %v1185, %v1186
          %v1195 = vsel %vm1188, %v1179, %v1194
          %1200 = vst [vmem:[#allocation3 + $0x260] sm:$0xff] %v1189
          %1201 = vst [vmem:[#allocation3 + $0x268] sm:$0xff] %v1191
          %1202 = vst [vmem:[#allocation3 + $0x270] sm:$0xff] %v1193
          %1203 = vst [vmem:[#allocation3 + $0x278] sm:$0xff] %v1195
          %v1204 = vld [vmem:[%s314 + $0x8] sm:$0xff]
          %v1205 = vld [vmem:[%s314 + $0x10] sm:$0xff]
          %v1206 = vld [vmem:[%s314 + $0x18] sm:$0xff]
          %v1207 = vld [vmem:[%s314 + $0x20] sm:$0xff]
          %v1208 = vld [vmem:[%s314 + $0x28] sm:$0xf]
          %1214 = vrot.lane.b32.xlu0 %v1204, 93
          %v1215 = vpop.permute.xlu0 %1214
          %1216 = vrot.lane.b32.xlu0 %v1205, 93
          %v1217 = vpop.permute.xlu0 %1216
          %1218 = vrot.lane.b32.xlu0 %v1206, 93
          %v1219 = vpop.permute.xlu0 %1218
          %1220 = vrot.lane.b32.xlu0 %v1207, 93
          %v1221 = vpop.permute.xlu0 %1220
          %1222 = vrot.lane.b32.xlu0 %v1208, 93
          %v1223 = vpop.permute.xlu0 %1222
          %v1224 = vrot.slane %v1215, 4
          %v1225 = vrot.slane %v1217, 4
          %v1226 = vrot.slane %v1219, 4
          %v1227 = vrot.slane %v1221, 4
          %v1228 = vrot.slane %v1223, 4
          %v1229 = vsel %vm388, %v1224, %v1225
          %vm1230 = vcmask 760832
          %v1231 = vsel %vm1230, %v1215, %v1229
          %v1232 = vsel %vm388, %v1225, %v1226
          %v1233 = vsel %vm1230, %v1217, %v1232
          %v1234 = vsel %vm388, %v1226, %v1227
          %v1235 = vsel %vm1230, %v1219, %v1234
          %v1236 = vsel %vm388, %v1227, %v1228
          %v1237 = vsel %vm1230, %v1221, %v1236
          %1242 = vst [vmem:[#allocation3 + $0x280] sm:$0xff] %v1231
          %1243 = vst [vmem:[#allocation3 + $0x288] sm:$0xff] %v1233
          %1244 = vst [vmem:[#allocation3 + $0x290] sm:$0xff] %v1235
          %1245 = vst [vmem:[#allocation3 + $0x298] sm:$0xff] %v1237
          %v1246 = vld [vmem:[%s314 + $0x8] sm:$0xff]
          %v1247 = vld [vmem:[%s314 + $0x10] sm:$0xff]
          %v1248 = vld [vmem:[%s314 + $0x18] sm:$0xff]
          %v1249 = vld [vmem:[%s314 + $0x20] sm:$0xff]
          %v1250 = vld [vmem:[%s314 + $0x28] sm:$0xf]
          %1256 = vrot.lane.b32.xlu0 %v1246, 85
          %v1257 = vpop.permute.xlu0 %1256
          %1258 = vrot.lane.b32.xlu0 %v1247, 85
          %v1259 = vpop.permute.xlu0 %1258
          %1260 = vrot.lane.b32.xlu0 %v1248, 85
          %v1261 = vpop.permute.xlu0 %1260
          %1262 = vrot.lane.b32.xlu0 %v1249, 85
          %v1263 = vpop.permute.xlu0 %1262
          %1264 = vrot.lane.b32.xlu0 %v1250, 85
          %v1265 = vpop.permute.xlu0 %1264
          %v1266 = vrot.slane %v1257, 4
          %v1267 = vrot.slane %v1259, 4
          %v1268 = vrot.slane %v1261, 4
          %v1269 = vrot.slane %v1263, 4
          %v1270 = vrot.slane %v1265, 4
          %v1271 = vsel %vm388, %v1266, %v1267
          %vm1272 = vcmask 695296
          %v1273 = vsel %vm1272, %v1257, %v1271
          %v1274 = vsel %vm388, %v1267, %v1268
          %v1275 = vsel %vm1272, %v1259, %v1274
          %v1276 = vsel %vm388, %v1268, %v1269
          %v1277 = vsel %vm1272, %v1261, %v1276
          %v1278 = vsel %vm388, %v1269, %v1270
          %v1279 = vsel %vm1272, %v1263, %v1278
          %1284 = vst [vmem:[#allocation3 + $0x2a0] sm:$0xff] %v1273
          %1285 = vst [vmem:[#allocation3 + $0x2a8] sm:$0xff] %v1275
          %1286 = vst [vmem:[#allocation3 + $0x2b0] sm:$0xff] %v1277
          %1287 = vst [vmem:[#allocation3 + $0x2b8] sm:$0xff] %v1279
          %v1288 = vld [vmem:[%s314 + $0x8] sm:$0xff]
          %v1289 = vld [vmem:[%s314 + $0x10] sm:$0xff]
          %v1290 = vld [vmem:[%s314 + $0x18] sm:$0xff]
          %v1291 = vld [vmem:[%s314 + $0x20] sm:$0xff]
          %v1292 = vld [vmem:[%s314 + $0x28] sm:$0xf]
          %1298 = vrot.lane.b32.xlu0 %v1288, 84
          %v1299 = vpop.permute.xlu0 %1298
          %1300 = vrot.lane.b32.xlu0 %v1289, 84
          %v1301 = vpop.permute.xlu0 %1300
          %1302 = vrot.lane.b32.xlu0 %v1290, 84
          %v1303 = vpop.permute.xlu0 %1302
          %1304 = vrot.lane.b32.xlu0 %v1291, 84
          %v1305 = vpop.permute.xlu0 %1304
          %1306 = vrot.lane.b32.xlu0 %v1292, 84
          %v1307 = vpop.permute.xlu0 %1306
          %v1308 = vrot.slane %v1299, 4
          %v1309 = vrot.slane %v1301, 4
          %v1310 = vrot.slane %v1303, 4
          %v1311 = vrot.slane %v1305, 4
          %v1312 = vrot.slane %v1307, 4
          %v1313 = vsel %vm388, %v1308, %v1309
          %vm1314 = vcmask 687104
          %v1315 = vsel %vm1314, %v1299, %v1313
          %v1316 = vsel %vm388, %v1309, %v1310
          %v1317 = vsel %vm1314, %v1301, %v1316
          %v1318 = vsel %vm388, %v1310, %v1311
          %v1319 = vsel %vm1314, %v1303, %v1318
          %v1320 = vsel %vm388, %v1311, %v1312
          %v1321 = vsel %vm1314, %v1305, %v1320
          %1326 = vst [vmem:[#allocation3 + $0x2c0] sm:$0xff] %v1315
          %1327 = vst [vmem:[#allocation3 + $0x2c8] sm:$0xff] %v1317
          %1328 = vst [vmem:[#allocation3 + $0x2d0] sm:$0xff] %v1319
          %1329 = vst [vmem:[#allocation3 + $0x2d8] sm:$0xff] %v1321
          %v1330 = vld [vmem:[%s314 + $0x8] sm:$0xff]
          %v1331 = vld [vmem:[%s314 + $0x10] sm:$0xff]
          %v1332 = vld [vmem:[%s314 + $0x18] sm:$0xff]
          %v1333 = vld [vmem:[%s314 + $0x20] sm:$0xff]
          %v1334 = vld [vmem:[%s314 + $0x28] sm:$0xf]
          %1340 = vrot.lane.b32.xlu0 %v1330, 83
          %v1341 = vpop.permute.xlu0 %1340
          %1342 = vrot.lane.b32.xlu0 %v1331, 83
          %v1343 = vpop.permute.xlu0 %1342
          %1344 = vrot.lane.b32.xlu0 %v1332, 83
          %v1345 = vpop.permute.xlu0 %1344
          %1346 = vrot.lane.b32.xlu0 %v1333, 83
          %v1347 = vpop.permute.xlu0 %1346
          %1348 = vrot.lane.b32.xlu0 %v1334, 83
          %v1349 = vpop.permute.xlu0 %1348
          %v1350 = vrot.slane %v1341, 4
          %v1351 = vrot.slane %v1343, 4
          %v1352 = vrot.slane %v1345, 4
          %v1353 = vrot.slane %v1347, 4
          %v1354 = vrot.slane %v1349, 4
          %v1355 = vsel %vm388, %v1350, %v1351
          %vm1356 = vcmask 678912
          %v1357 = vsel %vm1356, %v1341, %v1355
          %v1358 = vsel %vm388, %v1351, %v1352
          %v1359 = vsel %vm1356, %v1343, %v1358
          %v1360 = vsel %vm388, %v1352, %v1353
          %v1361 = vsel %vm1356, %v1345, %v1360
          %v1362 = vsel %vm388, %v1353, %v1354
          %v1363 = vsel %vm1356, %v1347, %v1362
          %1368 = vst [vmem:[#allocation3 + $0x2e0] sm:$0xff] %v1357
          %1369 = vst [vmem:[#allocation3 + $0x2e8] sm:$0xff] %v1359
          %1370 = vst [vmem:[#allocation3 + $0x2f0] sm:$0xff] %v1361
          %1371 = vst [vmem:[#allocation3 + $0x2f8] sm:$0xff] %v1363
          %v1372 = vld [vmem:[%s314 + $0x8] sm:$0xff]
          %v1373 = vld [vmem:[%s314 + $0x10] sm:$0xff]
          %v1374 = vld [vmem:[%s314 + $0x18] sm:$0xff]
          %v1375 = vld [vmem:[%s314 + $0x20] sm:$0xff]
          %v1376 = vld [vmem:[%s314 + $0x28] sm:$0xf]
          %1382 = vrot.lane.b32.xlu0 %v1372, 75
          %v1383 = vpop.permute.xlu0 %1382
          %1384 = vrot.lane.b32.xlu0 %v1373, 75
          %v1385 = vpop.permute.xlu0 %1384
          %1386 = vrot.lane.b32.xlu0 %v1374, 75
          %v1387 = vpop.permute.xlu0 %1386
          %1388 = vrot.lane.b32.xlu0 %v1375, 75
          %v1389 = vpop.permute.xlu0 %1388
          %1390 = vrot.lane.b32.xlu0 %v1376, 75
          %v1391 = vpop.permute.xlu0 %1390
          %v1392 = vrot.slane %v1383, 4
          %v1393 = vrot.slane %v1385, 4
          %v1394 = vrot.slane %v1387, 4
          %v1395 = vrot.slane %v1389, 4
          %v1396 = vrot.slane %v1391, 4
          %v1397 = vsel %vm388, %v1392, %v1393
          %vm1398 = vcmask 613376
          %v1399 = vsel %vm1398, %v1383, %v1397
          %v1400 = vsel %vm388, %v1393, %v1394
          %v1401 = vsel %vm1398, %v1385, %v1400
          %v1402 = vsel %vm388, %v1394, %v1395
          %v1403 = vsel %vm1398, %v1387, %v1402
          %v1404 = vsel %vm388, %v1395, %v1396
          %v1405 = vsel %vm1398, %v1389, %v1404
          %1410 = vst [vmem:[#allocation3 + $0x300] sm:$0xff] %v1399
          %1411 = vst [vmem:[#allocation3 + $0x308] sm:$0xff] %v1401
          %1412 = vst [vmem:[#allocation3 + $0x310] sm:$0xff] %v1403
          %1413 = vst [vmem:[#allocation3 + $0x318] sm:$0xff] %v1405
          %v1414 = vld [vmem:[%s314 + $0x8] sm:$0xff]
          %v1415 = vld [vmem:[%s314 + $0x10] sm:$0xff]
          %v1416 = vld [vmem:[%s314 + $0x18] sm:$0xff]
          %v1417 = vld [vmem:[%s314 + $0x20] sm:$0xff]
          %v1418 = vld [vmem:[%s314 + $0x28] sm:$0xf]
          %1424 = vrot.lane.b32.xlu0 %v1414, 74
          %v1425 = vpop.permute.xlu0 %1424
          %1426 = vrot.lane.b32.xlu0 %v1415, 74
          %v1427 = vpop.permute.xlu0 %1426
          %1428 = vrot.lane.b32.xlu0 %v1416, 74
          %v1429 = vpop.permute.xlu0 %1428
          %1430 = vrot.lane.b32.xlu0 %v1417, 74
          %v1431 = vpop.permute.xlu0 %1430
          %1432 = vrot.lane.b32.xlu0 %v1418, 74
          %v1433 = vpop.permute.xlu0 %1432
          %v1434 = vrot.slane %v1425, 4
          %v1435 = vrot.slane %v1427, 4
          %v1436 = vrot.slane %v1429, 4
          %v1437 = vrot.slane %v1431, 4
          %v1438 = vrot.slane %v1433, 4
          %v1439 = vsel %vm388, %v1434, %v1435
          %vm1440 = vcmask 605184
          %v1441 = vsel %vm1440, %v1425, %v1439
          %v1442 = vsel %vm388, %v1435, %v1436
          %v1443 = vsel %vm1440, %v1427, %v1442
          %v1444 = vsel %vm388, %v1436, %v1437
          %v1445 = vsel %vm1440, %v1429, %v1444
          %v1446 = vsel %vm388, %v1437, %v1438
          %v1447 = vsel %vm1440, %v1431, %v1446
          %1452 = vst [vmem:[#allocation3 + $0x320] sm:$0xff] %v1441
          %1453 = vst [vmem:[#allocation3 + $0x328] sm:$0xff] %v1443
          %1454 = vst [vmem:[#allocation3 + $0x330] sm:$0xff] %v1445
          %1455 = vst [vmem:[#allocation3 + $0x338] sm:$0xff] %v1447
          %v1456 = vld [vmem:[%s314 + $0x8] sm:$0xff]
          %v1457 = vld [vmem:[%s314 + $0x10] sm:$0xff]
          %v1458 = vld [vmem:[%s314 + $0x18] sm:$0xff]
          %v1459 = vld [vmem:[%s314 + $0x20] sm:$0xff]
          %v1460 = vld [vmem:[%s314 + $0x28] sm:$0xf]
          %1466 = vrot.lane.b32.xlu0 %v1456, 73
          %v1467 = vpop.permute.xlu0 %1466
          %1468 = vrot.lane.b32.xlu0 %v1457, 73
          %v1469 = vpop.permute.xlu0 %1468
          %1470 = vrot.lane.b32.xlu0 %v1458, 73
          %v1471 = vpop.permute.xlu0 %1470
          %1472 = vrot.lane.b32.xlu0 %v1459, 73
          %v1473 = vpop.permute.xlu0 %1472
          %1474 = vrot.lane.b32.xlu0 %v1460, 73
          %v1475 = vpop.permute.xlu0 %1474
          %v1476 = vrot.slane %v1467, 4
          %v1477 = vrot.slane %v1469, 4
          %v1478 = vrot.slane %v1471, 4
          %v1479 = vrot.slane %v1473, 4
          %v1480 = vrot.slane %v1475, 4
          %v1481 = vsel %vm388, %v1476, %v1477
          %vm1482 = vcmask 596992
          %v1483 = vsel %vm1482, %v1467, %v1481
          %v1484 = vsel %vm388, %v1477, %v1478
          %v1485 = vsel %vm1482, %v1469, %v1484
          %v1486 = vsel %vm388, %v1478, %v1479
          %v1487 = vsel %vm1482, %v1471, %v1486
          %v1488 = vsel %vm388, %v1479, %v1480
          %v1489 = vsel %vm1482, %v1473, %v1488
          %1494 = vst [vmem:[#allocation3 + $0x340] sm:$0xff] %v1483
          %1495 = vst [vmem:[#allocation3 + $0x348] sm:$0xff] %v1485
          %1496 = vst [vmem:[#allocation3 + $0x350] sm:$0xff] %v1487
          %1497 = vst [vmem:[#allocation3 + $0x358] sm:$0xff] %v1489
          %v1498 = vld [vmem:[%s2] sm:$0xff]
          %v1499 = vld [vmem:[#allocation3] sm:$0xff]
          %v1500 = vld [vmem:[#allocation3 + $0x8] sm:$0xff]
          %v1501 = vld [vmem:[#allocation3 + $0x10] sm:$0xff]
          %v1502 = vld [vmem:[#allocation3 + $0x18] sm:$0xff]
          %v1503 = vld [vmem:[#allocation3 + $0x20] sm:$0xff]
          %v1504 = vld [vmem:[#allocation3 + $0x28] sm:$0xff]
          %v1505 = vld [vmem:[#allocation3 + $0x30] sm:$0xff]
          %v1506 = vld [vmem:[#allocation3 + $0x38] sm:$0xff]
          %v1507 = vld [vmem:[#allocation3 + $0x40] sm:$0xff]
          %v1508 = vld [vmem:[#allocation3 + $0x48] sm:$0xff]
          %v1509 = vld [vmem:[#allocation3 + $0x50] sm:$0xff]
          %v1510 = vld [vmem:[#allocation3 + $0x58] sm:$0xff]
          %v1511 = vld [vmem:[#allocation3 + $0x60] sm:$0xff]
          %v1512 = vld [vmem:[#allocation3 + $0x68] sm:$0xff]
          %v1513 = vld [vmem:[#allocation3 + $0x70] sm:$0xff]
          %v1514 = vld [vmem:[#allocation3 + $0x78] sm:$0xff]
          %v1515 = vld [vmem:[#allocation3 + $0x80] sm:$0xff]
          %v1516 = vld [vmem:[#allocation3 + $0x88] sm:$0xff]
          %v1517 = vld [vmem:[#allocation3 + $0x90] sm:$0xff]
          %v1518 = vld [vmem:[#allocation3 + $0x98] sm:$0xff]
          %v1519 = vld [vmem:[#allocation3 + $0xa0] sm:$0xff]
          %v1520 = vld [vmem:[#allocation3 + $0xa8] sm:$0xff]
          %v1521 = vld [vmem:[#allocation3 + $0xb0] sm:$0xff]
          %v1522 = vld [vmem:[#allocation3 + $0xb8] sm:$0xff]
          %v1523 = vld [vmem:[#allocation3 + $0xc0] sm:$0xff]
          %v1524 = vld [vmem:[#allocation3 + $0xc8] sm:$0xff]
          %v1525 = vld [vmem:[#allocation3 + $0xd0] sm:$0xff]
          %v1526 = vld [vmem:[#allocation3 + $0xd8] sm:$0xff]
          %v1527 = vld [vmem:[#allocation3 + $0xe0] sm:$0xff]
          %v1528 = vld [vmem:[#allocation3 + $0xe8] sm:$0xff]
          %v1529 = vld [vmem:[#allocation3 + $0xf0] sm:$0xff]
          %v1530 = vld [vmem:[#allocation3 + $0xf8] sm:$0xff]
          %v1531 = vld [vmem:[#allocation3 + $0x100] sm:$0xff]
          %v1532 = vld [vmem:[#allocation3 + $0x108] sm:$0xff]
          %v1533 = vld [vmem:[#allocation3 + $0x110] sm:$0xff]
          %v1534 = vld [vmem:[#allocation3 + $0x118] sm:$0xff]
          %v1535 = vld [vmem:[#allocation3 + $0x120] sm:$0xff]
          %v1536 = vld [vmem:[#allocation3 + $0x128] sm:$0xff]
          %v1537 = vld [vmem:[#allocation3 + $0x130] sm:$0xff]
          %v1538 = vld [vmem:[#allocation3 + $0x138] sm:$0xff]
          %v1539 = vld [vmem:[#allocation3 + $0x140] sm:$0xff]
          %v1540 = vld [vmem:[#allocation3 + $0x148] sm:$0xff]
          %v1541 = vld [vmem:[#allocation3 + $0x150] sm:$0xff]
          %v1542 = vld [vmem:[#allocation3 + $0x158] sm:$0xff]
          %v1543 = vld [vmem:[#allocation3 + $0x160] sm:$0xff]
          %v1544 = vld [vmem:[#allocation3 + $0x168] sm:$0xff]
          %v1545 = vld [vmem:[#allocation3 + $0x170] sm:$0xff]
          %v1546 = vld [vmem:[#allocation3 + $0x178] sm:$0xff]
          %v1547 = vld [vmem:[#allocation3 + $0x180] sm:$0xff]
          %v1548 = vld [vmem:[#allocation3 + $0x188] sm:$0xff]
          %v1549 = vld [vmem:[#allocation3 + $0x190] sm:$0xff]
          %v1550 = vld [vmem:[#allocation3 + $0x198] sm:$0xff]
          %v1551 = vld [vmem:[#allocation3 + $0x1a0] sm:$0xff]
          %v1552 = vld [vmem:[#allocation3 + $0x1a8] sm:$0xff]
          %v1553 = vld [vmem:[#allocation3 + $0x1b0] sm:$0xff]
          %v1554 = vld [vmem:[#allocation3 + $0x1b8] sm:$0xff]
          %v1555 = vld [vmem:[#allocation3 + $0x1c0] sm:$0xff]
          %v1556 = vld [vmem:[#allocation3 + $0x1c8] sm:$0xff]
          %v1557 = vld [vmem:[#allocation3 + $0x1d0] sm:$0xff]
          %v1558 = vld [vmem:[#allocation3 + $0x1d8] sm:$0xff]
          %v1559 = vld [vmem:[#allocation3 + $0x1e0] sm:$0xff]
          %v1560 = vld [vmem:[#allocation3 + $0x1e8] sm:$0xff]
          %v1561 = vld [vmem:[#allocation3 + $0x1f0] sm:$0xff]
          %v1562 = vld [vmem:[#allocation3 + $0x1f8] sm:$0xff]
          %v1563 = vld [vmem:[#allocation3 + $0x200] sm:$0xff]
          %v1564 = vld [vmem:[#allocation3 + $0x208] sm:$0xff]
          %v1565 = vld [vmem:[#allocation3 + $0x210] sm:$0xff]
          %v1566 = vld [vmem:[#allocation3 + $0x218] sm:$0xff]
          %v1567 = vld [vmem:[#allocation3 + $0x220] sm:$0xff]
          %v1568 = vld [vmem:[#allocation3 + $0x228] sm:$0xff]
          %v1569 = vld [vmem:[#allocation3 + $0x230] sm:$0xff]
          %v1570 = vld [vmem:[#allocation3 + $0x238] sm:$0xff]
          %v1571 = vld [vmem:[#allocation3 + $0x240] sm:$0xff]
          %v1572 = vld [vmem:[#allocation3 + $0x248] sm:$0xff]
          %v1573 = vld [vmem:[#allocation3 + $0x250] sm:$0xff]
          %v1574 = vld [vmem:[#allocation3 + $0x258] sm:$0xff]
          %v1575 = vld [vmem:[#allocation3 + $0x260] sm:$0xff]
          %v1576 = vld [vmem:[#allocation3 + $0x268] sm:$0xff]
          %v1577 = vld [vmem:[#allocation3 + $0x270] sm:$0xff]
          %v1578 = vld [vmem:[#allocation3 + $0x278] sm:$0xff]
          %v1579 = vld [vmem:[#allocation3 + $0x280] sm:$0xff]
          %v1580 = vld [vmem:[#allocation3 + $0x288] sm:$0xff]
          %v1581 = vld [vmem:[#allocation3 + $0x290] sm:$0xff]
          %v1582 = vld [vmem:[#allocation3 + $0x298] sm:$0xff]
          %v1583 = vld [vmem:[#allocation3 + $0x2a0] sm:$0xff]
          %v1584 = vld [vmem:[#allocation3 + $0x2a8] sm:$0xff]
          %v1585 = vld [vmem:[#allocation3 + $0x2b0] sm:$0xff]
          %v1586 = vld [vmem:[#allocation3 + $0x2b8] sm:$0xff]
          %v1587 = vld [vmem:[#allocation3 + $0x2c0] sm:$0xff]
          %v1588 = vld [vmem:[#allocation3 + $0x2c8] sm:$0xff]
          %v1589 = vld [vmem:[#allocation3 + $0x2d0] sm:$0xff]
          %v1590 = vld [vmem:[#allocation3 + $0x2d8] sm:$0xff]
          %v1591 = vld [vmem:[#allocation3 + $0x2e0] sm:$0xff]
          %v1592 = vld [vmem:[#allocation3 + $0x2e8] sm:$0xff]
          %v1593 = vld [vmem:[#allocation3 + $0x2f0] sm:$0xff]
          %v1594 = vld [vmem:[#allocation3 + $0x2f8] sm:$0xff]
          %v1595 = vld [vmem:[#allocation3 + $0x300] sm:$0xff]
          %v1596 = vld [vmem:[#allocation3 + $0x308] sm:$0xff]
          %v1597 = vld [vmem:[#allocation3 + $0x310] sm:$0xff]
          %v1598 = vld [vmem:[#allocation3 + $0x318] sm:$0xff]
          %v1599 = vld [vmem:[#allocation3 + $0x320] sm:$0xff]
          %v1600 = vld [vmem:[#allocation3 + $0x328] sm:$0xff]
          %v1601 = vld [vmem:[#allocation3 + $0x330] sm:$0xff]
          %v1602 = vld [vmem:[#allocation3 + $0x338] sm:$0xff]
          %v1603 = vld [vmem:[#allocation3 + $0x340] sm:$0xff]
          %v1604 = vld [vmem:[#allocation3 + $0x348] sm:$0xff]
          %v1605 = vld [vmem:[#allocation3 + $0x350] sm:$0xff]
          %v1606 = vld [vmem:[#allocation3 + $0x358] sm:$0xff]
          %v1607 = vld [vmem:[%s3] sm:$0xff]
          %1609 = vset.pattern.permute.xlu0 0
          %1610 = vperm.xlu0 %1609, %v1607
          %v1611 = vpop.permute.xlu0 %1610
          %v1614 = vunpack.c.l.b16 %v1498
          %v1615 = vunpack.c.h.b16 %v1498
          %v1616 = vpack.c.b16 %v1614, %v1614
          %v1617 = vpack.c.b16 %v1615, %v1615
          %v1727 = vunpack.c.l.b16 %v1499
          %v1728 = vunpack.c.h.b16 %v1499
          %v1729 = vunpack.c.l.b16 %v1500
          %v1730 = vunpack.c.h.b16 %v1500
          %v1731 = vunpack.c.l.b16 %v1501
          %v1732 = vunpack.c.h.b16 %v1501
          %v1733 = vunpack.c.l.b16 %v1502
          %v1734 = vunpack.c.h.b16 %v1502
          %v1735 = vunpack.c.l.b16 %v1503
          %v1736 = vunpack.c.h.b16 %v1503
          %v1737 = vunpack.c.l.b16 %v1504
          %v1738 = vunpack.c.h.b16 %v1504
          %v1739 = vunpack.c.l.b16 %v1505
          %v1740 = vunpack.c.h.b16 %v1505
          %v1741 = vunpack.c.l.b16 %v1506
          %v1742 = vunpack.c.h.b16 %v1506
          %v1743 = vunpack.c.l.b16 %v1507
          %v1744 = vunpack.c.h.b16 %v1507
          %v1745 = vunpack.c.l.b16 %v1508
          %v1746 = vunpack.c.h.b16 %v1508
          %v1747 = vunpack.c.l.b16 %v1509
          %v1748 = vunpack.c.h.b16 %v1509
          %v1749 = vunpack.c.l.b16 %v1510
          %v1750 = vunpack.c.h.b16 %v1510
          %v1751 = vunpack.c.l.b16 %v1511
          %v1752 = vunpack.c.h.b16 %v1511
          %v1753 = vunpack.c.l.b16 %v1512
          %v1754 = vunpack.c.h.b16 %v1512
          %v1755 = vunpack.c.l.b16 %v1513
          %v1756 = vunpack.c.h.b16 %v1513
          %v1757 = vunpack.c.l.b16 %v1514
          %v1758 = vunpack.c.h.b16 %v1514
          %v1759 = vunpack.c.l.b16 %v1515
          %v1760 = vunpack.c.h.b16 %v1515
          %v1761 = vunpack.c.l.b16 %v1516
          %v1762 = vunpack.c.h.b16 %v1516
          %v1763 = vunpack.c.l.b16 %v1517
          %v1764 = vunpack.c.h.b16 %v1517
          %v1765 = vunpack.c.l.b16 %v1518
          %v1766 = vunpack.c.h.b16 %v1518
          %v1767 = vunpack.c.l.b16 %v1519
          %v1768 = vunpack.c.h.b16 %v1519
          %v1769 = vunpack.c.l.b16 %v1520
          %v1770 = vunpack.c.h.b16 %v1520
          %v1771 = vunpack.c.l.b16 %v1521
          %v1772 = vunpack.c.h.b16 %v1521
          %v1773 = vunpack.c.l.b16 %v1522
          %v1774 = vunpack.c.h.b16 %v1522
          %v1775 = vunpack.c.l.b16 %v1523
          %v1776 = vunpack.c.h.b16 %v1523
          %v1777 = vunpack.c.l.b16 %v1524
          %v1778 = vunpack.c.h.b16 %v1524
          %v1779 = vunpack.c.l.b16 %v1525
          %v1780 = vunpack.c.h.b16 %v1525
          %v1781 = vunpack.c.l.b16 %v1526
          %v1782 = vunpack.c.h.b16 %v1526
          %v1783 = vunpack.c.l.b16 %v1527
          %v1784 = vunpack.c.h.b16 %v1527
          %v1785 = vunpack.c.l.b16 %v1528
          %v1786 = vunpack.c.h.b16 %v1528
          %v1787 = vunpack.c.l.b16 %v1529
          %v1788 = vunpack.c.h.b16 %v1529
          %v1789 = vunpack.c.l.b16 %v1530
          %v1790 = vunpack.c.h.b16 %v1530
          %v1791 = vunpack.c.l.b16 %v1531
          %v1792 = vunpack.c.h.b16 %v1531
          %v1793 = vunpack.c.l.b16 %v1532
          %v1794 = vunpack.c.h.b16 %v1532
          %v1795 = vunpack.c.l.b16 %v1533
          %v1796 = vunpack.c.h.b16 %v1533
          %v1797 = vunpack.c.l.b16 %v1534
          %v1798 = vunpack.c.h.b16 %v1534
          %v1799 = vunpack.c.l.b16 %v1535
          %v1800 = vunpack.c.h.b16 %v1535
          %v1801 = vunpack.c.l.b16 %v1536
          %v1802 = vunpack.c.h.b16 %v1536
          %v1803 = vunpack.c.l.b16 %v1537
          %v1804 = vunpack.c.h.b16 %v1537
          %v1805 = vunpack.c.l.b16 %v1538
          %v1806 = vunpack.c.h.b16 %v1538
          %v1807 = vunpack.c.l.b16 %v1539
          %v1808 = vunpack.c.h.b16 %v1539
          %v1809 = vunpack.c.l.b16 %v1540
          %v1810 = vunpack.c.h.b16 %v1540
          %v1811 = vunpack.c.l.b16 %v1541
          %v1812 = vunpack.c.h.b16 %v1541
          %v1813 = vunpack.c.l.b16 %v1542
          %v1814 = vunpack.c.h.b16 %v1542
          %v1815 = vunpack.c.l.b16 %v1543
          %v1816 = vunpack.c.h.b16 %v1543
          %v1817 = vunpack.c.l.b16 %v1544
          %v1818 = vunpack.c.h.b16 %v1544
          %v1819 = vunpack.c.l.b16 %v1545
          %v1820 = vunpack.c.h.b16 %v1545
          %v1821 = vunpack.c.l.b16 %v1546
          %v1822 = vunpack.c.h.b16 %v1546
          %v1823 = vunpack.c.l.b16 %v1547
          %v1824 = vunpack.c.h.b16 %v1547
          %v1825 = vunpack.c.l.b16 %v1548
          %v1826 = vunpack.c.h.b16 %v1548
          %v1827 = vunpack.c.l.b16 %v1549
          %v1828 = vunpack.c.h.b16 %v1549
          %v1829 = vunpack.c.l.b16 %v1550
          %v1830 = vunpack.c.h.b16 %v1550
          %v1831 = vunpack.c.l.b16 %v1551
          %v1832 = vunpack.c.h.b16 %v1551
          %v1833 = vunpack.c.l.b16 %v1552
          %v1834 = vunpack.c.h.b16 %v1552
          %v1835 = vunpack.c.l.b16 %v1553
          %v1836 = vunpack.c.h.b16 %v1553
          %v1837 = vunpack.c.l.b16 %v1554
          %v1838 = vunpack.c.h.b16 %v1554
          %v1839 = vunpack.c.l.b16 %v1555
          %v1840 = vunpack.c.h.b16 %v1555
          %v1841 = vunpack.c.l.b16 %v1556
          %v1842 = vunpack.c.h.b16 %v1556
          %v1843 = vunpack.c.l.b16 %v1557
          %v1844 = vunpack.c.h.b16 %v1557
          %v1845 = vunpack.c.l.b16 %v1558
          %v1846 = vunpack.c.h.b16 %v1558
          %v1847 = vunpack.c.l.b16 %v1559
          %v1848 = vunpack.c.h.b16 %v1559
          %v1849 = vunpack.c.l.b16 %v1560
          %v1850 = vunpack.c.h.b16 %v1560
          %v1851 = vunpack.c.l.b16 %v1561
          %v1852 = vunpack.c.h.b16 %v1561
          %v1853 = vunpack.c.l.b16 %v1562
          %v1854 = vunpack.c.h.b16 %v1562
          %v1855 = vunpack.c.l.b16 %v1563
          %v1856 = vunpack.c.h.b16 %v1563
          %v1857 = vunpack.c.l.b16 %v1564
          %v1858 = vunpack.c.h.b16 %v1564
          %v1859 = vunpack.c.l.b16 %v1565
          %v1860 = vunpack.c.h.b16 %v1565
          %v1861 = vunpack.c.l.b16 %v1566
          %v1862 = vunpack.c.h.b16 %v1566
          %v1863 = vunpack.c.l.b16 %v1567
          %v1864 = vunpack.c.h.b16 %v1567
          %v1865 = vunpack.c.l.b16 %v1568
          %v1866 = vunpack.c.h.b16 %v1568
          %v1867 = vunpack.c.l.b16 %v1569
          %v1868 = vunpack.c.h.b16 %v1569
          %v1869 = vunpack.c.l.b16 %v1570
          %v1870 = vunpack.c.h.b16 %v1570
          %v1871 = vunpack.c.l.b16 %v1571
          %v1872 = vunpack.c.h.b16 %v1571
          %v1873 = vunpack.c.l.b16 %v1572
          %v1874 = vunpack.c.h.b16 %v1572
          %v1875 = vunpack.c.l.b16 %v1573
          %v1876 = vunpack.c.h.b16 %v1573
          %v1877 = vunpack.c.l.b16 %v1574
          %v1878 = vunpack.c.h.b16 %v1574
          %v1879 = vunpack.c.l.b16 %v1575
          %v1880 = vunpack.c.h.b16 %v1575
          %v1881 = vunpack.c.l.b16 %v1576
          %v1882 = vunpack.c.h.b16 %v1576
          %v1883 = vunpack.c.l.b16 %v1577
          %v1884 = vunpack.c.h.b16 %v1577
          %v1885 = vunpack.c.l.b16 %v1578
          %v1886 = vunpack.c.h.b16 %v1578
          %v1887 = vunpack.c.l.b16 %v1579
          %v1888 = vunpack.c.h.b16 %v1579
          %v1889 = vunpack.c.l.b16 %v1580
          %v1890 = vunpack.c.h.b16 %v1580
          %v1891 = vunpack.c.l.b16 %v1581
          %v1892 = vunpack.c.h.b16 %v1581
          %v1893 = vunpack.c.l.b16 %v1582
          %v1894 = vunpack.c.h.b16 %v1582
          %v1895 = vunpack.c.l.b16 %v1583
          %v1896 = vunpack.c.h.b16 %v1583
          %v1897 = vunpack.c.l.b16 %v1584
          %v1898 = vunpack.c.h.b16 %v1584
          %v1899 = vunpack.c.l.b16 %v1585
          %v1900 = vunpack.c.h.b16 %v1585
          %v1901 = vunpack.c.l.b16 %v1586
          %v1902 = vunpack.c.h.b16 %v1586
          %v1903 = vunpack.c.l.b16 %v1587
          %v1904 = vunpack.c.h.b16 %v1587
          %v1905 = vunpack.c.l.b16 %v1588
          %v1906 = vunpack.c.h.b16 %v1588
          %v1907 = vunpack.c.l.b16 %v1589
          %v1908 = vunpack.c.h.b16 %v1589
          %v1909 = vunpack.c.l.b16 %v1590
          %v1910 = vunpack.c.h.b16 %v1590
          %v1911 = vunpack.c.l.b16 %v1591
          %v1912 = vunpack.c.h.b16 %v1591
          %v1913 = vunpack.c.l.b16 %v1592
          %v1914 = vunpack.c.h.b16 %v1592
          %v1915 = vunpack.c.l.b16 %v1593
          %v1916 = vunpack.c.h.b16 %v1593
          %v1917 = vunpack.c.l.b16 %v1594
          %v1918 = vunpack.c.h.b16 %v1594
          %v1919 = vunpack.c.l.b16 %v1595
          %v1920 = vunpack.c.h.b16 %v1595
          %v1921 = vunpack.c.l.b16 %v1596
          %v1922 = vunpack.c.h.b16 %v1596
          %v1923 = vunpack.c.l.b16 %v1597
          %v1924 = vunpack.c.h.b16 %v1597
          %v1925 = vunpack.c.l.b16 %v1598
          %v1926 = vunpack.c.h.b16 %v1598
          %v1927 = vunpack.c.l.b16 %v1599
          %v1928 = vunpack.c.h.b16 %v1599
          %v1929 = vunpack.c.l.b16 %v1600
          %v1930 = vunpack.c.h.b16 %v1600
          %v1931 = vunpack.c.l.b16 %v1601
          %v1932 = vunpack.c.h.b16 %v1601
          %v1933 = vunpack.c.l.b16 %v1602
          %v1934 = vunpack.c.h.b16 %v1602
          %v1935 = vunpack.c.l.b16 %v1603
          %v1936 = vunpack.c.h.b16 %v1603
          %v1937 = vunpack.c.l.b16 %v1604
          %v1938 = vunpack.c.h.b16 %v1604
          %v1939 = vunpack.c.l.b16 %v1605
          %v1940 = vunpack.c.h.b16 %v1605
          %v1941 = vunpack.c.l.b16 %v1606
          %v1942 = vunpack.c.h.b16 %v1606
          %v1943 = vpack.c.b16 %v1735, %v1727
          %v1944 = vpack.c.b16 %v1736, %v1728
          %v1945 = vpack.c.b16 %v1737, %v1729
          %v1946 = vpack.c.b16 %v1738, %v1730
          %v1947 = vpack.c.b16 %v1739, %v1731
          %v1948 = vpack.c.b16 %v1740, %v1732
          %v1949 = vpack.c.b16 %v1741, %v1733
          %v1950 = vpack.c.b16 %v1742, %v1734
          %v1951 = vpack.c.b16 %v1751, %v1743
          %v1952 = vpack.c.b16 %v1752, %v1744
          %v1953 = vpack.c.b16 %v1753, %v1745
          %v1954 = vpack.c.b16 %v1754, %v1746
          %v1955 = vpack.c.b16 %v1755, %v1747
          %v1956 = vpack.c.b16 %v1756, %v1748
          %v1957 = vpack.c.b16 %v1757, %v1749
          %v1958 = vpack.c.b16 %v1758, %v1750
          %v1959 = vpack.c.b16 %v1767, %v1759
          %v1960 = vpack.c.b16 %v1768, %v1760
          %v1961 = vpack.c.b16 %v1769, %v1761
          %v1962 = vpack.c.b16 %v1770, %v1762
          %v1963 = vpack.c.b16 %v1771, %v1763
          %v1964 = vpack.c.b16 %v1772, %v1764
          %v1965 = vpack.c.b16 %v1773, %v1765
          %v1966 = vpack.c.b16 %v1774, %v1766
          %v1967 = vpack.c.b16 %v1783, %v1775
          %v1968 = vpack.c.b16 %v1784, %v1776
          %v1969 = vpack.c.b16 %v1785, %v1777
          %v1970 = vpack.c.b16 %v1786, %v1778
          %v1971 = vpack.c.b16 %v1787, %v1779
          %v1972 = vpack.c.b16 %v1788, %v1780
          %v1973 = vpack.c.b16 %v1789, %v1781
          %v1974 = vpack.c.b16 %v1790, %v1782
          %v1975 = vpack.c.b16 %v1799, %v1791
          %v1976 = vpack.c.b16 %v1800, %v1792
          %v1977 = vpack.c.b16 %v1801, %v1793
          %v1978 = vpack.c.b16 %v1802, %v1794
          %v1979 = vpack.c.b16 %v1803, %v1795
          %v1980 = vpack.c.b16 %v1804, %v1796
          %v1981 = vpack.c.b16 %v1805, %v1797
          %v1982 = vpack.c.b16 %v1806, %v1798
          %v1983 = vpack.c.b16 %v1815, %v1807
          %v1984 = vpack.c.b16 %v1816, %v1808
          %v1985 = vpack.c.b16 %v1817, %v1809
          %v1986 = vpack.c.b16 %v1818, %v1810
          %v1987 = vpack.c.b16 %v1819, %v1811
          %v1988 = vpack.c.b16 %v1820, %v1812
          %v1989 = vpack.c.b16 %v1821, %v1813
          %v1990 = vpack.c.b16 %v1822, %v1814
          %v1991 = vpack.c.b16 %v1831, %v1823
          %v1992 = vpack.c.b16 %v1832, %v1824
          %v1993 = vpack.c.b16 %v1833, %v1825
          %v1994 = vpack.c.b16 %v1834, %v1826
          %v1995 = vpack.c.b16 %v1835, %v1827
          %v1996 = vpack.c.b16 %v1836, %v1828
          %v1997 = vpack.c.b16 %v1837, %v1829
          %v1998 = vpack.c.b16 %v1838, %v1830
          %v1999 = vpack.c.b16 %v1847, %v1839
          %v2000 = vpack.c.b16 %v1848, %v1840
          %v2001 = vpack.c.b16 %v1849, %v1841
          %v2002 = vpack.c.b16 %v1850, %v1842
          %v2003 = vpack.c.b16 %v1851, %v1843
          %v2004 = vpack.c.b16 %v1852, %v1844
          %v2005 = vpack.c.b16 %v1853, %v1845
          %v2006 = vpack.c.b16 %v1854, %v1846
          %v2007 = vpack.c.b16 %v1863, %v1855
          %v2008 = vpack.c.b16 %v1864, %v1856
          %v2009 = vpack.c.b16 %v1865, %v1857
          %v2010 = vpack.c.b16 %v1866, %v1858
          %v2011 = vpack.c.b16 %v1867, %v1859
          %v2012 = vpack.c.b16 %v1868, %v1860
          %v2013 = vpack.c.b16 %v1869, %v1861
          %v2014 = vpack.c.b16 %v1870, %v1862
          %v2015 = vpack.c.b16 %v1879, %v1871
          %v2016 = vpack.c.b16 %v1880, %v1872
          %v2017 = vpack.c.b16 %v1881, %v1873
          %v2018 = vpack.c.b16 %v1882, %v1874
          %v2019 = vpack.c.b16 %v1883, %v1875
          %v2020 = vpack.c.b16 %v1884, %v1876
          %v2021 = vpack.c.b16 %v1885, %v1877
          %v2022 = vpack.c.b16 %v1886, %v1878
          %v2023 = vpack.c.b16 %v1895, %v1887
          %v2024 = vpack.c.b16 %v1896, %v1888
          %v2025 = vpack.c.b16 %v1897, %v1889
          %v2026 = vpack.c.b16 %v1898, %v1890
          %v2027 = vpack.c.b16 %v1899, %v1891
          %v2028 = vpack.c.b16 %v1900, %v1892
          %v2029 = vpack.c.b16 %v1901, %v1893
          %v2030 = vpack.c.b16 %v1902, %v1894
          %v2031 = vpack.c.b16 %v1911, %v1903
          %v2032 = vpack.c.b16 %v1912, %v1904
          %v2033 = vpack.c.b16 %v1913, %v1905
          %v2034 = vpack.c.b16 %v1914, %v1906
          %v2035 = vpack.c.b16 %v1915, %v1907
          %v2036 = vpack.c.b16 %v1916, %v1908
          %v2037 = vpack.c.b16 %v1917, %v1909
          %v2038 = vpack.c.b16 %v1918, %v1910
          %v2039 = vpack.c.b16 %v1927, %v1919
          %v2040 = vpack.c.b16 %v1928, %v1920
          %v2041 = vpack.c.b16 %v1929, %v1921
          %v2042 = vpack.c.b16 %v1930, %v1922
          %v2043 = vpack.c.b16 %v1931, %v1923
          %v2044 = vpack.c.b16 %v1932, %v1924
          %v2045 = vpack.c.b16 %v1933, %v1925
          %v2046 = vpack.c.b16 %v1934, %v1926
          %v2047 = vpack.c.b16 %v1935, %v1935
          %v2048 = vpack.c.b16 %v1936, %v1936
          %v2049 = vpack.c.b16 %v1937, %v1937
          %v2050 = vpack.c.b16 %v1938, %v1938
          %v2051 = vpack.c.b16 %v1939, %v1939
          %v2052 = vpack.c.b16 %v1940, %v1940
          %v2053 = vpack.c.b16 %v1941, %v1941
          %v2054 = vpack.c.b16 %v1942, %v1942
          %vm2159 = vcmask 719872
          %v2161 = vsel %vm2159, %v1617, 0
          %vm2163 = vcmask 1043456
          %v2165 = vsel %vm2163, %v2047, 0
          %v2168 = vsel %vm2163, %v2048, 0
          %v2171 = vsel %vm2163, %v2049, 0
          %v2174 = vsel %vm2163, %v2050, 0
          %v2177 = vsel %vm2163, %v2051, 0
          %v2180 = vsel %vm2163, %v2052, 0
          %v2183 = vsel %vm2163, %v2053, 0
          %v2186 = vsel %vm2163, %v2054, 0
          %2188 = vmatpush.bf16.msra.mxu0 %v1999
          %2189 = vmatpush.bf16.msra.mxu0 %v1991
          %2190 = vmatpush.bf16.msra.mxu0 %v1983
          %2191 = vmatpush.bf16.msra.mxu0 %v1975
          %2192 = vmatpush.bf16.msra.mxu0 %v1967
          %2193 = vmatpush.bf16.msra.mxu0 %v1959
          %2194 = vmatpush.bf16.msra.mxu0 %v1951
          %2195 = vmatpush.bf16.msra.mxu0 %v1943
          %2196 = vmatmul.bf16.gmra.mxu0 %v1616
          %v2197 = vpop.f32.mrf.mxu0
          %v2198 = vadd.f32 %v1611, %v2197
          %v2199 = vpop.f32.mrf.mxu0
          %2200 = vdwg.mxu0
          %2201 = vmatpush.bf16.msra.mxu0 0
          %2202 = vmatpush.bf16.msra.mxu0 0
          %2203 = vmatpush.bf16.msra.mxu0 %v2165
          %2204 = vmatpush.bf16.msra.mxu0 %v2039
          %2205 = vmatpush.bf16.msra.mxu0 %v2031
          %2206 = vmatpush.bf16.msra.mxu0 %v2023
          %2207 = vmatpush.bf16.msra.mxu0 %v2015
          %2208 = vmatpush.bf16.msra.mxu0 %v2007
          %2209 = vmatmul.bf16.gmra.mxu0 %v2161
          %v2210 = vpop.f32.mrf.mxu0
          %v2211 = vadd.f32 %v2198, %v2210
          %v2212 = vpop.f32.mrf.mxu0
          %2213 = vdwg.mxu0
          %2214 = vmatpush.bf16.msra.mxu0 %v2000
          %2215 = vmatpush.bf16.msra.mxu0 %v1992
          %2216 = vmatpush.bf16.msra.mxu0 %v1984
          %2217 = vmatpush.bf16.msra.mxu0 %v1976
          %2218 = vmatpush.bf16.msra.mxu0 %v1968
          %2219 = vmatpush.bf16.msra.mxu0 %v1960
          %2220 = vmatpush.bf16.msra.mxu0 %v1952
          %2221 = vmatpush.bf16.msra.mxu0 %v1944
          %2222 = vmatmul.bf16.gmra.mxu0 %v1616
          %v2223 = vpop.f32.mrf.mxu0
          %v2224 = vadd.f32 %v1611, %v2223
          %v2225 = vpop.f32.mrf.mxu0
          %2226 = vdwg.mxu0
          %2227 = vmatpush.bf16.msra.mxu0 0
          %2228 = vmatpush.bf16.msra.mxu0 0
          %2229 = vmatpush.bf16.msra.mxu0 %v2168
          %2230 = vmatpush.bf16.msra.mxu0 %v2040
          %2231 = vmatpush.bf16.msra.mxu0 %v2032
          %2232 = vmatpush.bf16.msra.mxu0 %v2024
          %2233 = vmatpush.bf16.msra.mxu0 %v2016
          %2234 = vmatpush.bf16.msra.mxu0 %v2008
          %2235 = vmatmul.bf16.gmra.mxu0 %v2161
          %v2236 = vpop.f32.mrf.mxu0
          %v2237 = vadd.f32 %v2224, %v2236
          %v2238 = vpop.f32.mrf.mxu0
          %2239 = vdwg.mxu0
          %2240 = vmatpush.bf16.msra.mxu0 %v2001
          %2241 = vmatpush.bf16.msra.mxu0 %v1993
          %2242 = vmatpush.bf16.msra.mxu0 %v1985
          %2243 = vmatpush.bf16.msra.mxu0 %v1977
          %2244 = vmatpush.bf16.msra.mxu0 %v1969
          %2245 = vmatpush.bf16.msra.mxu0 %v1961
          %2246 = vmatpush.bf16.msra.mxu0 %v1953
          %2247 = vmatpush.bf16.msra.mxu0 %v1945
          %2248 = vmatmul.bf16.gmra.mxu0 %v1616
          %v2249 = vpop.f32.mrf.mxu0
          %v2250 = vadd.f32 %v1611, %v2249
          %v2251 = vpop.f32.mrf.mxu0
          %2252 = vdwg.mxu0
          %2253 = vmatpush.bf16.msra.mxu0 0
          %2254 = vmatpush.bf16.msra.mxu0 0
          %2255 = vmatpush.bf16.msra.mxu0 %v2171
          %2256 = vmatpush.bf16.msra.mxu0 %v2041
          %2257 = vmatpush.bf16.msra.mxu0 %v2033
          %2258 = vmatpush.bf16.msra.mxu0 %v2025
          %2259 = vmatpush.bf16.msra.mxu0 %v2017
          %2260 = vmatpush.bf16.msra.mxu0 %v2009
          %2261 = vmatmul.bf16.gmra.mxu0 %v2161
          %v2262 = vpop.f32.mrf.mxu0
          %v2263 = vadd.f32 %v2250, %v2262
          %v2264 = vpop.f32.mrf.mxu0
          %2265 = vdwg.mxu0
          %2266 = vmatpush.bf16.msra.mxu0 %v2002
          %2267 = vmatpush.bf16.msra.mxu0 %v1994
          %2268 = vmatpush.bf16.msra.mxu0 %v1986
          %2269 = vmatpush.bf16.msra.mxu0 %v1978
          %2270 = vmatpush.bf16.msra.mxu0 %v1970
          %2271 = vmatpush.bf16.msra.mxu0 %v1962
          %2272 = vmatpush.bf16.msra.mxu0 %v1954
          %2273 = vmatpush.bf16.msra.mxu0 %v1946
          %2274 = vmatmul.bf16.gmra.mxu0 %v1616
          %v2275 = vpop.f32.mrf.mxu0
          %v2276 = vadd.f32 %v1611, %v2275
          %v2277 = vpop.f32.mrf.mxu0
          %2278 = vdwg.mxu0
          %2279 = vmatpush.bf16.msra.mxu0 0
          %2280 = vmatpush.bf16.msra.mxu0 0
          %2281 = vmatpush.bf16.msra.mxu0 %v2174
          %2282 = vmatpush.bf16.msra.mxu0 %v2042
          %2283 = vmatpush.bf16.msra.mxu0 %v2034
          %2284 = vmatpush.bf16.msra.mxu0 %v2026
          %2285 = vmatpush.bf16.msra.mxu0 %v2018
          %2286 = vmatpush.bf16.msra.mxu0 %v2010
          %2287 = vmatmul.bf16.gmra.mxu0 %v2161
          %v2288 = vpop.f32.mrf.mxu0
          %v2289 = vadd.f32 %v2276, %v2288
          %v2290 = vpop.f32.mrf.mxu0
          %2291 = vdwg.mxu0
          %2292 = vmatpush.bf16.msra.mxu0 %v2003
          %2293 = vmatpush.bf16.msra.mxu0 %v1995
          %2294 = vmatpush.bf16.msra.mxu0 %v1987
          %2295 = vmatpush.bf16.msra.mxu0 %v1979
          %2296 = vmatpush.bf16.msra.mxu0 %v1971
          %2297 = vmatpush.bf16.msra.mxu0 %v1963
          %2298 = vmatpush.bf16.msra.mxu0 %v1955
          %2299 = vmatpush.bf16.msra.mxu0 %v1947
          %2300 = vmatmul.bf16.gmra.mxu0 %v1616
          %v2301 = vpop.f32.mrf.mxu0
          %v2302 = vadd.f32 %v1611, %v2301
          %v2303 = vpop.f32.mrf.mxu0
          %2304 = vdwg.mxu0
          %2305 = vmatpush.bf16.msra.mxu0 0
          %2306 = vmatpush.bf16.msra.mxu0 0
          %2307 = vmatpush.bf16.msra.mxu0 %v2177
          %2308 = vmatpush.bf16.msra.mxu0 %v2043
          %2309 = vmatpush.bf16.msra.mxu0 %v2035
          %2310 = vmatpush.bf16.msra.mxu0 %v2027
          %2311 = vmatpush.bf16.msra.mxu0 %v2019
          %2312 = vmatpush.bf16.msra.mxu0 %v2011
          %2313 = vmatmul.bf16.gmra.mxu0 %v2161
          %v2314 = vpop.f32.mrf.mxu0
          %v2315 = vadd.f32 %v2302, %v2314
          %v2316 = vpop.f32.mrf.mxu0
          %2317 = vdwg.mxu0
          %2318 = vmatpush.bf16.msra.mxu0 %v2004
          %2319 = vmatpush.bf16.msra.mxu0 %v1996
          %2320 = vmatpush.bf16.msra.mxu0 %v1988
          %2321 = vmatpush.bf16.msra.mxu0 %v1980
          %2322 = vmatpush.bf16.msra.mxu0 %v1972
          %2323 = vmatpush.bf16.msra.mxu0 %v1964
          %2324 = vmatpush.bf16.msra.mxu0 %v1956
          %2325 = vmatpush.bf16.msra.mxu0 %v1948
          %2326 = vmatmul.bf16.gmra.mxu0 %v1616
          %v2327 = vpop.f32.mrf.mxu0
          %v2328 = vadd.f32 %v1611, %v2327
          %v2329 = vpop.f32.mrf.mxu0
          %2330 = vdwg.mxu0
          %2331 = vmatpush.bf16.msra.mxu0 0
          %2332 = vmatpush.bf16.msra.mxu0 0
          %2333 = vmatpush.bf16.msra.mxu0 %v2180
          %2334 = vmatpush.bf16.msra.mxu0 %v2044
          %2335 = vmatpush.bf16.msra.mxu0 %v2036
          %2336 = vmatpush.bf16.msra.mxu0 %v2028
          %2337 = vmatpush.bf16.msra.mxu0 %v2020
          %2338 = vmatpush.bf16.msra.mxu0 %v2012
          %2339 = vmatmul.bf16.gmra.mxu0 %v2161
          %v2340 = vpop.f32.mrf.mxu0
          %v2341 = vadd.f32 %v2328, %v2340
          %v2342 = vpop.f32.mrf.mxu0
          %2343 = vdwg.mxu0
          %2344 = vmatpush.bf16.msra.mxu0 %v2005
          %2345 = vmatpush.bf16.msra.mxu0 %v1997
          %2346 = vmatpush.bf16.msra.mxu0 %v1989
          %2347 = vmatpush.bf16.msra.mxu0 %v1981
          %2348 = vmatpush.bf16.msra.mxu0 %v1973
          %2349 = vmatpush.bf16.msra.mxu0 %v1965
          %2350 = vmatpush.bf16.msra.mxu0 %v1957
          %2351 = vmatpush.bf16.msra.mxu0 %v1949
          %2352 = vmatmul.bf16.gmra.mxu0 %v1616
          %v2353 = vpop.f32.mrf.mxu0
          %v2354 = vadd.f32 %v1611, %v2353
          %v2355 = vpop.f32.mrf.mxu0
          %2356 = vdwg.mxu0
          %2357 = vmatpush.bf16.msra.mxu0 0
          %2358 = vmatpush.bf16.msra.mxu0 0
          %2359 = vmatpush.bf16.msra.mxu0 %v2183
          %2360 = vmatpush.bf16.msra.mxu0 %v2045
          %2361 = vmatpush.bf16.msra.mxu0 %v2037
          %2362 = vmatpush.bf16.msra.mxu0 %v2029
          %2363 = vmatpush.bf16.msra.mxu0 %v2021
          %2364 = vmatpush.bf16.msra.mxu0 %v2013
          %2365 = vmatmul.bf16.gmra.mxu0 %v2161
          %v2366 = vpop.f32.mrf.mxu0
          %v2367 = vadd.f32 %v2354, %v2366
          %v2368 = vpop.f32.mrf.mxu0
          %2369 = vdwg.mxu0
          %2370 = vmatpush.bf16.msra.mxu0 %v2006
          %2371 = vmatpush.bf16.msra.mxu0 %v1998
          %2372 = vmatpush.bf16.msra.mxu0 %v1990
          %2373 = vmatpush.bf16.msra.mxu0 %v1982
          %2374 = vmatpush.bf16.msra.mxu0 %v1974
          %2375 = vmatpush.bf16.msra.mxu0 %v1966
          %2376 = vmatpush.bf16.msra.mxu0 %v1958
          %2377 = vmatpush.bf16.msra.mxu0 %v1950
          %2378 = vmatmul.bf16.gmra.mxu0 %v1616
          %v2379 = vpop.f32.mrf.mxu0
          %v2380 = vadd.f32 %v1611, %v2379
          %v2381 = vpop.f32.mrf.mxu0
          %2382 = vdwg.mxu0
          %2383 = vmatpush.bf16.msra.mxu0 0
          %2384 = vmatpush.bf16.msra.mxu0 0
          %2385 = vmatpush.bf16.msra.mxu0 %v2186
          %2386 = vmatpush.bf16.msra.mxu0 %v2046
          %2387 = vmatpush.bf16.msra.mxu0 %v2038
          %2388 = vmatpush.bf16.msra.mxu0 %v2030
          %2389 = vmatpush.bf16.msra.mxu0 %v2022
          %2390 = vmatpush.bf16.msra.mxu0 %v2014
          %2391 = vmatmul.bf16.gmra.mxu0 %v2161
          %v2392 = vpop.f32.mrf.mxu0
          %v2393 = vadd.f32 %v2380, %v2392
          %v2394 = vpop.f32.mrf.mxu0
          %2395 = vdwg.mxu0
          %vm2396 = vcmp.ge.f32.partialorder %v2211, 0.0
          %vm2397 = vcmp.ge.f32.partialorder %v2237, 0.0
          %vm2398 = vcmp.ge.f32.partialorder %v2263, 0.0
          %vm2399 = vcmp.ge.f32.partialorder %v2289, 0.0
          %vm2400 = vcmp.ge.f32.partialorder %v2315, 0.0
          %vm2401 = vcmp.ge.f32.partialorder %v2341, 0.0
          %vm2402 = vcmp.ge.f32.partialorder %v2367, 0.0
          %vm2403 = vcmp.ge.f32.partialorder %v2393, 0.0
          %v2404 = vmul.f32 %v2211, 0.2
          %v2405 = vmul.f32 %v2237, 0.2
          %v2406 = vmul.f32 %v2263, 0.2
          %v2407 = vmul.f32 %v2289, 0.2
          %v2408 = vmul.f32 %v2315, 0.2
          %v2409 = vmul.f32 %v2341, 0.2
          %v2410 = vmul.f32 %v2367, 0.2
          %v2411 = vmul.f32 %v2393, 0.2
          %v2412 = vsel %vm2396, %v2211, %v2404
          %v2413 = vsel %vm2397, %v2237, %v2405
          %v2414 = vsel %vm2398, %v2263, %v2406
          %v2415 = vsel %vm2399, %v2289, %v2407
          %v2416 = vsel %vm2400, %v2315, %v2408
          %v2417 = vsel %vm2401, %v2341, %v2409
          %v2418 = vsel %vm2402, %v2367, %v2410
          %v2419 = vsel %vm2403, %v2393, %v2411
          %v2420 = vld [vmem:[%s0] sm:$0xff]
          %v2422 = vperm.slane %v2420, 0
          %v2423 = vperm.slane %v2420, 1
          %v2424 = vperm.slane %v2420, 2
          %v2425 = vperm.slane %v2420, 3
          %v2426 = vperm.slane %v2420, 4
          %v2427 = vperm.slane %v2420, 5
          %v2428 = vperm.slane %v2420, 6
          %v2429 = vperm.slane %v2420, 7
          %v2438 = vmul.f32 %v2412, %v2422
          %v2439 = vmul.f32 %v2413, %v2423
          %v2440 = vmul.f32 %v2414, %v2424
          %v2441 = vmul.f32 %v2415, %v2425
          %v2442 = vmul.f32 %v2416, %v2426
          %v2443 = vmul.f32 %v2417, %v2427
          %v2444 = vmul.f32 %v2418, %v2428
          %v2445 = vmul.f32 %v2419, %v2429
          %vm2446 = vcmask 588804
          %vm2447 = vmor %vm2446, %vm2163
          %2448 = vst.msk [vmem:[#allocation2] sm:$0xff] %vm2447, 0
          %vm2449 = vcmask 1044032
          %vm2450 = vcmask 1047556
          %vm2451 = vmor %vm2450, %vm2449
          %2452 = vst.msk [vmem:[#allocation2 + $0x24] sm:$0xff] %vm2451, 0
          %vm2453 = vcmask 125952
          %2454 = vst.msk [vmem:[#allocation2 + $0x2c] sm:$0xf] %vm2453, 0
          %v2455 = vpack.c.bf16 %v2439, %v2438
          %v2456 = vpack.c.bf16 %v2441, %v2440
          %v2457 = vpack.c.bf16 %v2443, %v2442
          %v2458 = vpack.c.bf16 %v2445, %v2444
          %2463 = vrot.lane.b32.xlu0 %v2455, 72
          %v2464 = vpop.permute.xlu0 %2463
          %2465 = vrot.lane.b32.xlu0 %v2456, 72
          %v2466 = vpop.permute.xlu0 %2465
          %2467 = vrot.lane.b32.xlu0 %v2457, 72
          %v2468 = vpop.permute.xlu0 %2467
          %2469 = vrot.lane.b32.xlu0 %v2458, 72
          %v2470 = vpop.permute.xlu0 %2469
          %v2471 = vrot.slane %v2464, 4
          %v2472 = vrot.slane %v2466, 4
          %v2473 = vrot.slane %v2468, 4
          %v2474 = vrot.slane %v2470, 4
          %vm2475 = vcmask 588800
          %v2476 = vsel %vm2475, %v2471, %v2464
          %v2477 = vsel %vm388, %v2471, %v2472
          %v2478 = vsel %vm2475, %v2477, %v2466
          %v2479 = vsel %vm388, %v2472, %v2473
          %v2480 = vsel %vm2475, %v2479, %v2468
          %v2481 = vsel %vm388, %v2473, %v2474
          %v2482 = vsel %vm2475, %v2481, %v2470
          %2488 = vst.msk [vmem:[#allocation2 + $0x4] sm:$0xff] %vm2451, %v2476
          %2489 = vst [vmem:[#allocation2 + $0xc] sm:$0xff] %v2478
          %2490 = vst [vmem:[#allocation2 + $0x14] sm:$0xff] %v2480
          %2491 = vst [vmem:[#allocation2 + $0x1c] sm:$0xff] %v2482
          %vm2492 = vcmask 584704
          %2493 = vst.msk [vmem:[#allocation2 + $0x24] sm:$0xf] %vm2492, %v2474
          %v2494 = vld [vmem:[#allocation2] sm:$0xff]
          %v2495 = vld [vmem:[#allocation2 + $0x8] sm:$0xff]
          %v2496 = vld [vmem:[#allocation2 + $0x10] sm:$0xff]
          %v2497 = vld [vmem:[#allocation2 + $0x18] sm:$0xff]
          %v2498 = vld [vmem:[#allocation2 + $0x20] sm:$0xf]
          %2504 = vrot.lane.b32.xlu0 %v2494, 39
          %v2505 = vpop.permute.xlu0 %2504
          %2506 = vrot.lane.b32.xlu0 %v2495, 39
          %v2507 = vpop.permute.xlu0 %2506
          %2508 = vrot.lane.b32.xlu0 %v2496, 39
          %v2509 = vpop.permute.xlu0 %2508
          %2510 = vrot.lane.b32.xlu0 %v2497, 39
          %v2511 = vpop.permute.xlu0 %2510
          %2512 = vrot.lane.b32.xlu0 %v2498, 39
          %v2513 = vpop.permute.xlu0 %2512
          %v2514 = vrot.slane %v2505, 4
          %v2515 = vrot.slane %v2507, 4
          %v2516 = vrot.slane %v2509, 4
          %v2517 = vrot.slane %v2511, 4
          %v2518 = vrot.slane %v2513, 4
          %v2519 = vsel %vm388, %v2514, %v2515
          %v2520 = vsel %vm390, %v2505, %v2519
          %v2521 = vsel %vm388, %v2515, %v2516
          %v2522 = vsel %vm390, %v2507, %v2521
          %v2523 = vsel %vm388, %v2516, %v2517
          %v2524 = vsel %vm390, %v2509, %v2523
          %v2525 = vsel %vm388, %v2517, %v2518
          %v2526 = vsel %vm390, %v2511, %v2525
          %2531 = vst [vmem:[#allocation3] sm:$0xff] %v2520
          %2532 = vst [vmem:[#allocation3 + $0x8] sm:$0xff] %v2522
          %2533 = vst [vmem:[#allocation3 + $0x10] sm:$0xff] %v2524
          %2534 = vst [vmem:[#allocation3 + $0x18] sm:$0xff] %v2526
          %v2535 = vld [vmem:[#allocation2] sm:$0xff]
          %v2536 = vld [vmem:[#allocation2 + $0x8] sm:$0xff]
          %v2537 = vld [vmem:[#allocation2 + $0x10] sm:$0xff]
          %v2538 = vld [vmem:[#allocation2 + $0x18] sm:$0xff]
          %v2539 = vld [vmem:[#allocation2 + $0x20] sm:$0xf]
          %2545 = vrot.lane.b32.xlu0 %v2535, 38
          %v2546 = vpop.permute.xlu0 %2545
          %2547 = vrot.lane.b32.xlu0 %v2536, 38
          %v2548 = vpop.permute.xlu0 %2547
          %2549 = vrot.lane.b32.xlu0 %v2537, 38
          %v2550 = vpop.permute.xlu0 %2549
          %2551 = vrot.lane.b32.xlu0 %v2538, 38
          %v2552 = vpop.permute.xlu0 %2551
          %2553 = vrot.lane.b32.xlu0 %v2539, 38
          %v2554 = vpop.permute.xlu0 %2553
          %v2555 = vrot.slane %v2546, 4
          %v2556 = vrot.slane %v2548, 4
          %v2557 = vrot.slane %v2550, 4
          %v2558 = vrot.slane %v2552, 4
          %v2559 = vrot.slane %v2554, 4
          %v2560 = vsel %vm388, %v2555, %v2556
          %v2561 = vsel %vm432, %v2546, %v2560
          %v2562 = vsel %vm388, %v2556, %v2557
          %v2563 = vsel %vm432, %v2548, %v2562
          %v2564 = vsel %vm388, %v2557, %v2558
          %v2565 = vsel %vm432, %v2550, %v2564
          %v2566 = vsel %vm388, %v2558, %v2559
          %v2567 = vsel %vm432, %v2552, %v2566
          %2572 = vst [vmem:[#allocation3 + $0x20] sm:$0xff] %v2561
          %2573 = vst [vmem:[#allocation3 + $0x28] sm:$0xff] %v2563
          %2574 = vst [vmem:[#allocation3 + $0x30] sm:$0xff] %v2565
          %2575 = vst [vmem:[#allocation3 + $0x38] sm:$0xff] %v2567
          %v2576 = vld [vmem:[#allocation2] sm:$0xff]
          %v2577 = vld [vmem:[#allocation2 + $0x8] sm:$0xff]
          %v2578 = vld [vmem:[#allocation2 + $0x10] sm:$0xff]
          %v2579 = vld [vmem:[#allocation2 + $0x18] sm:$0xff]
          %v2580 = vld [vmem:[#allocation2 + $0x20] sm:$0xf]
          %2586 = vrot.lane.b32.xlu0 %v2576, 37
          %v2587 = vpop.permute.xlu0 %2586
          %2588 = vrot.lane.b32.xlu0 %v2577, 37
          %v2589 = vpop.permute.xlu0 %2588
          %2590 = vrot.lane.b32.xlu0 %v2578, 37
          %v2591 = vpop.permute.xlu0 %2590
          %2592 = vrot.lane.b32.xlu0 %v2579, 37
          %v2593 = vpop.permute.xlu0 %2592
          %2594 = vrot.lane.b32.xlu0 %v2580, 37
          %v2595 = vpop.permute.xlu0 %2594
          %v2596 = vrot.slane %v2587, 4
          %v2597 = vrot.slane %v2589, 4
          %v2598 = vrot.slane %v2591, 4
          %v2599 = vrot.slane %v2593, 4
          %v2600 = vrot.slane %v2595, 4
          %v2601 = vsel %vm388, %v2596, %v2597
          %v2602 = vsel %vm474, %v2587, %v2601
          %v2603 = vsel %vm388, %v2597, %v2598
          %v2604 = vsel %vm474, %v2589, %v2603
          %v2605 = vsel %vm388, %v2598, %v2599
          %v2606 = vsel %vm474, %v2591, %v2605
          %v2607 = vsel %vm388, %v2599, %v2600
          %v2608 = vsel %vm474, %v2593, %v2607
          %2613 = vst [vmem:[#allocation3 + $0x40] sm:$0xff] %v2602
          %2614 = vst [vmem:[#allocation3 + $0x48] sm:$0xff] %v2604
          %2615 = vst [vmem:[#allocation3 + $0x50] sm:$0xff] %v2606
          %2616 = vst [vmem:[#allocation3 + $0x58] sm:$0xff] %v2608
          %v2617 = vld [vmem:[#allocation2] sm:$0xff]
          %v2618 = vld [vmem:[#allocation2 + $0x8] sm:$0xff]
          %v2619 = vld [vmem:[#allocation2 + $0x10] sm:$0xff]
          %v2620 = vld [vmem:[#allocation2 + $0x18] sm:$0xff]
          %v2621 = vld [vmem:[#allocation2 + $0x20] sm:$0xf]
          %2627 = vrot.lane.b32.xlu0 %v2617, 29
          %v2628 = vpop.permute.xlu0 %2627
          %2629 = vrot.lane.b32.xlu0 %v2618, 29
          %v2630 = vpop.permute.xlu0 %2629
          %2631 = vrot.lane.b32.xlu0 %v2619, 29
          %v2632 = vpop.permute.xlu0 %2631
          %2633 = vrot.lane.b32.xlu0 %v2620, 29
          %v2634 = vpop.permute.xlu0 %2633
          %2635 = vrot.lane.b32.xlu0 %v2621, 29
          %v2636 = vpop.permute.xlu0 %2635
          %v2637 = vrot.slane %v2628, 4
          %v2638 = vrot.slane %v2630, 4
          %v2639 = vrot.slane %v2632, 4
          %v2640 = vrot.slane %v2634, 4
          %v2641 = vrot.slane %v2636, 4
          %v2642 = vsel %vm388, %v2637, %v2638
          %v2643 = vsel %vm516, %v2628, %v2642
          %v2644 = vsel %vm388, %v2638, %v2639
          %v2645 = vsel %vm516, %v2630, %v2644
          %v2646 = vsel %vm388, %v2639, %v2640
          %v2647 = vsel %vm516, %v2632, %v2646
          %v2648 = vsel %vm388, %v2640, %v2641
          %v2649 = vsel %vm516, %v2634, %v2648
          %2654 = vst [vmem:[#allocation3 + $0x60] sm:$0xff] %v2643
          %2655 = vst [vmem:[#allocation3 + $0x68] sm:$0xff] %v2645
          %2656 = vst [vmem:[#allocation3 + $0x70] sm:$0xff] %v2647
          %2657 = vst [vmem:[#allocation3 + $0x78] sm:$0xff] %v2649
          %v2658 = vld [vmem:[#allocation2] sm:$0xff]
          %v2659 = vld [vmem:[#allocation2 + $0x8] sm:$0xff]
          %v2660 = vld [vmem:[#allocation2 + $0x10] sm:$0xff]
          %v2661 = vld [vmem:[#allocation2 + $0x18] sm:$0xff]
          %v2662 = vld [vmem:[#allocation2 + $0x20] sm:$0xf]
          %2668 = vrot.lane.b32.xlu0 %v2658, 28
          %v2669 = vpop.permute.xlu0 %2668
          %2670 = vrot.lane.b32.xlu0 %v2659, 28
          %v2671 = vpop.permute.xlu0 %2670
          %2672 = vrot.lane.b32.xlu0 %v2660, 28
          %v2673 = vpop.permute.xlu0 %2672
          %2674 = vrot.lane.b32.xlu0 %v2661, 28
          %v2675 = vpop.permute.xlu0 %2674
          %2676 = vrot.lane.b32.xlu0 %v2662, 28
          %v2677 = vpop.permute.xlu0 %2676
          %v2678 = vrot.slane %v2669, 4
          %v2679 = vrot.slane %v2671, 4
          %v2680 = vrot.slane %v2673, 4
          %v2681 = vrot.slane %v2675, 4
          %v2682 = vrot.slane %v2677, 4
          %v2683 = vsel %vm388, %v2678, %v2679
          %v2684 = vsel %vm558, %v2669, %v2683
          %v2685 = vsel %vm388, %v2679, %v2680
          %v2686 = vsel %vm558, %v2671, %v2685
          %v2687 = vsel %vm388, %v2680, %v2681
          %v2688 = vsel %vm558, %v2673, %v2687
          %v2689 = vsel %vm388, %v2681, %v2682
          %v2690 = vsel %vm558, %v2675, %v2689
          %2695 = vst [vmem:[#allocation3 + $0x80] sm:$0xff] %v2684
          %2696 = vst [vmem:[#allocation3 + $0x88] sm:$0xff] %v2686
          %2697 = vst [vmem:[#allocation3 + $0x90] sm:$0xff] %v2688
          %2698 = vst [vmem:[#allocation3 + $0x98] sm:$0xff] %v2690
          %v2699 = vld [vmem:[#allocation2] sm:$0xff]
          %v2700 = vld [vmem:[#allocation2 + $0x8] sm:$0xff]
          %v2701 = vld [vmem:[#allocation2 + $0x10] sm:$0xff]
          %v2702 = vld [vmem:[#allocation2 + $0x18] sm:$0xff]
          %v2703 = vld [vmem:[#allocation2 + $0x20] sm:$0xf]
          %2709 = vrot.lane.b32.xlu0 %v2699, 27
          %v2710 = vpop.permute.xlu0 %2709
          %2711 = vrot.lane.b32.xlu0 %v2700, 27
          %v2712 = vpop.permute.xlu0 %2711
          %2713 = vrot.lane.b32.xlu0 %v2701, 27
          %v2714 = vpop.permute.xlu0 %2713
          %2715 = vrot.lane.b32.xlu0 %v2702, 27
          %v2716 = vpop.permute.xlu0 %2715
          %2717 = vrot.lane.b32.xlu0 %v2703, 27
          %v2718 = vpop.permute.xlu0 %2717
          %v2719 = vrot.slane %v2710, 4
          %v2720 = vrot.slane %v2712, 4
          %v2721 = vrot.slane %v2714, 4
          %v2722 = vrot.slane %v2716, 4
          %v2723 = vrot.slane %v2718, 4
          %v2724 = vsel %vm388, %v2719, %v2720
          %v2725 = vsel %vm600, %v2710, %v2724
          %v2726 = vsel %vm388, %v2720, %v2721
          %v2727 = vsel %vm600, %v2712, %v2726
          %v2728 = vsel %vm388, %v2721, %v2722
          %v2729 = vsel %vm600, %v2714, %v2728
          %v2730 = vsel %vm388, %v2722, %v2723
          %v2731 = vsel %vm600, %v2716, %v2730
          %2736 = vst [vmem:[#allocation3 + $0xa0] sm:$0xff] %v2725
          %2737 = vst [vmem:[#allocation3 + $0xa8] sm:$0xff] %v2727
          %2738 = vst [vmem:[#allocation3 + $0xb0] sm:$0xff] %v2729
          %2739 = vst [vmem:[#allocation3 + $0xb8] sm:$0xff] %v2731
          %v2740 = vld [vmem:[#allocation2] sm:$0xff]
          %v2741 = vld [vmem:[#allocation2 + $0x8] sm:$0xff]
          %v2742 = vld [vmem:[#allocation2 + $0x10] sm:$0xff]
          %v2743 = vld [vmem:[#allocation2 + $0x18] sm:$0xff]
          %v2744 = vld [vmem:[#allocation2 + $0x20] sm:$0xf]
          %2750 = vrot.lane.b32.xlu0 %v2740, 19
          %v2751 = vpop.permute.xlu0 %2750
          %2752 = vrot.lane.b32.xlu0 %v2741, 19
          %v2753 = vpop.permute.xlu0 %2752
          %2754 = vrot.lane.b32.xlu0 %v2742, 19
          %v2755 = vpop.permute.xlu0 %2754
          %2756 = vrot.lane.b32.xlu0 %v2743, 19
          %v2757 = vpop.permute.xlu0 %2756
          %2758 = vrot.lane.b32.xlu0 %v2744, 19
          %v2759 = vpop.permute.xlu0 %2758
          %v2760 = vrot.slane %v2751, 4
          %v2761 = vrot.slane %v2753, 4
          %v2762 = vrot.slane %v2755, 4
          %v2763 = vrot.slane %v2757, 4
          %v2764 = vrot.slane %v2759, 4
          %v2765 = vsel %vm388, %v2760, %v2761
          %v2766 = vsel %vm642, %v2751, %v2765
          %v2767 = vsel %vm388, %v2761, %v2762
          %v2768 = vsel %vm642, %v2753, %v2767
          %v2769 = vsel %vm388, %v2762, %v2763
          %v2770 = vsel %vm642, %v2755, %v2769
          %v2771 = vsel %vm388, %v2763, %v2764
          %v2772 = vsel %vm642, %v2757, %v2771
          %2777 = vst [vmem:[#allocation3 + $0xc0] sm:$0xff] %v2766
          %2778 = vst [vmem:[#allocation3 + $0xc8] sm:$0xff] %v2768
          %2779 = vst [vmem:[#allocation3 + $0xd0] sm:$0xff] %v2770
          %2780 = vst [vmem:[#allocation3 + $0xd8] sm:$0xff] %v2772
          %v2781 = vld [vmem:[#allocation2] sm:$0xff]
          %v2782 = vld [vmem:[#allocation2 + $0x8] sm:$0xff]
          %v2783 = vld [vmem:[#allocation2 + $0x10] sm:$0xff]
          %v2784 = vld [vmem:[#allocation2 + $0x18] sm:$0xff]
          %v2785 = vld [vmem:[#allocation2 + $0x20] sm:$0xf]
          %2791 = vrot.lane.b32.xlu0 %v2781, 18
          %v2792 = vpop.permute.xlu0 %2791
          %2793 = vrot.lane.b32.xlu0 %v2782, 18
          %v2794 = vpop.permute.xlu0 %2793
          %2795 = vrot.lane.b32.xlu0 %v2783, 18
          %v2796 = vpop.permute.xlu0 %2795
          %2797 = vrot.lane.b32.xlu0 %v2784, 18
          %v2798 = vpop.permute.xlu0 %2797
          %2799 = vrot.lane.b32.xlu0 %v2785, 18
          %v2800 = vpop.permute.xlu0 %2799
          %v2801 = vrot.slane %v2792, 4
          %v2802 = vrot.slane %v2794, 4
          %v2803 = vrot.slane %v2796, 4
          %v2804 = vrot.slane %v2798, 4
          %v2805 = vrot.slane %v2800, 4
          %v2806 = vsel %vm388, %v2801, %v2802
          %v2807 = vsel %vm684, %v2792, %v2806
          %v2808 = vsel %vm388, %v2802, %v2803
          %v2809 = vsel %vm684, %v2794, %v2808
          %v2810 = vsel %vm388, %v2803, %v2804
          %v2811 = vsel %vm684, %v2796, %v2810
          %v2812 = vsel %vm388, %v2804, %v2805
          %v2813 = vsel %vm684, %v2798, %v2812
          %2818 = vst [vmem:[#allocation3 + $0xe0] sm:$0xff] %v2807
          %2819 = vst [vmem:[#allocation3 + $0xe8] sm:$0xff] %v2809
          %2820 = vst [vmem:[#allocation3 + $0xf0] sm:$0xff] %v2811
          %2821 = vst [vmem:[#allocation3 + $0xf8] sm:$0xff] %v2813
          %v2822 = vld [vmem:[#allocation2] sm:$0xff]
          %v2823 = vld [vmem:[#allocation2 + $0x8] sm:$0xff]
          %v2824 = vld [vmem:[#allocation2 + $0x10] sm:$0xff]
          %v2825 = vld [vmem:[#allocation2 + $0x18] sm:$0xff]
          %v2826 = vld [vmem:[#allocation2 + $0x20] sm:$0xf]
          %2832 = vrot.lane.b32.xlu0 %v2822, 17
          %v2833 = vpop.permute.xlu0 %2832
          %2834 = vrot.lane.b32.xlu0 %v2823, 17
          %v2835 = vpop.permute.xlu0 %2834
          %2836 = vrot.lane.b32.xlu0 %v2824, 17
          %v2837 = vpop.permute.xlu0 %2836
          %2838 = vrot.lane.b32.xlu0 %v2825, 17
          %v2839 = vpop.permute.xlu0 %2838
          %2840 = vrot.lane.b32.xlu0 %v2826, 17
          %v2841 = vpop.permute.xlu0 %2840
          %v2842 = vrot.slane %v2833, 4
          %v2843 = vrot.slane %v2835, 4
          %v2844 = vrot.slane %v2837, 4
          %v2845 = vrot.slane %v2839, 4
          %v2846 = vrot.slane %v2841, 4
          %v2847 = vsel %vm388, %v2842, %v2843
          %v2848 = vsel %vm726, %v2833, %v2847
          %v2849 = vsel %vm388, %v2843, %v2844
          %v2850 = vsel %vm726, %v2835, %v2849
          %v2851 = vsel %vm388, %v2844, %v2845
          %v2852 = vsel %vm726, %v2837, %v2851
          %v2853 = vsel %vm388, %v2845, %v2846
          %v2854 = vsel %vm726, %v2839, %v2853
          %2859 = vst [vmem:[#allocation3 + $0x100] sm:$0xff] %v2848
          %2860 = vst [vmem:[#allocation3 + $0x108] sm:$0xff] %v2850
          %2861 = vst [vmem:[#allocation3 + $0x110] sm:$0xff] %v2852
          %2862 = vst [vmem:[#allocation3 + $0x118] sm:$0xff] %v2854
          %v2863 = vld [vmem:[#allocation2 + $0x4] sm:$0xff]
          %v2864 = vld [vmem:[#allocation2 + $0xc] sm:$0xff]
          %v2865 = vld [vmem:[#allocation2 + $0x14] sm:$0xff]
          %v2866 = vld [vmem:[#allocation2 + $0x1c] sm:$0xff]
          %v2867 = vld [vmem:[#allocation2 + $0x24] sm:$0xf]
          %2873 = vrot.lane.b32.xlu0 %v2863, 67
          %v2874 = vpop.permute.xlu0 %2873
          %2875 = vrot.lane.b32.xlu0 %v2864, 67
          %v2876 = vpop.permute.xlu0 %2875
          %2877 = vrot.lane.b32.xlu0 %v2865, 67
          %v2878 = vpop.permute.xlu0 %2877
          %2879 = vrot.lane.b32.xlu0 %v2866, 67
          %v2880 = vpop.permute.xlu0 %2879
          %2881 = vrot.lane.b32.xlu0 %v2867, 67
          %v2882 = vpop.permute.xlu0 %2881
          %v2883 = vrot.slane %v2874, 4
          %v2884 = vrot.slane %v2876, 4
          %v2885 = vrot.slane %v2878, 4
          %v2886 = vrot.slane %v2880, 4
          %v2887 = vrot.slane %v2882, 4
          %v2888 = vsel %vm388, %v2883, %v2884
          %v2889 = vsel %vm768, %v2874, %v2888
          %v2890 = vsel %vm388, %v2884, %v2885
          %v2891 = vsel %vm768, %v2876, %v2890
          %v2892 = vsel %vm388, %v2885, %v2886
          %v2893 = vsel %vm768, %v2878, %v2892
          %v2894 = vsel %vm388, %v2886, %v2887
          %v2895 = vsel %vm768, %v2880, %v2894
          %2900 = vst [vmem:[#allocation3 + $0x120] sm:$0xff] %v2889
          %2901 = vst [vmem:[#allocation3 + $0x128] sm:$0xff] %v2891
          %2902 = vst [vmem:[#allocation3 + $0x130] sm:$0xff] %v2893
          %2903 = vst [vmem:[#allocation3 + $0x138] sm:$0xff] %v2895
          %v2904 = vld [vmem:[#allocation2 + $0x4] sm:$0xff]
          %v2905 = vld [vmem:[#allocation2 + $0xc] sm:$0xff]
          %v2906 = vld [vmem:[#allocation2 + $0x14] sm:$0xff]
          %v2907 = vld [vmem:[#allocation2 + $0x1c] sm:$0xff]
          %v2908 = vld [vmem:[#allocation2 + $0x24] sm:$0xf]
          %2914 = vrot.lane.b32.xlu0 %v2904, 66
          %v2915 = vpop.permute.xlu0 %2914
          %2916 = vrot.lane.b32.xlu0 %v2905, 66
          %v2917 = vpop.permute.xlu0 %2916
          %2918 = vrot.lane.b32.xlu0 %v2906, 66
          %v2919 = vpop.permute.xlu0 %2918
          %2920 = vrot.lane.b32.xlu0 %v2907, 66
          %v2921 = vpop.permute.xlu0 %2920
          %2922 = vrot.lane.b32.xlu0 %v2908, 66
          %v2923 = vpop.permute.xlu0 %2922
          %v2924 = vrot.slane %v2915, 4
          %v2925 = vrot.slane %v2917, 4
          %v2926 = vrot.slane %v2919, 4
          %v2927 = vrot.slane %v2921, 4
          %v2928 = vrot.slane %v2923, 4
          %v2929 = vsel %vm388, %v2924, %v2925
          %v2930 = vsel %vm810, %v2915, %v2929
          %v2931 = vsel %vm388, %v2925, %v2926
          %v2932 = vsel %vm810, %v2917, %v2931
          %v2933 = vsel %vm388, %v2926, %v2927
          %v2934 = vsel %vm810, %v2919, %v2933
          %v2935 = vsel %vm388, %v2927, %v2928
          %v2936 = vsel %vm810, %v2921, %v2935
          %2941 = vst [vmem:[#allocation3 + $0x140] sm:$0xff] %v2930
          %2942 = vst [vmem:[#allocation3 + $0x148] sm:$0xff] %v2932
          %2943 = vst [vmem:[#allocation3 + $0x150] sm:$0xff] %v2934
          %2944 = vst [vmem:[#allocation3 + $0x158] sm:$0xff] %v2936
          %v2945 = vld [vmem:[#allocation2 + $0x4] sm:$0xff]
          %v2946 = vld [vmem:[#allocation2 + $0xc] sm:$0xff]
          %v2947 = vld [vmem:[#allocation2 + $0x14] sm:$0xff]
          %v2948 = vld [vmem:[#allocation2 + $0x1c] sm:$0xff]
          %v2949 = vld [vmem:[#allocation2 + $0x24] sm:$0xf]
          %2955 = vrot.lane.b32.xlu0 %v2945, 65
          %v2956 = vpop.permute.xlu0 %2955
          %2957 = vrot.lane.b32.xlu0 %v2946, 65
          %v2958 = vpop.permute.xlu0 %2957
          %2959 = vrot.lane.b32.xlu0 %v2947, 65
          %v2960 = vpop.permute.xlu0 %2959
          %2961 = vrot.lane.b32.xlu0 %v2948, 65
          %v2962 = vpop.permute.xlu0 %2961
          %2963 = vrot.lane.b32.xlu0 %v2949, 65
          %v2964 = vpop.permute.xlu0 %2963
          %v2965 = vrot.slane %v2956, 4
          %v2966 = vrot.slane %v2958, 4
          %v2967 = vrot.slane %v2960, 4
          %v2968 = vrot.slane %v2962, 4
          %v2969 = vrot.slane %v2964, 4
          %v2970 = vsel %vm388, %v2965, %v2966
          %v2971 = vsel %vm852, %v2956, %v2970
          %v2972 = vsel %vm388, %v2966, %v2967
          %v2973 = vsel %vm852, %v2958, %v2972
          %v2974 = vsel %vm388, %v2967, %v2968
          %v2975 = vsel %vm852, %v2960, %v2974
          %v2976 = vsel %vm388, %v2968, %v2969
          %v2977 = vsel %vm852, %v2962, %v2976
          %2982 = vst [vmem:[#allocation3 + $0x160] sm:$0xff] %v2971
          %2983 = vst [vmem:[#allocation3 + $0x168] sm:$0xff] %v2973
          %2984 = vst [vmem:[#allocation3 + $0x170] sm:$0xff] %v2975
          %2985 = vst [vmem:[#allocation3 + $0x178] sm:$0xff] %v2977
          %v2986 = vld [vmem:[#allocation2 + $0x4] sm:$0xff]
          %v2987 = vld [vmem:[#allocation2 + $0xc] sm:$0xff]
          %v2988 = vld [vmem:[#allocation2 + $0x14] sm:$0xff]
          %v2989 = vld [vmem:[#allocation2 + $0x1c] sm:$0xff]
          %v2990 = vld [vmem:[#allocation2 + $0x24] sm:$0xf]
          %2996 = vrot.lane.b32.xlu0 %v2986, 57
          %v2997 = vpop.permute.xlu0 %2996
          %2998 = vrot.lane.b32.xlu0 %v2987, 57
          %v2999 = vpop.permute.xlu0 %2998
          %3000 = vrot.lane.b32.xlu0 %v2988, 57
          %v3001 = vpop.permute.xlu0 %3000
          %3002 = vrot.lane.b32.xlu0 %v2989, 57
          %v3003 = vpop.permute.xlu0 %3002
          %3004 = vrot.lane.b32.xlu0 %v2990, 57
          %v3005 = vpop.permute.xlu0 %3004
          %v3006 = vrot.slane %v2997, 4
          %v3007 = vrot.slane %v2999, 4
          %v3008 = vrot.slane %v3001, 4
          %v3009 = vrot.slane %v3003, 4
          %v3010 = vrot.slane %v3005, 4
          %v3011 = vsel %vm388, %v3006, %v3007
          %v3012 = vsel %vm894, %v2997, %v3011
          %v3013 = vsel %vm388, %v3007, %v3008
          %v3014 = vsel %vm894, %v2999, %v3013
          %v3015 = vsel %vm388, %v3008, %v3009
          %v3016 = vsel %vm894, %v3001, %v3015
          %v3017 = vsel %vm388, %v3009, %v3010
          %v3018 = vsel %vm894, %v3003, %v3017
          %3023 = vst [vmem:[#allocation3 + $0x180] sm:$0xff] %v3012
          %3024 = vst [vmem:[#allocation3 + $0x188] sm:$0xff] %v3014
          %3025 = vst [vmem:[#allocation3 + $0x190] sm:$0xff] %v3016
          %3026 = vst [vmem:[#allocation3 + $0x198] sm:$0xff] %v3018
          %v3027 = vld [vmem:[#allocation2 + $0x4] sm:$0xff]
          %v3028 = vld [vmem:[#allocation2 + $0xc] sm:$0xff]
          %v3029 = vld [vmem:[#allocation2 + $0x14] sm:$0xff]
          %v3030 = vld [vmem:[#allocation2 + $0x1c] sm:$0xff]
          %v3031 = vld [vmem:[#allocation2 + $0x24] sm:$0xf]
          %3037 = vrot.lane.b32.xlu0 %v3027, 56
          %v3038 = vpop.permute.xlu0 %3037
          %3039 = vrot.lane.b32.xlu0 %v3028, 56
          %v3040 = vpop.permute.xlu0 %3039
          %3041 = vrot.lane.b32.xlu0 %v3029, 56
          %v3042 = vpop.permute.xlu0 %3041
          %3043 = vrot.lane.b32.xlu0 %v3030, 56
          %v3044 = vpop.permute.xlu0 %3043
          %3045 = vrot.lane.b32.xlu0 %v3031, 56
          %v3046 = vpop.permute.xlu0 %3045
          %v3047 = vrot.slane %v3038, 4
          %v3048 = vrot.slane %v3040, 4
          %v3049 = vrot.slane %v3042, 4
          %v3050 = vrot.slane %v3044, 4
          %v3051 = vrot.slane %v3046, 4
          %v3052 = vsel %vm388, %v3047, %v3048
          %v3053 = vsel %vm936, %v3038, %v3052
          %v3054 = vsel %vm388, %v3048, %v3049
          %v3055 = vsel %vm936, %v3040, %v3054
          %v3056 = vsel %vm388, %v3049, %v3050
          %v3057 = vsel %vm936, %v3042, %v3056
          %v3058 = vsel %vm388, %v3050, %v3051
          %v3059 = vsel %vm936, %v3044, %v3058
          %3064 = vst [vmem:[#allocation3 + $0x1a0] sm:$0xff] %v3053
          %3065 = vst [vmem:[#allocation3 + $0x1a8] sm:$0xff] %v3055
          %3066 = vst [vmem:[#allocation3 + $0x1b0] sm:$0xff] %v3057
          %3067 = vst [vmem:[#allocation3 + $0x1b8] sm:$0xff] %v3059
          %v3068 = vld [vmem:[#allocation2 + $0x4] sm:$0xff]
          %v3069 = vld [vmem:[#allocation2 + $0xc] sm:$0xff]
          %v3070 = vld [vmem:[#allocation2 + $0x14] sm:$0xff]
          %v3071 = vld [vmem:[#allocation2 + $0x1c] sm:$0xff]
          %v3072 = vld [vmem:[#allocation2 + $0x24] sm:$0xf]
          %3078 = vrot.lane.b32.xlu0 %v3068, 55
          %v3079 = vpop.permute.xlu0 %3078
          %3080 = vrot.lane.b32.xlu0 %v3069, 55
          %v3081 = vpop.permute.xlu0 %3080
          %3082 = vrot.lane.b32.xlu0 %v3070, 55
          %v3083 = vpop.permute.xlu0 %3082
          %3084 = vrot.lane.b32.xlu0 %v3071, 55
          %v3085 = vpop.permute.xlu0 %3084
          %3086 = vrot.lane.b32.xlu0 %v3072, 55
          %v3087 = vpop.permute.xlu0 %3086
          %v3088 = vrot.slane %v3079, 4
          %v3089 = vrot.slane %v3081, 4
          %v3090 = vrot.slane %v3083, 4
          %v3091 = vrot.slane %v3085, 4
          %v3092 = vrot.slane %v3087, 4
          %v3093 = vsel %vm388, %v3088, %v3089
          %v3094 = vsel %vm978, %v3079, %v3093
          %v3095 = vsel %vm388, %v3089, %v3090
          %v3096 = vsel %vm978, %v3081, %v3095
          %v3097 = vsel %vm388, %v3090, %v3091
          %v3098 = vsel %vm978, %v3083, %v3097
          %v3099 = vsel %vm388, %v3091, %v3092
          %v3100 = vsel %vm978, %v3085, %v3099
          %3105 = vst [vmem:[#allocation3 + $0x1c0] sm:$0xff] %v3094
          %3106 = vst [vmem:[#allocation3 + $0x1c8] sm:$0xff] %v3096
          %3107 = vst [vmem:[#allocation3 + $0x1d0] sm:$0xff] %v3098
          %3108 = vst [vmem:[#allocation3 + $0x1d8] sm:$0xff] %v3100
          %v3109 = vld [vmem:[#allocation2 + $0x4] sm:$0xff]
          %v3110 = vld [vmem:[#allocation2 + $0xc] sm:$0xff]
          %v3111 = vld [vmem:[#allocation2 + $0x14] sm:$0xff]
          %v3112 = vld [vmem:[#allocation2 + $0x1c] sm:$0xff]
          %v3113 = vld [vmem:[#allocation2 + $0x24] sm:$0xf]
          %3119 = vrot.lane.b32.xlu0 %v3109, 47
          %v3120 = vpop.permute.xlu0 %3119
          %3121 = vrot.lane.b32.xlu0 %v3110, 47
          %v3122 = vpop.permute.xlu0 %3121
          %3123 = vrot.lane.b32.xlu0 %v3111, 47
          %v3124 = vpop.permute.xlu0 %3123
          %3125 = vrot.lane.b32.xlu0 %v3112, 47
          %v3126 = vpop.permute.xlu0 %3125
          %3127 = vrot.lane.b32.xlu0 %v3113, 47
          %v3128 = vpop.permute.xlu0 %3127
          %v3129 = vrot.slane %v3120, 4
          %v3130 = vrot.slane %v3122, 4
          %v3131 = vrot.slane %v3124, 4
          %v3132 = vrot.slane %v3126, 4
          %v3133 = vrot.slane %v3128, 4
          %v3134 = vsel %vm388, %v3129, %v3130
          %v3135 = vsel %vm1020, %v3120, %v3134
          %v3136 = vsel %vm388, %v3130, %v3131
          %v3137 = vsel %vm1020, %v3122, %v3136
          %v3138 = vsel %vm388, %v3131, %v3132
          %v3139 = vsel %vm1020, %v3124, %v3138
          %v3140 = vsel %vm388, %v3132, %v3133
          %v3141 = vsel %vm1020, %v3126, %v3140
          %3146 = vst [vmem:[#allocation3 + $0x1e0] sm:$0xff] %v3135
          %3147 = vst [vmem:[#allocation3 + $0x1e8] sm:$0xff] %v3137
          %3148 = vst [vmem:[#allocation3 + $0x1f0] sm:$0xff] %v3139
          %3149 = vst [vmem:[#allocation3 + $0x1f8] sm:$0xff] %v3141
          %v3150 = vld [vmem:[#allocation2 + $0x4] sm:$0xff]
          %v3151 = vld [vmem:[#allocation2 + $0xc] sm:$0xff]
          %v3152 = vld [vmem:[#allocation2 + $0x14] sm:$0xff]
          %v3153 = vld [vmem:[#allocation2 + $0x1c] sm:$0xff]
          %v3154 = vld [vmem:[#allocation2 + $0x24] sm:$0xf]
          %3160 = vrot.lane.b32.xlu0 %v3150, 46
          %v3161 = vpop.permute.xlu0 %3160
          %3162 = vrot.lane.b32.xlu0 %v3151, 46
          %v3163 = vpop.permute.xlu0 %3162
          %3164 = vrot.lane.b32.xlu0 %v3152, 46
          %v3165 = vpop.permute.xlu0 %3164
          %3166 = vrot.lane.b32.xlu0 %v3153, 46
          %v3167 = vpop.permute.xlu0 %3166
          %3168 = vrot.lane.b32.xlu0 %v3154, 46
          %v3169 = vpop.permute.xlu0 %3168
          %v3170 = vrot.slane %v3161, 4
          %v3171 = vrot.slane %v3163, 4
          %v3172 = vrot.slane %v3165, 4
          %v3173 = vrot.slane %v3167, 4
          %v3174 = vrot.slane %v3169, 4
          %v3175 = vsel %vm388, %v3170, %v3171
          %v3176 = vsel %vm1062, %v3161, %v3175
          %v3177 = vsel %vm388, %v3171, %v3172
          %v3178 = vsel %vm1062, %v3163, %v3177
          %v3179 = vsel %vm388, %v3172, %v3173
          %v3180 = vsel %vm1062, %v3165, %v3179
          %v3181 = vsel %vm388, %v3173, %v3174
          %v3182 = vsel %vm1062, %v3167, %v3181
          %3187 = vst [vmem:[#allocation3 + $0x200] sm:$0xff] %v3176
          %3188 = vst [vmem:[#allocation3 + $0x208] sm:$0xff] %v3178
          %3189 = vst [vmem:[#allocation3 + $0x210] sm:$0xff] %v3180
          %3190 = vst [vmem:[#allocation3 + $0x218] sm:$0xff] %v3182
          %v3191 = vld [vmem:[#allocation2 + $0x4] sm:$0xff]
          %v3192 = vld [vmem:[#allocation2 + $0xc] sm:$0xff]
          %v3193 = vld [vmem:[#allocation2 + $0x14] sm:$0xff]
          %v3194 = vld [vmem:[#allocation2 + $0x1c] sm:$0xff]
          %v3195 = vld [vmem:[#allocation2 + $0x24] sm:$0xf]
          %3201 = vrot.lane.b32.xlu0 %v3191, 45
          %v3202 = vpop.permute.xlu0 %3201
          %3203 = vrot.lane.b32.xlu0 %v3192, 45
          %v3204 = vpop.permute.xlu0 %3203
          %3205 = vrot.lane.b32.xlu0 %v3193, 45
          %v3206 = vpop.permute.xlu0 %3205
          %3207 = vrot.lane.b32.xlu0 %v3194, 45
          %v3208 = vpop.permute.xlu0 %3207
          %3209 = vrot.lane.b32.xlu0 %v3195, 45
          %v3210 = vpop.permute.xlu0 %3209
          %v3211 = vrot.slane %v3202, 4
          %v3212 = vrot.slane %v3204, 4
          %v3213 = vrot.slane %v3206, 4
          %v3214 = vrot.slane %v3208, 4
          %v3215 = vrot.slane %v3210, 4
          %v3216 = vsel %vm388, %v3211, %v3212
          %v3217 = vsel %vm1104, %v3202, %v3216
          %v3218 = vsel %vm388, %v3212, %v3213
          %v3219 = vsel %vm1104, %v3204, %v3218
          %v3220 = vsel %vm388, %v3213, %v3214
          %v3221 = vsel %vm1104, %v3206, %v3220
          %v3222 = vsel %vm388, %v3214, %v3215
          %v3223 = vsel %vm1104, %v3208, %v3222
          %3228 = vst [vmem:[#allocation3 + $0x220] sm:$0xff] %v3217
          %3229 = vst [vmem:[#allocation3 + $0x228] sm:$0xff] %v3219
          %3230 = vst [vmem:[#allocation3 + $0x230] sm:$0xff] %v3221
          %3231 = vst [vmem:[#allocation3 + $0x238] sm:$0xff] %v3223
          %v3232 = vld [vmem:[#allocation2 + $0x8] sm:$0xff]
          %v3233 = vld [vmem:[#allocation2 + $0x10] sm:$0xff]
          %v3234 = vld [vmem:[#allocation2 + $0x18] sm:$0xff]
          %v3235 = vld [vmem:[#allocation2 + $0x20] sm:$0xff]
          %v3236 = vld [vmem:[#allocation2 + $0x28] sm:$0xf]
          %3242 = vrot.lane.b32.xlu0 %v3232, 95
          %v3243 = vpop.permute.xlu0 %3242
          %3244 = vrot.lane.b32.xlu0 %v3233, 95
          %v3245 = vpop.permute.xlu0 %3244
          %3246 = vrot.lane.b32.xlu0 %v3234, 95
          %v3247 = vpop.permute.xlu0 %3246
          %3248 = vrot.lane.b32.xlu0 %v3235, 95
          %v3249 = vpop.permute.xlu0 %3248
          %3250 = vrot.lane.b32.xlu0 %v3236, 95
          %v3251 = vpop.permute.xlu0 %3250
          %v3252 = vrot.slane %v3243, 4
          %v3253 = vrot.slane %v3245, 4
          %v3254 = vrot.slane %v3247, 4
          %v3255 = vrot.slane %v3249, 4
          %v3256 = vrot.slane %v3251, 4
          %v3257 = vsel %vm388, %v3252, %v3253
          %v3258 = vsel %vm1146, %v3243, %v3257
          %v3259 = vsel %vm388, %v3253, %v3254
          %v3260 = vsel %vm1146, %v3245, %v3259
          %v3261 = vsel %vm388, %v3254, %v3255
          %v3262 = vsel %vm1146, %v3247, %v3261
          %v3263 = vsel %vm388, %v3255, %v3256
          %v3264 = vsel %vm1146, %v3249, %v3263
          %3269 = vst [vmem:[#allocation3 + $0x240] sm:$0xff] %v3258
          %3270 = vst [vmem:[#allocation3 + $0x248] sm:$0xff] %v3260
          %3271 = vst [vmem:[#allocation3 + $0x250] sm:$0xff] %v3262
          %3272 = vst [vmem:[#allocation3 + $0x258] sm:$0xff] %v3264
          %v3273 = vld [vmem:[#allocation2 + $0x8] sm:$0xff]
          %v3274 = vld [vmem:[#allocation2 + $0x10] sm:$0xff]
          %v3275 = vld [vmem:[#allocation2 + $0x18] sm:$0xff]
          %v3276 = vld [vmem:[#allocation2 + $0x20] sm:$0xff]
          %v3277 = vld [vmem:[#allocation2 + $0x28] sm:$0xf]
          %3283 = vrot.lane.b32.xlu0 %v3273, 94
          %v3284 = vpop.permute.xlu0 %3283
          %3285 = vrot.lane.b32.xlu0 %v3274, 94
          %v3286 = vpop.permute.xlu0 %3285
          %3287 = vrot.lane.b32.xlu0 %v3275, 94
          %v3288 = vpop.permute.xlu0 %3287
          %3289 = vrot.lane.b32.xlu0 %v3276, 94
          %v3290 = vpop.permute.xlu0 %3289
          %3291 = vrot.lane.b32.xlu0 %v3277, 94
          %v3292 = vpop.permute.xlu0 %3291
          %v3293 = vrot.slane %v3284, 4
          %v3294 = vrot.slane %v3286, 4
          %v3295 = vrot.slane %v3288, 4
          %v3296 = vrot.slane %v3290, 4
          %v3297 = vrot.slane %v3292, 4
          %v3298 = vsel %vm388, %v3293, %v3294
          %v3299 = vsel %vm1188, %v3284, %v3298
          %v3300 = vsel %vm388, %v3294, %v3295
          %v3301 = vsel %vm1188, %v3286, %v3300
          %v3302 = vsel %vm388, %v3295, %v3296
          %v3303 = vsel %vm1188, %v3288, %v3302
          %v3304 = vsel %vm388, %v3296, %v3297
          %v3305 = vsel %vm1188, %v3290, %v3304
          %3310 = vst [vmem:[#allocation3 + $0x260] sm:$0xff] %v3299
          %3311 = vst [vmem:[#allocation3 + $0x268] sm:$0xff] %v3301
          %3312 = vst [vmem:[#allocation3 + $0x270] sm:$0xff] %v3303
          %3313 = vst [vmem:[#allocation3 + $0x278] sm:$0xff] %v3305
          %v3314 = vld [vmem:[#allocation2 + $0x8] sm:$0xff]
          %v3315 = vld [vmem:[#allocation2 + $0x10] sm:$0xff]
          %v3316 = vld [vmem:[#allocation2 + $0x18] sm:$0xff]
          %v3317 = vld [vmem:[#allocation2 + $0x20] sm:$0xff]
          %v3318 = vld [vmem:[#allocation2 + $0x28] sm:$0xf]
          %3324 = vrot.lane.b32.xlu0 %v3314, 93
          %v3325 = vpop.permute.xlu0 %3324
          %3326 = vrot.lane.b32.xlu0 %v3315, 93
          %v3327 = vpop.permute.xlu0 %3326
          %3328 = vrot.lane.b32.xlu0 %v3316, 93
          %v3329 = vpop.permute.xlu0 %3328
          %3330 = vrot.lane.b32.xlu0 %v3317, 93
          %v3331 = vpop.permute.xlu0 %3330
          %3332 = vrot.lane.b32.xlu0 %v3318, 93
          %v3333 = vpop.permute.xlu0 %3332
          %v3334 = vrot.slane %v3325, 4
          %v3335 = vrot.slane %v3327, 4
          %v3336 = vrot.slane %v3329, 4
          %v3337 = vrot.slane %v3331, 4
          %v3338 = vrot.slane %v3333, 4
          %v3339 = vsel %vm388, %v3334, %v3335
          %v3340 = vsel %vm1230, %v3325, %v3339
          %v3341 = vsel %vm388, %v3335, %v3336
          %v3342 = vsel %vm1230, %v3327, %v3341
          %v3343 = vsel %vm388, %v3336, %v3337
          %v3344 = vsel %vm1230, %v3329, %v3343
          %v3345 = vsel %vm388, %v3337, %v3338
          %v3346 = vsel %vm1230, %v3331, %v3345
          %3351 = vst [vmem:[#allocation3 + $0x280] sm:$0xff] %v3340
          %3352 = vst [vmem:[#allocation3 + $0x288] sm:$0xff] %v3342
          %3353 = vst [vmem:[#allocation3 + $0x290] sm:$0xff] %v3344
          %3354 = vst [vmem:[#allocation3 + $0x298] sm:$0xff] %v3346
          %v3355 = vld [vmem:[#allocation2 + $0x8] sm:$0xff]
          %v3356 = vld [vmem:[#allocation2 + $0x10] sm:$0xff]
          %v3357 = vld [vmem:[#allocation2 + $0x18] sm:$0xff]
          %v3358 = vld [vmem:[#allocation2 + $0x20] sm:$0xff]
          %v3359 = vld [vmem:[#allocation2 + $0x28] sm:$0xf]
          %3365 = vrot.lane.b32.xlu0 %v3355, 85
          %v3366 = vpop.permute.xlu0 %3365
          %3367 = vrot.lane.b32.xlu0 %v3356, 85
          %v3368 = vpop.permute.xlu0 %3367
          %3369 = vrot.lane.b32.xlu0 %v3357, 85
          %v3370 = vpop.permute.xlu0 %3369
          %3371 = vrot.lane.b32.xlu0 %v3358, 85
          %v3372 = vpop.permute.xlu0 %3371
          %3373 = vrot.lane.b32.xlu0 %v3359, 85
          %v3374 = vpop.permute.xlu0 %3373
          %v3375 = vrot.slane %v3366, 4
          %v3376 = vrot.slane %v3368, 4
          %v3377 = vrot.slane %v3370, 4
          %v3378 = vrot.slane %v3372, 4
          %v3379 = vrot.slane %v3374, 4
          %v3380 = vsel %vm388, %v3375, %v3376
          %v3381 = vsel %vm1272, %v3366, %v3380
          %v3382 = vsel %vm388, %v3376, %v3377
          %v3383 = vsel %vm1272, %v3368, %v3382
          %v3384 = vsel %vm388, %v3377, %v3378
          %v3385 = vsel %vm1272, %v3370, %v3384
          %v3386 = vsel %vm388, %v3378, %v3379
          %v3387 = vsel %vm1272, %v3372, %v3386
          %3392 = vst [vmem:[#allocation3 + $0x2a0] sm:$0xff] %v3381
          %3393 = vst [vmem:[#allocation3 + $0x2a8] sm:$0xff] %v3383
          %3394 = vst [vmem:[#allocation3 + $0x2b0] sm:$0xff] %v3385
          %3395 = vst [vmem:[#allocation3 + $0x2b8] sm:$0xff] %v3387
          %v3396 = vld [vmem:[#allocation2 + $0x8] sm:$0xff]
          %v3397 = vld [vmem:[#allocation2 + $0x10] sm:$0xff]
          %v3398 = vld [vmem:[#allocation2 + $0x18] sm:$0xff]
          %v3399 = vld [vmem:[#allocation2 + $0x20] sm:$0xff]
          %v3400 = vld [vmem:[#allocation2 + $0x28] sm:$0xf]
          %3406 = vrot.lane.b32.xlu0 %v3396, 84
          %v3407 = vpop.permute.xlu0 %3406
          %3408 = vrot.lane.b32.xlu0 %v3397, 84
          %v3409 = vpop.permute.xlu0 %3408
          %3410 = vrot.lane.b32.xlu0 %v3398, 84
          %v3411 = vpop.permute.xlu0 %3410
          %3412 = vrot.lane.b32.xlu0 %v3399, 84
          %v3413 = vpop.permute.xlu0 %3412
          %3414 = vrot.lane.b32.xlu0 %v3400, 84
          %v3415 = vpop.permute.xlu0 %3414
          %v3416 = vrot.slane %v3407, 4
          %v3417 = vrot.slane %v3409, 4
          %v3418 = vrot.slane %v3411, 4
          %v3419 = vrot.slane %v3413, 4
          %v3420 = vrot.slane %v3415, 4
          %v3421 = vsel %vm388, %v3416, %v3417
          %v3422 = vsel %vm1314, %v3407, %v3421
          %v3423 = vsel %vm388, %v3417, %v3418
          %v3424 = vsel %vm1314, %v3409, %v3423
          %v3425 = vsel %vm388, %v3418, %v3419
          %v3426 = vsel %vm1314, %v3411, %v3425
          %v3427 = vsel %vm388, %v3419, %v3420
          %v3428 = vsel %vm1314, %v3413, %v3427
          %3433 = vst [vmem:[#allocation3 + $0x2c0] sm:$0xff] %v3422
          %3434 = vst [vmem:[#allocation3 + $0x2c8] sm:$0xff] %v3424
          %3435 = vst [vmem:[#allocation3 + $0x2d0] sm:$0xff] %v3426
          %3436 = vst [vmem:[#allocation3 + $0x2d8] sm:$0xff] %v3428
          %v3437 = vld [vmem:[#allocation2 + $0x8] sm:$0xff]
          %v3438 = vld [vmem:[#allocation2 + $0x10] sm:$0xff]
          %v3439 = vld [vmem:[#allocation2 + $0x18] sm:$0xff]
          %v3440 = vld [vmem:[#allocation2 + $0x20] sm:$0xff]
          %v3441 = vld [vmem:[#allocation2 + $0x28] sm:$0xf]
          %3447 = vrot.lane.b32.xlu0 %v3437, 83
          %v3448 = vpop.permute.xlu0 %3447
          %3449 = vrot.lane.b32.xlu0 %v3438, 83
          %v3450 = vpop.permute.xlu0 %3449
          %3451 = vrot.lane.b32.xlu0 %v3439, 83
          %v3452 = vpop.permute.xlu0 %3451
          %3453 = vrot.lane.b32.xlu0 %v3440, 83
          %v3454 = vpop.permute.xlu0 %3453
          %3455 = vrot.lane.b32.xlu0 %v3441, 83
          %v3456 = vpop.permute.xlu0 %3455
          %v3457 = vrot.slane %v3448, 4
          %v3458 = vrot.slane %v3450, 4
          %v3459 = vrot.slane %v3452, 4
          %v3460 = vrot.slane %v3454, 4
          %v3461 = vrot.slane %v3456, 4
          %v3462 = vsel %vm388, %v3457, %v3458
          %v3463 = vsel %vm1356, %v3448, %v3462
          %v3464 = vsel %vm388, %v3458, %v3459
          %v3465 = vsel %vm1356, %v3450, %v3464
          %v3466 = vsel %vm388, %v3459, %v3460
          %v3467 = vsel %vm1356, %v3452, %v3466
          %v3468 = vsel %vm388, %v3460, %v3461
          %v3469 = vsel %vm1356, %v3454, %v3468
          %3474 = vst [vmem:[#allocation3 + $0x2e0] sm:$0xff] %v3463
          %3475 = vst [vmem:[#allocation3 + $0x2e8] sm:$0xff] %v3465
          %3476 = vst [vmem:[#allocation3 + $0x2f0] sm:$0xff] %v3467
          %3477 = vst [vmem:[#allocation3 + $0x2f8] sm:$0xff] %v3469
          %v3478 = vld [vmem:[#allocation2 + $0x8] sm:$0xff]
          %v3479 = vld [vmem:[#allocation2 + $0x10] sm:$0xff]
          %v3480 = vld [vmem:[#allocation2 + $0x18] sm:$0xff]
          %v3481 = vld [vmem:[#allocation2 + $0x20] sm:$0xff]
          %v3482 = vld [vmem:[#allocation2 + $0x28] sm:$0xf]
          %3488 = vrot.lane.b32.xlu0 %v3478, 75
          %v3489 = vpop.permute.xlu0 %3488
          %3490 = vrot.lane.b32.xlu0 %v3479, 75
          %v3491 = vpop.permute.xlu0 %3490
          %3492 = vrot.lane.b32.xlu0 %v3480, 75
          %v3493 = vpop.permute.xlu0 %3492
          %3494 = vrot.lane.b32.xlu0 %v3481, 75
          %v3495 = vpop.permute.xlu0 %3494
          %3496 = vrot.lane.b32.xlu0 %v3482, 75
          %v3497 = vpop.permute.xlu0 %3496
          %v3498 = vrot.slane %v3489, 4
          %v3499 = vrot.slane %v3491, 4
          %v3500 = vrot.slane %v3493, 4
          %v3501 = vrot.slane %v3495, 4
          %v3502 = vrot.slane %v3497, 4
          %v3503 = vsel %vm388, %v3498, %v3499
          %v3504 = vsel %vm1398, %v3489, %v3503
          %v3505 = vsel %vm388, %v3499, %v3500
          %v3506 = vsel %vm1398, %v3491, %v3505
          %v3507 = vsel %vm388, %v3500, %v3501
          %v3508 = vsel %vm1398, %v3493, %v3507
          %v3509 = vsel %vm388, %v3501, %v3502
          %v3510 = vsel %vm1398, %v3495, %v3509
          %3515 = vst [vmem:[#allocation3 + $0x300] sm:$0xff] %v3504
          %3516 = vst [vmem:[#allocation3 + $0x308] sm:$0xff] %v3506
          %3517 = vst [vmem:[#allocation3 + $0x310] sm:$0xff] %v3508
          %3518 = vst [vmem:[#allocation3 + $0x318] sm:$0xff] %v3510
          %v3519 = vld [vmem:[#allocation2 + $0x8] sm:$0xff]
          %v3520 = vld [vmem:[#allocation2 + $0x10] sm:$0xff]
          %v3521 = vld [vmem:[#allocation2 + $0x18] sm:$0xff]
          %v3522 = vld [vmem:[#allocation2 + $0x20] sm:$0xff]
          %v3523 = vld [vmem:[#allocation2 + $0x28] sm:$0xf]
          %3529 = vrot.lane.b32.xlu0 %v3519, 74
          %v3530 = vpop.permute.xlu0 %3529
          %3531 = vrot.lane.b32.xlu0 %v3520, 74
          %v3532 = vpop.permute.xlu0 %3531
          %3533 = vrot.lane.b32.xlu0 %v3521, 74
          %v3534 = vpop.permute.xlu0 %3533
          %3535 = vrot.lane.b32.xlu0 %v3522, 74
          %v3536 = vpop.permute.xlu0 %3535
          %3537 = vrot.lane.b32.xlu0 %v3523, 74
          %v3538 = vpop.permute.xlu0 %3537
          %v3539 = vrot.slane %v3530, 4
          %v3540 = vrot.slane %v3532, 4
          %v3541 = vrot.slane %v3534, 4
          %v3542 = vrot.slane %v3536, 4
          %v3543 = vrot.slane %v3538, 4
          %v3544 = vsel %vm388, %v3539, %v3540
          %v3545 = vsel %vm1440, %v3530, %v3544
          %v3546 = vsel %vm388, %v3540, %v3541
          %v3547 = vsel %vm1440, %v3532, %v3546
          %v3548 = vsel %vm388, %v3541, %v3542
          %v3549 = vsel %vm1440, %v3534, %v3548
          %v3550 = vsel %vm388, %v3542, %v3543
          %v3551 = vsel %vm1440, %v3536, %v3550
          %3556 = vst [vmem:[#allocation3 + $0x320] sm:$0xff] %v3545
          %3557 = vst [vmem:[#allocation3 + $0x328] sm:$0xff] %v3547
          %3558 = vst [vmem:[#allocation3 + $0x330] sm:$0xff] %v3549
          %3559 = vst [vmem:[#allocation3 + $0x338] sm:$0xff] %v3551
          %v3560 = vld [vmem:[#allocation2 + $0x8] sm:$0xff]
          %v3561 = vld [vmem:[#allocation2 + $0x10] sm:$0xff]
          %v3562 = vld [vmem:[#allocation2 + $0x18] sm:$0xff]
          %v3563 = vld [vmem:[#allocation2 + $0x20] sm:$0xff]
          %v3564 = vld [vmem:[#allocation2 + $0x28] sm:$0xf]
          %3570 = vrot.lane.b32.xlu0 %v3560, 73
          %v3571 = vpop.permute.xlu0 %3570
          %3572 = vrot.lane.b32.xlu0 %v3561, 73
          %v3573 = vpop.permute.xlu0 %3572
          %3574 = vrot.lane.b32.xlu0 %v3562, 73
          %v3575 = vpop.permute.xlu0 %3574
          %3576 = vrot.lane.b32.xlu0 %v3563, 73
          %v3577 = vpop.permute.xlu0 %3576
          %3578 = vrot.lane.b32.xlu0 %v3564, 73
          %v3579 = vpop.permute.xlu0 %3578
          %v3580 = vrot.slane %v3571, 4
          %v3581 = vrot.slane %v3573, 4
          %v3582 = vrot.slane %v3575, 4
          %v3583 = vrot.slane %v3577, 4
          %v3584 = vrot.slane %v3579, 4
          %v3585 = vsel %vm388, %v3580, %v3581
          %v3586 = vsel %vm1482, %v3571, %v3585
          %v3587 = vsel %vm388, %v3581, %v3582
          %v3588 = vsel %vm1482, %v3573, %v3587
          %v3589 = vsel %vm388, %v3582, %v3583
          %v3590 = vsel %vm1482, %v3575, %v3589
          %v3591 = vsel %vm388, %v3583, %v3584
          %v3592 = vsel %vm1482, %v3577, %v3591
          %3597 = vst [vmem:[#allocation3 + $0x340] sm:$0xff] %v3586
          %3598 = vst [vmem:[#allocation3 + $0x348] sm:$0xff] %v3588
          %3599 = vst [vmem:[#allocation3 + $0x350] sm:$0xff] %v3590
          %3600 = vst [vmem:[#allocation3 + $0x358] sm:$0xff] %v3592
        $region60: #{tpu_custom_call.1} parent=51 // pred_fallthru
          _
        %v3601 = vld [vmem:[%s357] sm:$0xff]
        %v3602 = vld [vmem:[#allocation3] sm:$0xff]
        %v3603 = vld [vmem:[#allocation3 + $0x8] sm:$0xff]
        %v3604 = vld [vmem:[#allocation3 + $0x10] sm:$0xff]
        %v3605 = vld [vmem:[#allocation3 + $0x18] sm:$0xff]
        %v3606 = vld [vmem:[#allocation3 + $0x20] sm:$0xff]
        %v3607 = vld [vmem:[#allocation3 + $0x28] sm:$0xff]
        %v3608 = vld [vmem:[#allocation3 + $0x30] sm:$0xff]
        %v3609 = vld [vmem:[#allocation3 + $0x38] sm:$0xff]
        %v3610 = vld [vmem:[#allocation3 + $0x40] sm:$0xff]
        %v3611 = vld [vmem:[#allocation3 + $0x48] sm:$0xff]
        %v3612 = vld [vmem:[#allocation3 + $0x50] sm:$0xff]
        %v3613 = vld [vmem:[#allocation3 + $0x58] sm:$0xff]
        %v3614 = vld [vmem:[#allocation3 + $0x60] sm:$0xff]
        %v3615 = vld [vmem:[#allocation3 + $0x68] sm:$0xff]
        %v3616 = vld [vmem:[#allocation3 + $0x70] sm:$0xff]
        %v3617 = vld [vmem:[#allocation3 + $0x78] sm:$0xff]
        %v3618 = vld [vmem:[#allocation3 + $0x80] sm:$0xff]
        %v3619 = vld [vmem:[#allocation3 + $0x88] sm:$0xff]
        %v3620 = vld [vmem:[#allocation3 + $0x90] sm:$0xff]
        %v3621 = vld [vmem:[#allocation3 + $0x98] sm:$0xff]
        %v3622 = vld [vmem:[#allocation3 + $0xa0] sm:$0xff]
        %v3623 = vld [vmem:[#allocation3 + $0xa8] sm:$0xff]
        %v3624 = vld [vmem:[#allocation3 + $0xb0] sm:$0xff]
        %v3625 = vld [vmem:[#allocation3 + $0xb8] sm:$0xff]
        %v3626 = vld [vmem:[#allocation3 + $0xc0] sm:$0xff]
        %v3627 = vld [vmem:[#allocation3 + $0xc8] sm:$0xff]
        %v3628 = vld [vmem:[#allocation3 + $0xd0] sm:$0xff]
        %v3629 = vld [vmem:[#allocation3 + $0xd8] sm:$0xff]
        %v3630 = vld [vmem:[#allocation3 + $0xe0] sm:$0xff]
        %v3631 = vld [vmem:[#allocation3 + $0xe8] sm:$0xff]
        %v3632 = vld [vmem:[#allocation3 + $0xf0] sm:$0xff]
        %v3633 = vld [vmem:[#allocation3 + $0xf8] sm:$0xff]
        %v3634 = vld [vmem:[#allocation3 + $0x100] sm:$0xff]
        %v3635 = vld [vmem:[#allocation3 + $0x108] sm:$0xff]
        %v3636 = vld [vmem:[#allocation3 + $0x110] sm:$0xff]
        %v3637 = vld [vmem:[#allocation3 + $0x118] sm:$0xff]
        %v3638 = vld [vmem:[#allocation3 + $0x120] sm:$0xff]
        %v3639 = vld [vmem:[#allocation3 + $0x128] sm:$0xff]
        %v3640 = vld [vmem:[#allocation3 + $0x130] sm:$0xff]
        %v3641 = vld [vmem:[#allocation3 + $0x138] sm:$0xff]
        %v3642 = vld [vmem:[#allocation3 + $0x140] sm:$0xff]
        %v3643 = vld [vmem:[#allocation3 + $0x148] sm:$0xff]
        %v3644 = vld [vmem:[#allocation3 + $0x150] sm:$0xff]
        %v3645 = vld [vmem:[#allocation3 + $0x158] sm:$0xff]
        %v3646 = vld [vmem:[#allocation3 + $0x160] sm:$0xff]
        %v3647 = vld [vmem:[#allocation3 + $0x168] sm:$0xff]
        %v3648 = vld [vmem:[#allocation3 + $0x170] sm:$0xff]
        %v3649 = vld [vmem:[#allocation3 + $0x178] sm:$0xff]
        %v3650 = vld [vmem:[#allocation3 + $0x180] sm:$0xff]
        %v3651 = vld [vmem:[#allocation3 + $0x188] sm:$0xff]
        %v3652 = vld [vmem:[#allocation3 + $0x190] sm:$0xff]
        %v3653 = vld [vmem:[#allocation3 + $0x198] sm:$0xff]
        %v3654 = vld [vmem:[#allocation3 + $0x1a0] sm:$0xff]
        %v3655 = vld [vmem:[#allocation3 + $0x1a8] sm:$0xff]
        %v3656 = vld [vmem:[#allocation3 + $0x1b0] sm:$0xff]
        %v3657 = vld [vmem:[#allocation3 + $0x1b8] sm:$0xff]
        %v3658 = vld [vmem:[#allocation3 + $0x1c0] sm:$0xff]
        %v3659 = vld [vmem:[#allocation3 + $0x1c8] sm:$0xff]
        %v3660 = vld [vmem:[#allocation3 + $0x1d0] sm:$0xff]
        %v3661 = vld [vmem:[#allocation3 + $0x1d8] sm:$0xff]
        %v3662 = vld [vmem:[#allocation3 + $0x1e0] sm:$0xff]
        %v3663 = vld [vmem:[#allocation3 + $0x1e8] sm:$0xff]
        %v3664 = vld [vmem:[#allocation3 + $0x1f0] sm:$0xff]
        %v3665 = vld [vmem:[#allocation3 + $0x1f8] sm:$0xff]
        %v3666 = vld [vmem:[#allocation3 + $0x200] sm:$0xff]
        %v3667 = vld [vmem:[#allocation3 + $0x208] sm:$0xff]
        %v3668 = vld [vmem:[#allocation3 + $0x210] sm:$0xff]
        %v3669 = vld [vmem:[#allocation3 + $0x218] sm:$0xff]
        %v3670 = vld [vmem:[#allocation3 + $0x220] sm:$0xff]
        %v3671 = vld [vmem:[#allocation3 + $0x228] sm:$0xff]
        %v3672 = vld [vmem:[#allocation3 + $0x230] sm:$0xff]
        %v3673 = vld [vmem:[#allocation3 + $0x238] sm:$0xff]
        %v3674 = vld [vmem:[#allocation3 + $0x240] sm:$0xff]
        %v3675 = vld [vmem:[#allocation3 + $0x248] sm:$0xff]
        %v3676 = vld [vmem:[#allocation3 + $0x250] sm:$0xff]
        %v3677 = vld [vmem:[#allocation3 + $0x258] sm:$0xff]
        %v3678 = vld [vmem:[#allocation3 + $0x260] sm:$0xff]
        %v3679 = vld [vmem:[#allocation3 + $0x268] sm:$0xff]
        %v3680 = vld [vmem:[#allocation3 + $0x270] sm:$0xff]
        %v3681 = vld [vmem:[#allocation3 + $0x278] sm:$0xff]
        %v3682 = vld [vmem:[#allocation3 + $0x280] sm:$0xff]
        %v3683 = vld [vmem:[#allocation3 + $0x288] sm:$0xff]
        %v3684 = vld [vmem:[#allocation3 + $0x290] sm:$0xff]
        %v3685 = vld [vmem:[#allocation3 + $0x298] sm:$0xff]
        %v3686 = vld [vmem:[#allocation3 + $0x2a0] sm:$0xff]
        %v3687 = vld [vmem:[#allocation3 + $0x2a8] sm:$0xff]
        %v3688 = vld [vmem:[#allocation3 + $0x2b0] sm:$0xff]
        %v3689 = vld [vmem:[#allocation3 + $0x2b8] sm:$0xff]
        %v3690 = vld [vmem:[#allocation3 + $0x2c0] sm:$0xff]
        %v3691 = vld [vmem:[#allocation3 + $0x2c8] sm:$0xff]
        %v3692 = vld [vmem:[#allocation3 + $0x2d0] sm:$0xff]
        %v3693 = vld [vmem:[#allocation3 + $0x2d8] sm:$0xff]
        %v3694 = vld [vmem:[#allocation3 + $0x2e0] sm:$0xff]
        %v3695 = vld [vmem:[#allocation3 + $0x2e8] sm:$0xff]
        %v3696 = vld [vmem:[#allocation3 + $0x2f0] sm:$0xff]
        %v3697 = vld [vmem:[#allocation3 + $0x2f8] sm:$0xff]
        %v3698 = vld [vmem:[#allocation3 + $0x300] sm:$0xff]
        %v3699 = vld [vmem:[#allocation3 + $0x308] sm:$0xff]
        %v3700 = vld [vmem:[#allocation3 + $0x310] sm:$0xff]
        %v3701 = vld [vmem:[#allocation3 + $0x318] sm:$0xff]
        %v3702 = vld [vmem:[#allocation3 + $0x320] sm:$0xff]
        %v3703 = vld [vmem:[#allocation3 + $0x328] sm:$0xff]
        %v3704 = vld [vmem:[#allocation3 + $0x330] sm:$0xff]
        %v3705 = vld [vmem:[#allocation3 + $0x338] sm:$0xff]
        %v3706 = vld [vmem:[#allocation3 + $0x340] sm:$0xff]
        %v3707 = vld [vmem:[#allocation3 + $0x348] sm:$0xff]
        %v3708 = vld [vmem:[#allocation3 + $0x350] sm:$0xff]
        %v3709 = vld [vmem:[#allocation3 + $0x358] sm:$0xff]
        %v3710 = vld [vmem:[%s5] sm:$0xff]
        %3712 = vset.pattern.permute.xlu0 0
        %3713 = vperm.xlu0 %3712, %v3710
        %v3714 = vpop.permute.xlu0 %3713
        %v3717 = vunpack.c.l.b16 %v3601
        %v3718 = vunpack.c.h.b16 %v3601
        %v3719 = vpack.c.b16 %v3717, %v3717
        %v3720 = vpack.c.b16 %v3718, %v3718
        %v3830 = vunpack.c.l.b16 %v3602
        %v3831 = vunpack.c.h.b16 %v3602
        %v3832 = vunpack.c.l.b16 %v3603
        %v3833 = vunpack.c.h.b16 %v3603
        %v3834 = vunpack.c.l.b16 %v3604
        %v3835 = vunpack.c.h.b16 %v3604
        %v3836 = vunpack.c.l.b16 %v3605
        %v3837 = vunpack.c.h.b16 %v3605
        %v3838 = vunpack.c.l.b16 %v3606
        %v3839 = vunpack.c.h.b16 %v3606
        %v3840 = vunpack.c.l.b16 %v3607
        %v3841 = vunpack.c.h.b16 %v3607
        %v3842 = vunpack.c.l.b16 %v3608
        %v3843 = vunpack.c.h.b16 %v3608
        %v3844 = vunpack.c.l.b16 %v3609
        %v3845 = vunpack.c.h.b16 %v3609
        %v3846 = vunpack.c.l.b16 %v3610
        %v3847 = vunpack.c.h.b16 %v3610
        %v3848 = vunpack.c.l.b16 %v3611
        %v3849 = vunpack.c.h.b16 %v3611
        %v3850 = vunpack.c.l.b16 %v3612
        %v3851 = vunpack.c.h.b16 %v3612
        %v3852 = vunpack.c.l.b16 %v3613
        %v3853 = vunpack.c.h.b16 %v3613
        %v3854 = vunpack.c.l.b16 %v3614
        %v3855 = vunpack.c.h.b16 %v3614
        %v3856 = vunpack.c.l.b16 %v3615
        %v3857 = vunpack.c.h.b16 %v3615
        %v3858 = vunpack.c.l.b16 %v3616
        %v3859 = vunpack.c.h.b16 %v3616
        %v3860 = vunpack.c.l.b16 %v3617
        %v3861 = vunpack.c.h.b16 %v3617
        %v3862 = vunpack.c.l.b16 %v3618
        %v3863 = vunpack.c.h.b16 %v3618
        %v3864 = vunpack.c.l.b16 %v3619
        %v3865 = vunpack.c.h.b16 %v3619
        %v3866 = vunpack.c.l.b16 %v3620
        %v3867 = vunpack.c.h.b16 %v3620
        %v3868 = vunpack.c.l.b16 %v3621
        %v3869 = vunpack.c.h.b16 %v3621
        %v3870 = vunpack.c.l.b16 %v3622
        %v3871 = vunpack.c.h.b16 %v3622
        %v3872 = vunpack.c.l.b16 %v3623
        %v3873 = vunpack.c.h.b16 %v3623
        %v3874 = vunpack.c.l.b16 %v3624
        %v3875 = vunpack.c.h.b16 %v3624
        %v3876 = vunpack.c.l.b16 %v3625
        %v3877 = vunpack.c.h.b16 %v3625
        %v3878 = vunpack.c.l.b16 %v3626
        %v3879 = vunpack.c.h.b16 %v3626
        %v3880 = vunpack.c.l.b16 %v3627
        %v3881 = vunpack.c.h.b16 %v3627
        %v3882 = vunpack.c.l.b16 %v3628
        %v3883 = vunpack.c.h.b16 %v3628
        %v3884 = vunpack.c.l.b16 %v3629
        %v3885 = vunpack.c.h.b16 %v3629
        %v3886 = vunpack.c.l.b16 %v3630
        %v3887 = vunpack.c.h.b16 %v3630
        %v3888 = vunpack.c.l.b16 %v3631
        %v3889 = vunpack.c.h.b16 %v3631
        %v3890 = vunpack.c.l.b16 %v3632
        %v3891 = vunpack.c.h.b16 %v3632
        %v3892 = vunpack.c.l.b16 %v3633
        %v3893 = vunpack.c.h.b16 %v3633
        %v3894 = vunpack.c.l.b16 %v3634
        %v3895 = vunpack.c.h.b16 %v3634
        %v3896 = vunpack.c.l.b16 %v3635
        %v3897 = vunpack.c.h.b16 %v3635
        %v3898 = vunpack.c.l.b16 %v3636
        %v3899 = vunpack.c.h.b16 %v3636
        %v3900 = vunpack.c.l.b16 %v3637
        %v3901 = vunpack.c.h.b16 %v3637
        %v3902 = vunpack.c.l.b16 %v3638
        %v3903 = vunpack.c.h.b16 %v3638
        %v3904 = vunpack.c.l.b16 %v3639
        %v3905 = vunpack.c.h.b16 %v3639
        %v3906 = vunpack.c.l.b16 %v3640
        %v3907 = vunpack.c.h.b16 %v3640
        %v3908 = vunpack.c.l.b16 %v3641
        %v3909 = vunpack.c.h.b16 %v3641
        %v3910 = vunpack.c.l.b16 %v3642
        %v3911 = vunpack.c.h.b16 %v3642
        %v3912 = vunpack.c.l.b16 %v3643
        %v3913 = vunpack.c.h.b16 %v3643
        %v3914 = vunpack.c.l.b16 %v3644
        %v3915 = vunpack.c.h.b16 %v3644
        %v3916 = vunpack.c.l.b16 %v3645
        %v3917 = vunpack.c.h.b16 %v3645
        %v3918 = vunpack.c.l.b16 %v3646
        %v3919 = vunpack.c.h.b16 %v3646
        %v3920 = vunpack.c.l.b16 %v3647
        %v3921 = vunpack.c.h.b16 %v3647
        %v3922 = vunpack.c.l.b16 %v3648
        %v3923 = vunpack.c.h.b16 %v3648
        %v3924 = vunpack.c.l.b16 %v3649
        %v3925 = vunpack.c.h.b16 %v3649
        %v3926 = vunpack.c.l.b16 %v3650
        %v3927 = vunpack.c.h.b16 %v3650
        %v3928 = vunpack.c.l.b16 %v3651
        %v3929 = vunpack.c.h.b16 %v3651
        %v3930 = vunpack.c.l.b16 %v3652
        %v3931 = vunpack.c.h.b16 %v3652
        %v3932 = vunpack.c.l.b16 %v3653
        %v3933 = vunpack.c.h.b16 %v3653
        %v3934 = vunpack.c.l.b16 %v3654
        %v3935 = vunpack.c.h.b16 %v3654
        %v3936 = vunpack.c.l.b16 %v3655
        %v3937 = vunpack.c.h.b16 %v3655
        %v3938 = vunpack.c.l.b16 %v3656
        %v3939 = vunpack.c.h.b16 %v3656
        %v3940 = vunpack.c.l.b16 %v3657
        %v3941 = vunpack.c.h.b16 %v3657
        %v3942 = vunpack.c.l.b16 %v3658
        %v3943 = vunpack.c.h.b16 %v3658
        %v3944 = vunpack.c.l.b16 %v3659
        %v3945 = vunpack.c.h.b16 %v3659
        %v3946 = vunpack.c.l.b16 %v3660
        %v3947 = vunpack.c.h.b16 %v3660
        %v3948 = vunpack.c.l.b16 %v3661
        %v3949 = vunpack.c.h.b16 %v3661
        %v3950 = vunpack.c.l.b16 %v3662
        %v3951 = vunpack.c.h.b16 %v3662
        %v3952 = vunpack.c.l.b16 %v3663
        %v3953 = vunpack.c.h.b16 %v3663
        %v3954 = vunpack.c.l.b16 %v3664
        %v3955 = vunpack.c.h.b16 %v3664
        %v3956 = vunpack.c.l.b16 %v3665
        %v3957 = vunpack.c.h.b16 %v3665
        %v3958 = vunpack.c.l.b16 %v3666
        %v3959 = vunpack.c.h.b16 %v3666
        %v3960 = vunpack.c.l.b16 %v3667
        %v3961 = vunpack.c.h.b16 %v3667
        %v3962 = vunpack.c.l.b16 %v3668
        %v3963 = vunpack.c.h.b16 %v3668
        %v3964 = vunpack.c.l.b16 %v3669
        %v3965 = vunpack.c.h.b16 %v3669
        %v3966 = vunpack.c.l.b16 %v3670
        %v3967 = vunpack.c.h.b16 %v3670
        %v3968 = vunpack.c.l.b16 %v3671
        %v3969 = vunpack.c.h.b16 %v3671
        %v3970 = vunpack.c.l.b16 %v3672
        %v3971 = vunpack.c.h.b16 %v3672
        %v3972 = vunpack.c.l.b16 %v3673
        %v3973 = vunpack.c.h.b16 %v3673
        %v3974 = vunpack.c.l.b16 %v3674
        %v3975 = vunpack.c.h.b16 %v3674
        %v3976 = vunpack.c.l.b16 %v3675
        %v3977 = vunpack.c.h.b16 %v3675
        %v3978 = vunpack.c.l.b16 %v3676
        %v3979 = vunpack.c.h.b16 %v3676
        %v3980 = vunpack.c.l.b16 %v3677
        %v3981 = vunpack.c.h.b16 %v3677
        %v3982 = vunpack.c.l.b16 %v3678
        %v3983 = vunpack.c.h.b16 %v3678
        %v3984 = vunpack.c.l.b16 %v3679
        %v3985 = vunpack.c.h.b16 %v3679
        %v3986 = vunpack.c.l.b16 %v3680
        %v3987 = vunpack.c.h.b16 %v3680
        %v3988 = vunpack.c.l.b16 %v3681
        %v3989 = vunpack.c.h.b16 %v3681
        %v3990 = vunpack.c.l.b16 %v3682
        %v3991 = vunpack.c.h.b16 %v3682
        %v3992 = vunpack.c.l.b16 %v3683
        %v3993 = vunpack.c.h.b16 %v3683
        %v3994 = vunpack.c.l.b16 %v3684
        %v3995 = vunpack.c.h.b16 %v3684
        %v3996 = vunpack.c.l.b16 %v3685
        %v3997 = vunpack.c.h.b16 %v3685
        %v3998 = vunpack.c.l.b16 %v3686
        %v3999 = vunpack.c.h.b16 %v3686
        %v4000 = vunpack.c.l.b16 %v3687
        %v4001 = vunpack.c.h.b16 %v3687
        %v4002 = vunpack.c.l.b16 %v3688
        %v4003 = vunpack.c.h.b16 %v3688
        %v4004 = vunpack.c.l.b16 %v3689
        %v4005 = vunpack.c.h.b16 %v3689
        %v4006 = vunpack.c.l.b16 %v3690
        %v4007 = vunpack.c.h.b16 %v3690
        %v4008 = vunpack.c.l.b16 %v3691
        %v4009 = vunpack.c.h.b16 %v3691
        %v4010 = vunpack.c.l.b16 %v3692
        %v4011 = vunpack.c.h.b16 %v3692
        %v4012 = vunpack.c.l.b16 %v3693
        %v4013 = vunpack.c.h.b16 %v3693
        %v4014 = vunpack.c.l.b16 %v3694
        %v4015 = vunpack.c.h.b16 %v3694
        %v4016 = vunpack.c.l.b16 %v3695
        %v4017 = vunpack.c.h.b16 %v3695
        %v4018 = vunpack.c.l.b16 %v3696
        %v4019 = vunpack.c.h.b16 %v3696
        %v4020 = vunpack.c.l.b16 %v3697
        %v4021 = vunpack.c.h.b16 %v3697
        %v4022 = vunpack.c.l.b16 %v3698
        %v4023 = vunpack.c.h.b16 %v3698
        %v4024 = vunpack.c.l.b16 %v3699
        %v4025 = vunpack.c.h.b16 %v3699
        %v4026 = vunpack.c.l.b16 %v3700
        %v4027 = vunpack.c.h.b16 %v3700
        %v4028 = vunpack.c.l.b16 %v3701
        %v4029 = vunpack.c.h.b16 %v3701
        %v4030 = vunpack.c.l.b16 %v3702
        %v4031 = vunpack.c.h.b16 %v3702
        %v4032 = vunpack.c.l.b16 %v3703
        %v4033 = vunpack.c.h.b16 %v3703
        %v4034 = vunpack.c.l.b16 %v3704
        %v4035 = vunpack.c.h.b16 %v3704
        %v4036 = vunpack.c.l.b16 %v3705
        %v4037 = vunpack.c.h.b16 %v3705
        %v4038 = vunpack.c.l.b16 %v3706
        %v4039 = vunpack.c.h.b16 %v3706
        %v4040 = vunpack.c.l.b16 %v3707
        %v4041 = vunpack.c.h.b16 %v3707
        %v4042 = vunpack.c.l.b16 %v3708
        %v4043 = vunpack.c.h.b16 %v3708
        %v4044 = vunpack.c.l.b16 %v3709
        %v4045 = vunpack.c.h.b16 %v3709
        %v4046 = vpack.c.b16 %v3838, %v3830
        %v4047 = vpack.c.b16 %v3839, %v3831
        %v4048 = vpack.c.b16 %v3840, %v3832
        %v4049 = vpack.c.b16 %v3841, %v3833
        %v4050 = vpack.c.b16 %v3842, %v3834
        %v4051 = vpack.c.b16 %v3843, %v3835
        %v4052 = vpack.c.b16 %v3844, %v3836
        %v4053 = vpack.c.b16 %v3845, %v3837
        %v4054 = vpack.c.b16 %v3854, %v3846
        %v4055 = vpack.c.b16 %v3855, %v3847
        %v4056 = vpack.c.b16 %v3856, %v3848
        %v4057 = vpack.c.b16 %v3857, %v3849
        %v4058 = vpack.c.b16 %v3858, %v3850
        %v4059 = vpack.c.b16 %v3859, %v3851
        %v4060 = vpack.c.b16 %v3860, %v3852
        %v4061 = vpack.c.b16 %v3861, %v3853
        %v4062 = vpack.c.b16 %v3870, %v3862
        %v4063 = vpack.c.b16 %v3871, %v3863
        %v4064 = vpack.c.b16 %v3872, %v3864
        %v4065 = vpack.c.b16 %v3873, %v3865
        %v4066 = vpack.c.b16 %v3874, %v3866
        %v4067 = vpack.c.b16 %v3875, %v3867
        %v4068 = vpack.c.b16 %v3876, %v3868
        %v4069 = vpack.c.b16 %v3877, %v3869
        %v4070 = vpack.c.b16 %v3886, %v3878
        %v4071 = vpack.c.b16 %v3887, %v3879
        %v4072 = vpack.c.b16 %v3888, %v3880
        %v4073 = vpack.c.b16 %v3889, %v3881
        %v4074 = vpack.c.b16 %v3890, %v3882
        %v4075 = vpack.c.b16 %v3891, %v3883
        %v4076 = vpack.c.b16 %v3892, %v3884
        %v4077 = vpack.c.b16 %v3893, %v3885
        %v4078 = vpack.c.b16 %v3902, %v3894
        %v4079 = vpack.c.b16 %v3903, %v3895
        %v4080 = vpack.c.b16 %v3904, %v3896
        %v4081 = vpack.c.b16 %v3905, %v3897
        %v4082 = vpack.c.b16 %v3906, %v3898
        %v4083 = vpack.c.b16 %v3907, %v3899
        %v4084 = vpack.c.b16 %v3908, %v3900
        %v4085 = vpack.c.b16 %v3909, %v3901
        %v4086 = vpack.c.b16 %v3918, %v3910
        %v4087 = vpack.c.b16 %v3919, %v3911
        %v4088 = vpack.c.b16 %v3920, %v3912
        %v4089 = vpack.c.b16 %v3921, %v3913
        %v4090 = vpack.c.b16 %v3922, %v3914
        %v4091 = vpack.c.b16 %v3923, %v3915
        %v4092 = vpack.c.b16 %v3924, %v3916
        %v4093 = vpack.c.b16 %v3925, %v3917
        %v4094 = vpack.c.b16 %v3934, %v3926
        %v4095 = vpack.c.b16 %v3935, %v3927
        %v4096 = vpack.c.b16 %v3936, %v3928
        %v4097 = vpack.c.b16 %v3937, %v3929
        %v4098 = vpack.c.b16 %v3938, %v3930
        %v4099 = vpack.c.b16 %v3939, %v3931
        %v4100 = vpack.c.b16 %v3940, %v3932
        %v4101 = vpack.c.b16 %v3941, %v3933
        %v4102 = vpack.c.b16 %v3950, %v3942
        %v4103 = vpack.c.b16 %v3951, %v3943
        %v4104 = vpack.c.b16 %v3952, %v3944
        %v4105 = vpack.c.b16 %v3953, %v3945
        %v4106 = vpack.c.b16 %v3954, %v3946
        %v4107 = vpack.c.b16 %v3955, %v3947
        %v4108 = vpack.c.b16 %v3956, %v3948
        %v4109 = vpack.c.b16 %v3957, %v3949
        %v4110 = vpack.c.b16 %v3966, %v3958
        %v4111 = vpack.c.b16 %v3967, %v3959
        %v4112 = vpack.c.b16 %v3968, %v3960
        %v4113 = vpack.c.b16 %v3969, %v3961
        %v4114 = vpack.c.b16 %v3970, %v3962
        %v4115 = vpack.c.b16 %v3971, %v3963
        %v4116 = vpack.c.b16 %v3972, %v3964
        %v4117 = vpack.c.b16 %v3973, %v3965
        %v4118 = vpack.c.b16 %v3982, %v3974
        %v4119 = vpack.c.b16 %v3983, %v3975
        %v4120 = vpack.c.b16 %v3984, %v3976
        %v4121 = vpack.c.b16 %v3985, %v3977
        %v4122 = vpack.c.b16 %v3986, %v3978
        %v4123 = vpack.c.b16 %v3987, %v3979
        %v4124 = vpack.c.b16 %v3988, %v3980
        %v4125 = vpack.c.b16 %v3989, %v3981
        %v4126 = vpack.c.b16 %v3998, %v3990
        %v4127 = vpack.c.b16 %v3999, %v3991
        %v4128 = vpack.c.b16 %v4000, %v3992
        %v4129 = vpack.c.b16 %v4001, %v3993
        %v4130 = vpack.c.b16 %v4002, %v3994
        %v4131 = vpack.c.b16 %v4003, %v3995
        %v4132 = vpack.c.b16 %v4004, %v3996
        %v4133 = vpack.c.b16 %v4005, %v3997
        %v4134 = vpack.c.b16 %v4014, %v4006
        %v4135 = vpack.c.b16 %v4015, %v4007
        %v4136 = vpack.c.b16 %v4016, %v4008
        %v4137 = vpack.c.b16 %v4017, %v4009
        %v4138 = vpack.c.b16 %v4018, %v4010
        %v4139 = vpack.c.b16 %v4019, %v4011
        %v4140 = vpack.c.b16 %v4020, %v4012
        %v4141 = vpack.c.b16 %v4021, %v4013
        %v4142 = vpack.c.b16 %v4030, %v4022
        %v4143 = vpack.c.b16 %v4031, %v4023
        %v4144 = vpack.c.b16 %v4032, %v4024
        %v4145 = vpack.c.b16 %v4033, %v4025
        %v4146 = vpack.c.b16 %v4034, %v4026
        %v4147 = vpack.c.b16 %v4035, %v4027
        %v4148 = vpack.c.b16 %v4036, %v4028
        %v4149 = vpack.c.b16 %v4037, %v4029
        %v4150 = vpack.c.b16 %v4038, %v4038
        %v4151 = vpack.c.b16 %v4039, %v4039
        %v4152 = vpack.c.b16 %v4040, %v4040
        %v4153 = vpack.c.b16 %v4041, %v4041
        %v4154 = vpack.c.b16 %v4042, %v4042
        %v4155 = vpack.c.b16 %v4043, %v4043
        %v4156 = vpack.c.b16 %v4044, %v4044
        %v4157 = vpack.c.b16 %v4045, %v4045
        %vm4262 = vcmask 719872
        %v4264 = vsel %vm4262, %v3720, 0
        %vm4266 = vcmask 1043456
        %v4268 = vsel %vm4266, %v4150, 0
        %v4271 = vsel %vm4266, %v4151, 0
        %v4274 = vsel %vm4266, %v4152, 0
        %v4277 = vsel %vm4266, %v4153, 0
        %v4280 = vsel %vm4266, %v4154, 0
        %v4283 = vsel %vm4266, %v4155, 0
        %v4286 = vsel %vm4266, %v4156, 0
        %v4289 = vsel %vm4266, %v4157, 0
        %4291 = vmatpush.bf16.msra.mxu0 %v4102
        %4292 = vmatpush.bf16.msra.mxu0 %v4094
        %4293 = vmatpush.bf16.msra.mxu0 %v4086
        %4294 = vmatpush.bf16.msra.mxu0 %v4078
        %4295 = vmatpush.bf16.msra.mxu0 %v4070
        %4296 = vmatpush.bf16.msra.mxu0 %v4062
        %4297 = vmatpush.bf16.msra.mxu0 %v4054
        %4298 = vmatpush.bf16.msra.mxu0 %v4046
        %4299 = vmatmul.bf16.gmra.mxu0 %v3719
        %v4300 = vpop.f32.mrf.mxu0
        %v4301 = vadd.f32 %v3714, %v4300
        %v4302 = vpop.f32.mrf.mxu0
        %4303 = vdwg.mxu0
        %4304 = vmatpush.bf16.msra.mxu0 0
        %4305 = vmatpush.bf16.msra.mxu0 0
        %4306 = vmatpush.bf16.msra.mxu0 %v4268
        %4307 = vmatpush.bf16.msra.mxu0 %v4142
        %4308 = vmatpush.bf16.msra.mxu0 %v4134
        %4309 = vmatpush.bf16.msra.mxu0 %v4126
        %4310 = vmatpush.bf16.msra.mxu0 %v4118
        %4311 = vmatpush.bf16.msra.mxu0 %v4110
        %4312 = vmatmul.bf16.gmra.mxu0 %v4264
        %v4313 = vpop.f32.mrf.mxu0
        %v4314 = vadd.f32 %v4301, %v4313
        %v4315 = vpop.f32.mrf.mxu0
        %4316 = vdwg.mxu0
        %4317 = vmatpush.bf16.msra.mxu0 %v4103
        %4318 = vmatpush.bf16.msra.mxu0 %v4095
        %4319 = vmatpush.bf16.msra.mxu0 %v4087
        %4320 = vmatpush.bf16.msra.mxu0 %v4079
        %4321 = vmatpush.bf16.msra.mxu0 %v4071
        %4322 = vmatpush.bf16.msra.mxu0 %v4063
        %4323 = vmatpush.bf16.msra.mxu0 %v4055
        %4324 = vmatpush.bf16.msra.mxu0 %v4047
        %4325 = vmatmul.bf16.gmra.mxu0 %v3719
        %v4326 = vpop.f32.mrf.mxu0
        %v4327 = vadd.f32 %v3714, %v4326
        %v4328 = vpop.f32.mrf.mxu0
        %4329 = vdwg.mxu0
        %4330 = vmatpush.bf16.msra.mxu0 0
        %4331 = vmatpush.bf16.msra.mxu0 0
        %4332 = vmatpush.bf16.msra.mxu0 %v4271
        %4333 = vmatpush.bf16.msra.mxu0 %v4143
        %4334 = vmatpush.bf16.msra.mxu0 %v4135
        %4335 = vmatpush.bf16.msra.mxu0 %v4127
        %4336 = vmatpush.bf16.msra.mxu0 %v4119
        %4337 = vmatpush.bf16.msra.mxu0 %v4111
        %4338 = vmatmul.bf16.gmra.mxu0 %v4264
        %v4339 = vpop.f32.mrf.mxu0
        %v4340 = vadd.f32 %v4327, %v4339
        %v4341 = vpop.f32.mrf.mxu0
        %4342 = vdwg.mxu0
        %4343 = vmatpush.bf16.msra.mxu0 %v4104
        %4344 = vmatpush.bf16.msra.mxu0 %v4096
        %4345 = vmatpush.bf16.msra.mxu0 %v4088
        %4346 = vmatpush.bf16.msra.mxu0 %v4080
        %4347 = vmatpush.bf16.msra.mxu0 %v4072
        %4348 = vmatpush.bf16.msra.mxu0 %v4064
        %4349 = vmatpush.bf16.msra.mxu0 %v4056
        %4350 = vmatpush.bf16.msra.mxu0 %v4048
        %4351 = vmatmul.bf16.gmra.mxu0 %v3719
        %v4352 = vpop.f32.mrf.mxu0
        %v4353 = vadd.f32 %v3714, %v4352
        %v4354 = vpop.f32.mrf.mxu0
        %4355 = vdwg.mxu0
        %4356 = vmatpush.bf16.msra.mxu0 0
        %4357 = vmatpush.bf16.msra.mxu0 0
        %4358 = vmatpush.bf16.msra.mxu0 %v4274
        %4359 = vmatpush.bf16.msra.mxu0 %v4144
        %4360 = vmatpush.bf16.msra.mxu0 %v4136
        %4361 = vmatpush.bf16.msra.mxu0 %v4128
        %4362 = vmatpush.bf16.msra.mxu0 %v4120
        %4363 = vmatpush.bf16.msra.mxu0 %v4112
        %4364 = vmatmul.bf16.gmra.mxu0 %v4264
        %v4365 = vpop.f32.mrf.mxu0
        %v4366 = vadd.f32 %v4353, %v4365
        %v4367 = vpop.f32.mrf.mxu0
        %4368 = vdwg.mxu0
        %4369 = vmatpush.bf16.msra.mxu0 %v4105
        %4370 = vmatpush.bf16.msra.mxu0 %v4097
        %4371 = vmatpush.bf16.msra.mxu0 %v4089
        %4372 = vmatpush.bf16.msra.mxu0 %v4081
        %4373 = vmatpush.bf16.msra.mxu0 %v4073
        %4374 = vmatpush.bf16.msra.mxu0 %v4065
        %4375 = vmatpush.bf16.msra.mxu0 %v4057
        %4376 = vmatpush.bf16.msra.mxu0 %v4049
        %4377 = vmatmul.bf16.gmra.mxu0 %v3719
        %v4378 = vpop.f32.mrf.mxu0
        %v4379 = vadd.f32 %v3714, %v4378
        %v4380 = vpop.f32.mrf.mxu0
        %4381 = vdwg.mxu0
        %4382 = vmatpush.bf16.msra.mxu0 0
        %4383 = vmatpush.bf16.msra.mxu0 0
        %4384 = vmatpush.bf16.msra.mxu0 %v4277
        %4385 = vmatpush.bf16.msra.mxu0 %v4145
        %4386 = vmatpush.bf16.msra.mxu0 %v4137
        %4387 = vmatpush.bf16.msra.mxu0 %v4129
        %4388 = vmatpush.bf16.msra.mxu0 %v4121
        %4389 = vmatpush.bf16.msra.mxu0 %v4113
        %4390 = vmatmul.bf16.gmra.mxu0 %v4264
        %v4391 = vpop.f32.mrf.mxu0
        %v4392 = vadd.f32 %v4379, %v4391
        %v4393 = vpop.f32.mrf.mxu0
        %4394 = vdwg.mxu0
        %4395 = vmatpush.bf16.msra.mxu0 %v4106
        %4396 = vmatpush.bf16.msra.mxu0 %v4098
        %4397 = vmatpush.bf16.msra.mxu0 %v4090
        %4398 = vmatpush.bf16.msra.mxu0 %v4082
        %4399 = vmatpush.bf16.msra.mxu0 %v4074
        %4400 = vmatpush.bf16.msra.mxu0 %v4066
        %4401 = vmatpush.bf16.msra.mxu0 %v4058
        %4402 = vmatpush.bf16.msra.mxu0 %v4050
        %4403 = vmatmul.bf16.gmra.mxu0 %v3719
        %v4404 = vpop.f32.mrf.mxu0
        %v4405 = vadd.f32 %v3714, %v4404
        %v4406 = vpop.f32.mrf.mxu0
        %4407 = vdwg.mxu0
        %4408 = vmatpush.bf16.msra.mxu0 0
        %4409 = vmatpush.bf16.msra.mxu0 0
        %4410 = vmatpush.bf16.msra.mxu0 %v4280
        %4411 = vmatpush.bf16.msra.mxu0 %v4146
        %4412 = vmatpush.bf16.msra.mxu0 %v4138
        %4413 = vmatpush.bf16.msra.mxu0 %v4130
        %4414 = vmatpush.bf16.msra.mxu0 %v4122
        %4415 = vmatpush.bf16.msra.mxu0 %v4114
        %4416 = vmatmul.bf16.gmra.mxu0 %v4264
        %v4417 = vpop.f32.mrf.mxu0
        %v4418 = vadd.f32 %v4405, %v4417
        %v4419 = vpop.f32.mrf.mxu0
        %4420 = vdwg.mxu0
        %4421 = vmatpush.bf16.msra.mxu0 %v4107
        %4422 = vmatpush.bf16.msra.mxu0 %v4099
        %4423 = vmatpush.bf16.msra.mxu0 %v4091
        %4424 = vmatpush.bf16.msra.mxu0 %v4083
        %4425 = vmatpush.bf16.msra.mxu0 %v4075
        %4426 = vmatpush.bf16.msra.mxu0 %v4067
        %4427 = vmatpush.bf16.msra.mxu0 %v4059
        %4428 = vmatpush.bf16.msra.mxu0 %v4051
        %4429 = vmatmul.bf16.gmra.mxu0 %v3719
        %v4430 = vpop.f32.mrf.mxu0
        %v4431 = vadd.f32 %v3714, %v4430
        %v4432 = vpop.f32.mrf.mxu0
        %4433 = vdwg.mxu0
        %4434 = vmatpush.bf16.msra.mxu0 0
        %4435 = vmatpush.bf16.msra.mxu0 0
        %4436 = vmatpush.bf16.msra.mxu0 %v4283
        %4437 = vmatpush.bf16.msra.mxu0 %v4147
        %4438 = vmatpush.bf16.msra.mxu0 %v4139
        %4439 = vmatpush.bf16.msra.mxu0 %v4131
        %4440 = vmatpush.bf16.msra.mxu0 %v4123
        %4441 = vmatpush.bf16.msra.mxu0 %v4115
        %4442 = vmatmul.bf16.gmra.mxu0 %v4264
        %v4443 = vpop.f32.mrf.mxu0
        %v4444 = vadd.f32 %v4431, %v4443
        %v4445 = vpop.f32.mrf.mxu0
        %4446 = vdwg.mxu0
        %4447 = vmatpush.bf16.msra.mxu0 %v4108
        %4448 = vmatpush.bf16.msra.mxu0 %v4100
        %4449 = vmatpush.bf16.msra.mxu0 %v4092
        %4450 = vmatpush.bf16.msra.mxu0 %v4084
        %4451 = vmatpush.bf16.msra.mxu0 %v4076
        %4452 = vmatpush.bf16.msra.mxu0 %v4068
        %4453 = vmatpush.bf16.msra.mxu0 %v4060
        %4454 = vmatpush.bf16.msra.mxu0 %v4052
        %4455 = vmatmul.bf16.gmra.mxu0 %v3719
        %v4456 = vpop.f32.mrf.mxu0
        %v4457 = vadd.f32 %v3714, %v4456
        %v4458 = vpop.f32.mrf.mxu0
        %4459 = vdwg.mxu0
        %4460 = vmatpush.bf16.msra.mxu0 0
        %4461 = vmatpush.bf16.msra.mxu0 0
        %4462 = vmatpush.bf16.msra.mxu0 %v4286
        %4463 = vmatpush.bf16.msra.mxu0 %v4148
        %4464 = vmatpush.bf16.msra.mxu0 %v4140
        %4465 = vmatpush.bf16.msra.mxu0 %v4132
        %4466 = vmatpush.bf16.msra.mxu0 %v4124
        %4467 = vmatpush.bf16.msra.mxu0 %v4116
        %4468 = vmatmul.bf16.gmra.mxu0 %v4264
        %v4469 = vpop.f32.mrf.mxu0
        %v4470 = vadd.f32 %v4457, %v4469
        %v4471 = vpop.f32.mrf.mxu0
        %4472 = vdwg.mxu0
        %4473 = vmatpush.bf16.msra.mxu0 %v4109
        %4474 = vmatpush.bf16.msra.mxu0 %v4101
        %4475 = vmatpush.bf16.msra.mxu0 %v4093
        %4476 = vmatpush.bf16.msra.mxu0 %v4085
        %4477 = vmatpush.bf16.msra.mxu0 %v4077
        %4478 = vmatpush.bf16.msra.mxu0 %v4069
        %4479 = vmatpush.bf16.msra.mxu0 %v4061
        %4480 = vmatpush.bf16.msra.mxu0 %v4053
        %4481 = vmatmul.bf16.gmra.mxu0 %v3719
        %v4482 = vpop.f32.mrf.mxu0
        %v4483 = vadd.f32 %v3714, %v4482
        %v4484 = vpop.f32.mrf.mxu0
        %4485 = vdwg.mxu0
        %4486 = vmatpush.bf16.msra.mxu0 0
        %4487 = vmatpush.bf16.msra.mxu0 0
        %4488 = vmatpush.bf16.msra.mxu0 %v4289
        %4489 = vmatpush.bf16.msra.mxu0 %v4149
        %4490 = vmatpush.bf16.msra.mxu0 %v4141
        %4491 = vmatpush.bf16.msra.mxu0 %v4133
        %4492 = vmatpush.bf16.msra.mxu0 %v4125
        %4493 = vmatpush.bf16.msra.mxu0 %v4117
        %4494 = vmatmul.bf16.gmra.mxu0 %v4264
        %v4495 = vpop.f32.mrf.mxu0
        %v4496 = vadd.f32 %v4483, %v4495
        %v4497 = vpop.f32.mrf.mxu0
        %4498 = vdwg.mxu0
        %v4499 = vld [vmem:[%s314 + $0x4] sm:$0xff]
        %v4500 = vld [vmem:[%s314 + $0xc] sm:$0xff]
        %v4501 = vld [vmem:[%s314 + $0x14] sm:$0xff]
        %v4502 = vld [vmem:[%s314 + $0x1c] sm:$0xff]
        %v4503 = vld [vmem:[%s314 + $0x24] sm:$0xf]
        %v4504 = vld [vmem:[%s6] sm:$0xf]
        %v4510 = vunpack.c.l.b16 %v4499
        %v4511 = vunpack.c.h.b16 %v4499
        %v4512 = vunpack.c.l.b16 %v4500
        %v4513 = vunpack.c.h.b16 %v4500
        %v4514 = vunpack.c.l.b16 %v4501
        %v4515 = vunpack.c.h.b16 %v4501
        %v4516 = vunpack.c.l.b16 %v4502
        %v4517 = vunpack.c.h.b16 %v4502
        %v4518 = vunpack.c.l.b16 %v4503
        %v4519 = vpack.c.b16 %v4510, %v4510
        %v4520 = vpack.c.b16 %v4511, %v4511
        %v4521 = vpack.c.b16 %v4512, %v4512
        %v4522 = vpack.c.b16 %v4513, %v4513
        %v4523 = vpack.c.b16 %v4514, %v4514
        %v4524 = vpack.c.b16 %v4515, %v4515
        %v4525 = vpack.c.b16 %v4516, %v4516
        %v4526 = vpack.c.b16 %v4517, %v4517
        %v4527 = vpack.c.b16 %v4518, %v4518
        %4528 = vrot.lane.b32.xlu0 %v4519, 56
        %v4529 = vpop.permute.xlu0 %4528
        %4530 = vrot.lane.b32.xlu0 %v4520, 56
        %v4531 = vpop.permute.xlu0 %4530
        %4532 = vrot.lane.b32.xlu0 %v4521, 56
        %v4533 = vpop.permute.xlu0 %4532
        %4534 = vrot.lane.b32.xlu0 %v4522, 56
        %v4535 = vpop.permute.xlu0 %4534
        %4536 = vrot.lane.b32.xlu0 %v4523, 56
        %v4537 = vpop.permute.xlu0 %4536
        %4538 = vrot.lane.b32.xlu0 %v4524, 56
        %v4539 = vpop.permute.xlu0 %4538
        %4540 = vrot.lane.b32.xlu0 %v4525, 56
        %v4541 = vpop.permute.xlu0 %4540
        %4542 = vrot.lane.b32.xlu0 %v4526, 56
        %v4543 = vpop.permute.xlu0 %4542
        %4544 = vrot.lane.b32.xlu0 %v4527, 56
        %v4545 = vpop.permute.xlu0 %4544
        %vm4546 = vcmask 457728
        %v4547 = vsel %vm4546, %v4529, %v4531
        %v4548 = vsel %vm4546, %v4531, %v4533
        %v4549 = vsel %vm4546, %v4533, %v4535
        %v4550 = vsel %vm4546, %v4535, %v4537
        %v4551 = vsel %vm4546, %v4537, %v4539
        %v4552 = vsel %vm4546, %v4539, %v4541
        %v4553 = vsel %vm4546, %v4541, %v4543
        %v4554 = vsel %vm4546, %v4543, %v4545
        %vm4555 = vcmask 64512
        %v4557 = vsel %vm4555, %v4504, 0
        %v4560 = vsel %vm4266, %v4547, 0
        %v4563 = vsel %vm4266, %v4548, 0
        %v4566 = vsel %vm4266, %v4549, 0
        %v4569 = vsel %vm4266, %v4550, 0
        %v4572 = vsel %vm4266, %v4551, 0
        %v4575 = vsel %vm4266, %v4552, 0
        %v4578 = vsel %vm4266, %v4553, 0
        %v4581 = vsel %vm4266, %v4554, 0
        %4583 = vmatpush.bf16.msra.mxu0 0
        %4584 = vmatpush.bf16.msra.mxu0 0
        %4585 = vmatpush.bf16.msra.mxu0 0
        %4586 = vmatpush.bf16.msra.mxu0 0
        %4587 = vmatpush.bf16.msra.mxu0 0
        %4588 = vmatpush.bf16.msra.mxu0 0
        %4589 = vmatpush.bf16.msra.mxu0 0
        %4590 = vmatpush.bf16.msra.mxu0 %v4560
        %4591 = vmatmul.bf16.gmra.mxu0 %v4557
        %v4592 = vpop.f32.mrf.mxu0
        %v4593 = vadd.f32 0.0, %v4592
        %v4594 = vpop.f32.mrf.mxu0
        %4595 = vdwg.mxu0
        %4596 = vmatpush.bf16.msra.mxu0 0
        %4597 = vmatpush.bf16.msra.mxu0 0
        %4598 = vmatpush.bf16.msra.mxu0 0
        %4599 = vmatpush.bf16.msra.mxu0 0
        %4600 = vmatpush.bf16.msra.mxu0 0
        %4601 = vmatpush.bf16.msra.mxu0 0
        %4602 = vmatpush.bf16.msra.mxu0 0
        %4603 = vmatpush.bf16.msra.mxu0 %v4563
        %4604 = vmatmul.bf16.gmra.mxu0 %v4557
        %v4605 = vpop.f32.mrf.mxu0
        %v4606 = vadd.f32 0.0, %v4605
        %v4607 = vpop.f32.mrf.mxu0
        %4608 = vdwg.mxu0
        %4609 = vmatpush.bf16.msra.mxu0 0
        %4610 = vmatpush.bf16.msra.mxu0 0
        %4611 = vmatpush.bf16.msra.mxu0 0
        %4612 = vmatpush.bf16.msra.mxu0 0
        %4613 = vmatpush.bf16.msra.mxu0 0
        %4614 = vmatpush.bf16.msra.mxu0 0
        %4615 = vmatpush.bf16.msra.mxu0 0
        %4616 = vmatpush.bf16.msra.mxu0 %v4566
        %4617 = vmatmul.bf16.gmra.mxu0 %v4557
        %v4618 = vpop.f32.mrf.mxu0
        %v4619 = vadd.f32 0.0, %v4618
        %v4620 = vpop.f32.mrf.mxu0
        %4621 = vdwg.mxu0
        %4622 = vmatpush.bf16.msra.mxu0 0
        %4623 = vmatpush.bf16.msra.mxu0 0
        %4624 = vmatpush.bf16.msra.mxu0 0
        %4625 = vmatpush.bf16.msra.mxu0 0
        %4626 = vmatpush.bf16.msra.mxu0 0
        %4627 = vmatpush.bf16.msra.mxu0 0
        %4628 = vmatpush.bf16.msra.mxu0 0
        %4629 = vmatpush.bf16.msra.mxu0 %v4569
        %4630 = vmatmul.bf16.gmra.mxu0 %v4557
        %v4631 = vpop.f32.mrf.mxu0
        %v4632 = vadd.f32 0.0, %v4631
        %v4633 = vpop.f32.mrf.mxu0
        %4634 = vdwg.mxu0
        %4635 = vmatpush.bf16.msra.mxu0 0
        %4636 = vmatpush.bf16.msra.mxu0 0
        %4637 = vmatpush.bf16.msra.mxu0 0
        %4638 = vmatpush.bf16.msra.mxu0 0
        %4639 = vmatpush.bf16.msra.mxu0 0
        %4640 = vmatpush.bf16.msra.mxu0 0
        %4641 = vmatpush.bf16.msra.mxu0 0
        %4642 = vmatpush.bf16.msra.mxu0 %v4572
        %4643 = vmatmul.bf16.gmra.mxu0 %v4557
        %v4644 = vpop.f32.mrf.mxu0
        %v4645 = vadd.f32 0.0, %v4644
        %v4646 = vpop.f32.mrf.mxu0
        %4647 = vdwg.mxu0
        %4648 = vmatpush.bf16.msra.mxu0 0
        %4649 = vmatpush.bf16.msra.mxu0 0
        %4650 = vmatpush.bf16.msra.mxu0 0
        %4651 = vmatpush.bf16.msra.mxu0 0
        %4652 = vmatpush.bf16.msra.mxu0 0
        %4653 = vmatpush.bf16.msra.mxu0 0
        %4654 = vmatpush.bf16.msra.mxu0 0
        %4655 = vmatpush.bf16.msra.mxu0 %v4575
        %4656 = vmatmul.bf16.gmra.mxu0 %v4557
        %v4657 = vpop.f32.mrf.mxu0
        %v4658 = vadd.f32 0.0, %v4657
        %v4659 = vpop.f32.mrf.mxu0
        %4660 = vdwg.mxu0
        %4661 = vmatpush.bf16.msra.mxu0 0
        %4662 = vmatpush.bf16.msra.mxu0 0
        %4663 = vmatpush.bf16.msra.mxu0 0
        %4664 = vmatpush.bf16.msra.mxu0 0
        %4665 = vmatpush.bf16.msra.mxu0 0
        %4666 = vmatpush.bf16.msra.mxu0 0
        %4667 = vmatpush.bf16.msra.mxu0 0
        %4668 = vmatpush.bf16.msra.mxu0 %v4578
        %4669 = vmatmul.bf16.gmra.mxu0 %v4557
        %v4670 = vpop.f32.mrf.mxu0
        %v4671 = vadd.f32 0.0, %v4670
        %v4672 = vpop.f32.mrf.mxu0
        %4673 = vdwg.mxu0
        %4674 = vmatpush.bf16.msra.mxu0 0
        %4675 = vmatpush.bf16.msra.mxu0 0
        %4676 = vmatpush.bf16.msra.mxu0 0
        %4677 = vmatpush.bf16.msra.mxu0 0
        %4678 = vmatpush.bf16.msra.mxu0 0
        %4679 = vmatpush.bf16.msra.mxu0 0
        %4680 = vmatpush.bf16.msra.mxu0 0
        %4681 = vmatpush.bf16.msra.mxu0 %v4581
        %4682 = vmatmul.bf16.gmra.mxu0 %v4557
        %v4683 = vpop.f32.mrf.mxu0
        %v4684 = vadd.f32 0.0, %v4683
        %v4685 = vpop.f32.mrf.mxu0
        %4686 = vdwg.mxu0
        %v4687 = vadd.f32 %v4314, %v4593
        %v4688 = vadd.f32 %v4340, %v4606
        %v4689 = vadd.f32 %v4366, %v4619
        %v4690 = vadd.f32 %v4392, %v4632
        %v4691 = vadd.f32 %v4418, %v4645
        %v4692 = vadd.f32 %v4444, %v4658
        %v4693 = vadd.f32 %v4470, %v4671
        %v4694 = vadd.f32 %v4496, %v4684
        %v4695 = vld [vmem:[%s7] sm:$0xff]
        %4697 = vset.pattern.permute.xlu0 0
        %4698 = vperm.xlu0 %4697, %v4695
        %v4699 = vpop.permute.xlu0 %4698
        %v4701 = vadd.f32 %v4687, %v4699
        %v4702 = vadd.f32 %v4688, %v4699
        %v4703 = vadd.f32 %v4689, %v4699
        %v4704 = vadd.f32 %v4690, %v4699
        %v4705 = vadd.f32 %v4691, %v4699
        %v4706 = vadd.f32 %v4692, %v4699
        %v4707 = vadd.f32 %v4693, %v4699
        %v4708 = vadd.f32 %v4694, %v4699
        %vm4709 = vcmp.ge.f32.partialorder %v4701, 0.0
        %vm4710 = vcmp.ge.f32.partialorder %v4702, 0.0
        %vm4711 = vcmp.ge.f32.partialorder %v4703, 0.0
        %vm4712 = vcmp.ge.f32.partialorder %v4704, 0.0
        %vm4713 = vcmp.ge.f32.partialorder %v4705, 0.0
        %vm4714 = vcmp.ge.f32.partialorder %v4706, 0.0
        %vm4715 = vcmp.ge.f32.partialorder %v4707, 0.0
        %vm4716 = vcmp.ge.f32.partialorder %v4708, 0.0
        %v4717 = vmul.f32 %v4701, 0.2
        %v4718 = vmul.f32 %v4702, 0.2
        %v4719 = vmul.f32 %v4703, 0.2
        %v4720 = vmul.f32 %v4704, 0.2
        %v4721 = vmul.f32 %v4705, 0.2
        %v4722 = vmul.f32 %v4706, 0.2
        %v4723 = vmul.f32 %v4707, 0.2
        %v4724 = vmul.f32 %v4708, 0.2
        %v4725 = vsel %vm4709, %v4701, %v4717
        %v4726 = vsel %vm4710, %v4702, %v4718
        %v4727 = vsel %vm4711, %v4703, %v4719
        %v4728 = vsel %vm4712, %v4704, %v4720
        %v4729 = vsel %vm4713, %v4705, %v4721
        %v4730 = vsel %vm4714, %v4706, %v4722
        %v4731 = vsel %vm4715, %v4707, %v4723
        %v4732 = vsel %vm4716, %v4708, %v4724
        %v4733 = vpack.c.bf16 %v4726, %v4725
        %v4734 = vpack.c.bf16 %v4728, %v4727
        %v4735 = vpack.c.bf16 %v4730, %v4729
        %v4736 = vpack.c.bf16 %v4732, %v4731
        %4737 = vst [vmem:[%s352] sm:$0xff] %v4733
        %4738 = vst [vmem:[%s352 + $0x8] sm:$0xff] %v4734
        %4739 = vst [vmem:[%s352 + $0x10] sm:$0xff] %v4735
        %4740 = vst [vmem:[%s352 + $0x18] sm:$0xff] %v4736
        %s4741 = sand.u32 %s225, 1
        %s4742 = scalar_lea.sflag [#allocation6], %s4741
        %s4743 = sand.u32 %s225, 1
        %s4744 = smul.addr %s4743, 32
        %s4745 = scalar_lea.vmem [#allocation7], %s4744
        // Predicated region
        $region61: #{tpu_custom_call.1} parent=51 // pred_check
          %p4746 = pneg %p235
        $region62: #{tpu_custom_call.1} parent=51 // pred_check_branch
          %4748 = sbr.rel (%p4746) target = $region64
        $region63: #{tpu_custom_call.1} parent=51 // pred_region
          %4750 = vsyncadd %s4742, 0
          %s4751 = smul.addr %s30, 8
          %s4752 = smul.addr %s29, 8
          %s4753 = sadd.s32 %s4751, %s4752
          %s4754 = smul.addr %s4753, 4
          %s4755 = scalar_lea.hbm %s8, %s4754
          %s4757 = sshll.u32 %s4745, 4
          %s4758 = int_to_ptr.vmem [resolvable:$true] %s4757
          %s4759 = sshll.u32 %s4755, 4
          %s4760 = int_to_ptr.hbm [resolvable:$true] %s4759
          %4762 = dma.vmem_to_hbm [thread:$0]  %s4758, 512, %s4760, %s4742
        $region64: #{tpu_custom_call.1} parent=51 // pred_fallthru
          _
      $region52: #{tpu_custom_call.1} parent=5 // pred_fallthru
        _
      %p4763 = scmp.le.s32.totalorder 2, %s20
      // Predicated region
      $region65: #{tpu_custom_call.1} parent=5 // pred_check
        %p4764 = pneg %p4763
      $region66: #{tpu_custom_call.1} parent=5 // pred_check_branch
        %4766 = sbr.rel (%p4764) target = $region68
      $region67: #{tpu_custom_call.1} parent=5 // pred_region
        %s4767 = ssub.s32 %s20, 2
        // Predicated region
        $region69: #{tpu_custom_call.1} parent=67 // pred_check
          %p4768 = pneg %p241
        $region70: #{tpu_custom_call.1} parent=67 // pred_check_branch
          %4770 = sbr.rel (%p4768) target = $region72
        $region71: #{tpu_custom_call.1} parent=67 // pred_region
          %s4771 = sand.u32 %s226, 1
          %s4772 = scalar_lea.sflag [#allocation6], %s4771
          %s4773 = sand.u32 %s226, 1
          %s4774 = smul.addr %s4773, 32
          %s4775 = scalar_lea.vmem [#allocation7], %s4774
          %4777 = dma.done %s4772, 512
        $region72: #{tpu_custom_call.1} parent=67 // pred_fallthru
          _
      $region68: #{tpu_custom_call.1} parent=5 // pred_fallthru
        _
    $region6: #{tpu_custom_call.1} parent=1 // loop_footer
      %s24 = sadd.s32 1, %s20
    $region7: #{tpu_custom_call.1} parent=1 // loop_footer_branch
      %19 = sbr.rel target = $region3
    $region8: #{tpu_custom_call.1} parent=1 // loop_exit
      _
    %4778 = vsyncpa [#allocation5], 1
    %s4779 = scalar_lea.sflag [#allocation5], 1
    %4780 = vsyncpa %s4779, 1
    %4781 = vsyncpa [#allocation6], 1
    %s4782 = scalar_lea.sflag [#allocation6], 1
    %4783 = vsyncpa %s4782, 1

</llo_original>
